<compile_context>
chip_gen: v6e
topology: v6e:2x2x1
jax: 0.10.0
libtpu: 0.0.40
codegen_flags: <defaults>
</compile_context>

<pallas_src>
import functools

import jax
import jax.numpy as jnp
from jax.experimental import pallas as pl
from jax.experimental.pallas import tpu as pltpu  # noqa: F401  (not needed: no grid/pipeline)

# ----------------------------- hyperparameters -----------------------------
B = 2                 # batch
IMAGE = 16            # image_size
PATCH = 4             # patch_size
CHANNELS = 3
NUM_PATCHES = (IMAGE // PATCH) ** 2            # 16
PATCH_DIM = CHANNELS * PATCH * PATCH           # 48
NUM_TOKENS = NUM_PATCHES + 1                   # 17 (cls + patches)
DIM = 32              # dim
DEPTH = 2
HEADS = 4
DIM_HEAD = 8
INNER = HEADS * DIM_HEAD                       # 32
MLP_DIM = 64
NUM_CLASSES = 10
LN_EPS = 1e-5


# ----------------------------- kernel helpers ------------------------------
def _layernorm(x, g, b):
    mu = jnp.mean(x, axis=-1, keepdims=True)
    var = jnp.mean(jnp.square(x - mu), axis=-1, keepdims=True)
    return (x - mu) * jax.lax.rsqrt(var + LN_EPS) * g + b


def _gelu_exact(x):
    # nn.GELU default (exact, erf-based)
    return 0.5 * x * (1.0 + jax.lax.erf(x * jnp.float32(0.7071067811865476)))


# ------------------------------ fused kernel -------------------------------
def _vit_kernel(bsz, patches_ref, pw_ref, tokb_ref,
                ln1g_ref, ln1b_ref, wqkv_ref, wo_ref, bo_ref,
                ln2g_ref, ln2b_ref, w1_ref, b1_ref, w2_ref, b2_ref,
                hg_ref, hb_ref, hw_ref, hbias_ref, o_ref):
    n = NUM_TOKENS

    # --- patch embedding: one matmul over all batch elements' patch rows ---
    emb = jnp.dot(patches_ref[...], pw_ref[...],
                  preferred_element_type=jnp.float32)          # (B*16, D)
    cls_row = tokb_ref[0:1, :]                                 # cls_token + pos[0]
    patch_bias = tokb_ref[1:, :]                               # patch_b + pos[1:]
    pieces = []
    for b in range(bsz):
        pieces.append(cls_row)
        pieces.append(emb[b * NUM_PATCHES:(b + 1) * NUM_PATCHES, :] + patch_bias)
    x = jnp.concatenate(pieces, axis=0)                        # (B*N, D) = (34, 32)

    for l in range(DEPTH):
        # ----------------- PreNorm + multi-head self-attention --------------
        xn = _layernorm(x, ln1g_ref[l], ln1b_ref[l])           # (B*N, D)
        # Single fused QKV matmul, full 96-lane wide output.
        # 1/sqrt(dim_head) is folded into the Q columns at param-prep time.
        qkv = jnp.dot(xn, wqkv_ref[l],
                      preferred_element_type=jnp.float32)      # (B*N, 3*INNER)

        o_rows = []
        for b in range(bsz):
            qkv_b = qkv[b * n:(b + 1) * n, :]                  # (N, 3*INNER)
            head_outs = []
            for h in range(HEADS):
                q = qkv_b[:, h * DIM_HEAD:(h + 1) * DIM_HEAD]                       # (N, dh)
                k = qkv_b[:, INNER + h * DIM_HEAD:INNER + (h + 1) * DIM_HEAD]       # (N, dh)
                v = qkv_b[:, 2 * INNER + h * DIM_HEAD:2 * INNER + (h + 1) * DIM_HEAD]
                s = jnp.einsum('nd,md->nm', q, k,
                               preferred_element_type=jnp.float32)                  # (N, N)
                s = s - jnp.max(s, axis=-1, keepdims=True)
                e = jnp.exp(s)
                p = e / jnp.sum(e, axis=-1, keepdims=True)      # exact divide (parity)
                head_outs.append(jnp.dot(p, v, preferred_element_type=jnp.float32))  # (N, dh)
            # concat heads in (h d) order -> matches to_out weight rows
            o_rows.append(jnp.concatenate(head_outs, axis=-1))  # (N, INNER)
        o_all = jnp.concatenate(o_rows, axis=0)                 # (B*N, INNER)
        # Single fused output projection (K = INNER = 32) + residual
        x = x + jnp.dot(o_all, wo_ref[l],
                        preferred_element_type=jnp.float32) + bo_ref[l]

        # --------------------------- PreNorm + MLP --------------------------
        xn = _layernorm(x, ln2g_ref[l], ln2b_ref[l])
        h1 = jnp.dot(xn, w1_ref[l], preferred_element_type=jnp.float32) + b1_ref[l]
        h1 = _gelu_exact(h1)
        x = x + jnp.dot(h1, w2_ref[l], preferred_element_type=jnp.float32) + b2_ref[l]

    # --------------- pool='cls' + mlp_head, batched over B ------------------
    cls_rows = jnp.concatenate([x[b * n:b * n + 1, :] for b in range(bsz)],
                               axis=0)                          # (B, D)
    cls_rows = _layernorm(cls_rows, hg_ref[...], hb_ref[...])
    o_ref[...] = (jnp.dot(cls_rows, hw_ref[...],
                          preferred_element_type=jnp.float32) + hbias_ref[...])


# ------------------------------ forward wrapper -----------------------------
def vit_forward(params, img):
    b = img.shape[0]
    # Rearrange('b c (h p1) (w p2) -> b (h w) (p1 p2 c)')  (pure layout, XLA)
    x = img.reshape(b, CHANNELS, IMAGE // PATCH, PATCH, IMAGE // PATCH, PATCH)
    x = x.transpose(0, 2, 4, 3, 5, 1).reshape(b * NUM_PATCHES, PATCH_DIM)

    # token bias: row 0 = cls_token + pos[0]; row i>0 = patch_bias + pos[i]
    tok_bias = jnp.concatenate(
        [params['cls_token'] + params['pos_emb'][0:1],
         params['patch_b'] + params['pos_emb'][1:]], axis=0)    # (N, D)

    weights = [params['patch_w'], tok_bias,
               params['ln1_g'], params['ln1_b'],
               params['w_qkv'], params['w_o'], params['b_o'],
               params['ln2_g'], params['ln2_b'],
               params['w_ff1'], params['b_ff1'], params['w_ff2'], params['b_ff2'],
               params['head_ln_g'], params['head_ln_b'],
               params['head_w'], params['head_b']]

    # No grid: a single kernel invocation; every array is a whole-block VMEM ref
    # (so there is no pipelining / double-buffering overhead to suppress).
    out = pl.pallas_call(
        functools.partial(_vit_kernel, b),
        out_shape=jax.ShapeDtypeStruct((b, NUM_CLASSES), jnp.float32),
    )(x, *weights)
    return out


# ------------------------------ parameter init ------------------------------
def init_params(key):
    def nrm(k, shape, scale=0.02):
        return (scale * jax.random.normal(k, shape)).astype(jnp.float32)

    keys = iter(jax.random.split(key, 4 + 4 * DEPTH))
    scale = jnp.float32(DIM_HEAD ** -0.5)

    params = {
        'patch_w': nrm(next(keys), (PATCH_DIM, DIM)),
        'patch_b': jnp.zeros((1, DIM), jnp.float32),
        'cls_token': nrm(next(keys), (1, DIM), scale=1.0),
        'pos_emb': nrm(next(keys), (NUM_TOKENS, DIM), scale=1.0),
        'head_ln_g': jnp.ones((1, DIM), jnp.float32),
        'head_ln_b': jnp.zeros((1, DIM), jnp.float32),
        'head_w': nrm(next(keys), (DIM, NUM_CLASSES)),
        'head_b': jnp.zeros((1, NUM_CLASSES), jnp.float32),
    }

    wqkv, wo, w1, w2 = [], [], [], []
    for _ in range(DEPTH):
        w = nrm(next(keys), (DIM, 3 * INNER))                  # to_qkv (bias=False)
        # fold the 1/sqrt(dim_head) attention scale into the Q columns
        w = jnp.concatenate([w[:, :INNER] * scale, w[:, INNER:]], axis=1)
        wqkv.append(w)
        wo.append(nrm(next(keys), (INNER, DIM)))               # to_out Linear
        w1.append(nrm(next(keys), (DIM, MLP_DIM)))
        w2.append(nrm(next(keys), (MLP_DIM, DIM)))

    params.update({
        'ln1_g': jnp.ones((DEPTH, 1, DIM), jnp.float32),
        'ln1_b': jnp.zeros((DEPTH, 1, DIM), jnp.float32),
        'w_qkv': jnp.stack(wqkv),                              # (DEPTH, DIM, 3*INNER)
        'w_o': jnp.stack(wo),                                  # (DEPTH, INNER, DIM)
        'b_o': jnp.zeros((DEPTH, 1, DIM), jnp.float32),
        'ln2_g': jnp.ones((DEPTH, 1, DIM), jnp.float32),
        'ln2_b': jnp.zeros((DEPTH, 1, DIM), jnp.float32),
        'w_ff1': jnp.stack(w1),
        'b_ff1': jnp.zeros((DEPTH, 1, MLP_DIM), jnp.float32),
        'w_ff2': jnp.stack(w2),
        'b_ff2': jnp.zeros((DEPTH, 1, DIM), jnp.float32),
    })
    return params


# ----------------------------------- main -----------------------------------
if __name__ == "__main__":
    key = jax.random.PRNGKey(0)
    kp, kx = jax.random.split(key)
    params = init_params(kp)
    img = jax.random.normal(kx, (B, CHANNELS, IMAGE, IMAGE), jnp.float32)

    fwd = jax.jit(vit_forward)
    out = jax.block_until_ready(fwd(params, img))

    assert out.shape == (B, NUM_CLASSES)
    assert bool(jnp.all(jnp.isfinite(out)))
    print("KERNEL_OK")
</pallas_src>

<mosaic_0001>
module attributes {stable_mosaic.version = 11 : i64} {
  func.func @_vit_kernel(%arg0: memref<32x48xf32, #tpu.memory_space<vmem>>, %arg1: memref<48x32xf32, #tpu.memory_space<vmem>>, %arg2: memref<17x32xf32, #tpu.memory_space<vmem>>, %arg3: memref<2x1x32xf32, #tpu.memory_space<vmem>>, %arg4: memref<2x1x32xf32, #tpu.memory_space<vmem>>, %arg5: memref<2x32x96xf32, #tpu.memory_space<vmem>>, %arg6: memref<2x32x32xf32, #tpu.memory_space<vmem>>, %arg7: memref<2x1x32xf32, #tpu.memory_space<vmem>>, %arg8: memref<2x1x32xf32, #tpu.memory_space<vmem>>, %arg9: memref<2x1x32xf32, #tpu.memory_space<vmem>>, %arg10: memref<2x32x64xf32, #tpu.memory_space<vmem>>, %arg11: memref<2x1x64xf32, #tpu.memory_space<vmem>>, %arg12: memref<2x64x32xf32, #tpu.memory_space<vmem>>, %arg13: memref<2x1x32xf32, #tpu.memory_space<vmem>>, %arg14: memref<1x32xf32, #tpu.memory_space<vmem>>, %arg15: memref<1x32xf32, #tpu.memory_space<vmem>>, %arg16: memref<32x10xf32, #tpu.memory_space<vmem>>, %arg17: memref<1x10xf32, #tpu.memory_space<vmem>>, %arg18: memref<2x10xf32, #tpu.memory_space<vmem>>) attributes {dimension_semantics = [], scalar_prefetch = 0 : i64, scratch_operands = 0 : i64, tpu.core_type = #tpu.core_type<tc>} {
    %c0 = arith.constant 0 : index
    %c0_0 = arith.constant 0 : index
    %0 = vector.load %arg0[%c0, %c0_0] : memref<32x48xf32, #tpu.memory_space<vmem>>, vector<32x48xf32>
    %c0_1 = arith.constant 0 : index
    %c0_2 = arith.constant 0 : index
    %1 = vector.load %arg1[%c0_1, %c0_2] : memref<48x32xf32, #tpu.memory_space<vmem>>, vector<48x32xf32>
    %cst = arith.constant dense<0.000000e+00> : vector<32x32xf32>
    %2 = tpu.matmul %0, %1, %cst {dimension_numbers = #tpu.dot_dimension_numbers<[1], [0], [0], [1], [0, 0, 1, 1], [], []>} : vector<32x48xf32>, vector<48x32xf32>, vector<32x32xf32> -> vector<32x32xf32>
    %c0_3 = arith.constant 0 : index
    %c0_4 = arith.constant 0 : index
    %3 = vector.load %arg2[%c0_3, %c0_4] : memref<17x32xf32, #tpu.memory_space<vmem>>, vector<1x32xf32>
    %c1 = arith.constant 1 : index
    %c0_5 = arith.constant 0 : index
    %4 = vector.load %arg2[%c1, %c0_5] : memref<17x32xf32, #tpu.memory_space<vmem>>, vector<16x32xf32>
    %5 = vector.extract_strided_slice %2 {offsets = [0, 0], sizes = [16, 32], strides = [1, 1]} : vector<32x32xf32> to vector<16x32xf32>
    %6 = arith.addf %5, %4 : vector<16x32xf32>
    %7 = vector.extract_strided_slice %2 {offsets = [16, 0], sizes = [16, 32], strides = [1, 1]} : vector<32x32xf32> to vector<16x32xf32>
    %8 = arith.addf %7, %4 : vector<16x32xf32>
    %9 = tpu.concatenate %3, %6, %3, %8 in 0 : vector<1x32xf32>, vector<16x32xf32>, vector<1x32xf32>, vector<16x32xf32> -> vector<34x32xf32>
    %c0_6 = arith.constant 0 : index
    %c0_7 = arith.constant 0 : index
    %c0_8 = arith.constant 0 : index
    %10 = vector.load %arg3[%c0_6, %c0_7, %c0_8] : memref<2x1x32xf32, #tpu.memory_space<vmem>>, vector<1x1x32xf32>
    %11 = vector.shape_cast %10 : vector<1x1x32xf32> to vector<1x32xf32>
    %c0_9 = arith.constant 0 : index
    %c0_10 = arith.constant 0 : index
    %c0_11 = arith.constant 0 : index
    %12 = vector.load %arg4[%c0_9, %c0_10, %c0_11] : memref<2x1x32xf32, #tpu.memory_space<vmem>>, vector<1x1x32xf32>
    %13 = vector.shape_cast %12 : vector<1x1x32xf32> to vector<1x32xf32>
    %cst_12 = arith.constant dense<0.000000e+00> : vector<34xf32>
    %14 = vector.multi_reduction <add>, %9, %cst_12 [1] : vector<34x32xf32> to vector<34xf32>
    %15 = vector.shape_cast %14 : vector<34xf32> to vector<34x1xf32>
    %cst_13 = arith.constant 3.200000e+01 : f32
    %16 = vector.broadcast %cst_13 : f32 to vector<34x1xf32>
    %17 = arith.divf %15, %16 : vector<34x1xf32>
    %18 = vector.broadcast %17 : vector<34x1xf32> to vector<34x32xf32>
    %19 = arith.subf %9, %18 : vector<34x32xf32>
    %20 = arith.mulf %19, %19 : vector<34x32xf32>
    %cst_14 = arith.constant dense<0.000000e+00> : vector<34xf32>
    %21 = vector.multi_reduction <add>, %20, %cst_14 [1] : vector<34x32xf32> to vector<34xf32>
    %22 = vector.shape_cast %21 : vector<34xf32> to vector<34x1xf32>
    %cst_15 = arith.constant 3.200000e+01 : f32
    %23 = vector.broadcast %cst_15 : f32 to vector<34x1xf32>
    %24 = arith.divf %22, %23 : vector<34x1xf32>
    %25 = vector.broadcast %17 : vector<34x1xf32> to vector<34x32xf32>
    %26 = arith.subf %9, %25 : vector<34x32xf32>
    %cst_16 = arith.constant 9.99999974E-6 : f32
    %27 = vector.broadcast %cst_16 : f32 to vector<34x1xf32>
    %28 = arith.addf %24, %27 : vector<34x1xf32>
    %29 = math.rsqrt %28 : vector<34x1xf32>
    %30 = vector.broadcast %29 : vector<34x1xf32> to vector<34x32xf32>
    %31 = arith.mulf %26, %30 : vector<34x32xf32>
    %32 = vector.broadcast %11 : vector<1x32xf32> to vector<34x32xf32>
    %33 = arith.mulf %31, %32 : vector<34x32xf32>
    %34 = vector.broadcast %13 : vector<1x32xf32> to vector<34x32xf32>
    %35 = arith.addf %33, %34 : vector<34x32xf32>
    %c0_17 = arith.constant 0 : index
    %c0_18 = arith.constant 0 : index
    %c0_19 = arith.constant 0 : index
    %36 = vector.load %arg5[%c0_17, %c0_18, %c0_19] : memref<2x32x96xf32, #tpu.memory_space<vmem>>, vector<1x32x96xf32>
    %37 = vector.shape_cast %36 : vector<1x32x96xf32> to vector<32x96xf32>
    %cst_20 = arith.constant dense<0.000000e+00> : vector<34x96xf32>
    %38 = tpu.matmul %35, %37, %cst_20 {dimension_numbers = #tpu.dot_dimension_numbers<[1], [0], [0], [1], [0, 0, 1, 1], [], []>} : vector<34x32xf32>, vector<32x96xf32>, vector<34x96xf32> -> vector<34x96xf32>
    %39 = vector.extract_strided_slice %38 {offsets = [0, 0], sizes = [17, 96], strides = [1, 1]} : vector<34x96xf32> to vector<17x96xf32>
    %40 = vector.extract_strided_slice %39 {offsets = [0, 0], sizes = [17, 8], strides = [1, 1]} : vector<17x96xf32> to vector<17x8xf32>
    %41 = vector.extract_strided_slice %39 {offsets = [0, 32], sizes = [17, 8], strides = [1, 1]} : vector<17x96xf32> to vector<17x8xf32>
    %42 = vector.extract_strided_slice %39 {offsets = [0, 64], sizes = [17, 8], strides = [1, 1]} : vector<17x96xf32> to vector<17x8xf32>
    "tpu.trace_start"() <{level = 10 : i32, message = "nd,md->nm"}> : () -> ()
    %cst_21 = arith.constant dense<0.000000e+00> : vector<17x17xf32>
    %43 = tpu.matmul %40, %41, %cst_21 {dimension_numbers = #tpu.dot_dimension_numbers<[1], [1], [0], [0], [0, 0, 1, 0], [], []>} : vector<17x8xf32>, vector<17x8xf32>, vector<17x17xf32> -> vector<17x17xf32>
    "tpu.trace_stop"() : () -> ()
    %cst_22 = arith.constant dense<0xFF800000> : vector<17xf32>
    %44 = vector.multi_reduction <maximumf>, %43, %cst_22 [1] : vector<17x17xf32> to vector<17xf32>
    %45 = vector.shape_cast %44 : vector<17xf32> to vector<17x1xf32>
    %46 = vector.broadcast %45 : vector<17x1xf32> to vector<17x17xf32>
    %47 = arith.subf %43, %46 : vector<17x17xf32>
    %48 = math.exp %47 : vector<17x17xf32>
    %cst_23 = arith.constant dense<0.000000e+00> : vector<17xf32>
    %49 = vector.multi_reduction <add>, %48, %cst_23 [1] : vector<17x17xf32> to vector<17xf32>
    %50 = vector.shape_cast %49 : vector<17xf32> to vector<17x1xf32>
    %51 = vector.broadcast %50 : vector<17x1xf32> to vector<17x17xf32>
    %52 = arith.divf %48, %51 : vector<17x17xf32>
    %cst_24 = arith.constant dense<0.000000e+00> : vector<17x8xf32>
    %53 = tpu.matmul %52, %42, %cst_24 {dimension_numbers = #tpu.dot_dimension_numbers<[1], [0], [0], [1], [0, 0, 1, 1], [], []>} : vector<17x17xf32>, vector<17x8xf32>, vector<17x8xf32> -> vector<17x8xf32>
    %54 = vector.extract_strided_slice %39 {offsets = [0, 8], sizes = [17, 8], strides = [1, 1]} : vector<17x96xf32> to vector<17x8xf32>
    %55 = vector.extract_strided_slice %39 {offsets = [0, 40], sizes = [17, 8], strides = [1, 1]} : vector<17x96xf32> to vector<17x8xf32>
    %56 = vector.extract_strided_slice %39 {offsets = [0, 72], sizes = [17, 8], strides = [1, 1]} : vector<17x96xf32> to vector<17x8xf32>
    "tpu.trace_start"() <{level = 10 : i32, message = "nd,md->nm"}> : () -> ()
    %cst_25 = arith.constant dense<0.000000e+00> : vector<17x17xf32>
    %57 = tpu.matmul %54, %55, %cst_25 {dimension_numbers = #tpu.dot_dimension_numbers<[1], [1], [0], [0], [0, 0, 1, 0], [], []>} : vector<17x8xf32>, vector<17x8xf32>, vector<17x17xf32> -> vector<17x17xf32>
    "tpu.trace_stop"() : () -> ()
    %cst_26 = arith.constant dense<0xFF800000> : vector<17xf32>
    %58 = vector.multi_reduction <maximumf>, %57, %cst_26 [1] : vector<17x17xf32> to vector<17xf32>
    %59 = vector.shape_cast %58 : vector<17xf32> to vector<17x1xf32>
    %60 = vector.broadcast %59 : vector<17x1xf32> to vector<17x17xf32>
    %61 = arith.subf %57, %60 : vector<17x17xf32>
    %62 = math.exp %61 : vector<17x17xf32>
    %cst_27 = arith.constant dense<0.000000e+00> : vector<17xf32>
    %63 = vector.multi_reduction <add>, %62, %cst_27 [1] : vector<17x17xf32> to vector<17xf32>
    %64 = vector.shape_cast %63 : vector<17xf32> to vector<17x1xf32>
    %65 = vector.broadcast %64 : vector<17x1xf32> to vector<17x17xf32>
    %66 = arith.divf %62, %65 : vector<17x17xf32>
    %cst_28 = arith.constant dense<0.000000e+00> : vector<17x8xf32>
    %67 = tpu.matmul %66, %56, %cst_28 {dimension_numbers = #tpu.dot_dimension_numbers<[1], [0], [0], [1], [0, 0, 1, 1], [], []>} : vector<17x17xf32>, vector<17x8xf32>, vector<17x8xf32> -> vector<17x8xf32>
    %68 = vector.extract_strided_slice %39 {offsets = [0, 16], sizes = [17, 8], strides = [1, 1]} : vector<17x96xf32> to vector<17x8xf32>
    %69 = vector.extract_strided_slice %39 {offsets = [0, 48], sizes = [17, 8], strides = [1, 1]} : vector<17x96xf32> to vector<17x8xf32>
    %70 = vector.extract_strided_slice %39 {offsets = [0, 80], sizes = [17, 8], strides = [1, 1]} : vector<17x96xf32> to vector<17x8xf32>
    "tpu.trace_start"() <{level = 10 : i32, message = "nd,md->nm"}> : () -> ()
    %cst_29 = arith.constant dense<0.000000e+00> : vector<17x17xf32>
    %71 = tpu.matmul %68, %69, %cst_29 {dimension_numbers = #tpu.dot_dimension_numbers<[1], [1], [0], [0], [0, 0, 1, 0], [], []>} : vector<17x8xf32>, vector<17x8xf32>, vector<17x17xf32> -> vector<17x17xf32>
    "tpu.trace_stop"() : () -> ()
    %cst_30 = arith.constant dense<0xFF800000> : vector<17xf32>
    %72 = vector.multi_reduction <maximumf>, %71, %cst_30 [1] : vector<17x17xf32> to vector<17xf32>
    %73 = vector.shape_cast %72 : vector<17xf32> to vector<17x1xf32>
    %74 = vector.broadcast %73 : vector<17x1xf32> to vector<17x17xf32>
    %75 = arith.subf %71, %74 : vector<17x17xf32>
    %76 = math.exp %75 : vector<17x17xf32>
    %cst_31 = arith.constant dense<0.000000e+00> : vector<17xf32>
    %77 = vector.multi_reduction <add>, %76, %cst_31 [1] : vector<17x17xf32> to vector<17xf32>
    %78 = vector.shape_cast %77 : vector<17xf32> to vector<17x1xf32>
    %79 = vector.broadcast %78 : vector<17x1xf32> to vector<17x17xf32>
    %80 = arith.divf %76, %79 : vector<17x17xf32>
    %cst_32 = arith.constant dense<0.000000e+00> : vector<17x8xf32>
    %81 = tpu.matmul %80, %70, %cst_32 {dimension_numbers = #tpu.dot_dimension_numbers<[1], [0], [0], [1], [0, 0, 1, 1], [], []>} : vector<17x17xf32>, vector<17x8xf32>, vector<17x8xf32> -> vector<17x8xf32>
    %82 = vector.extract_strided_slice %39 {offsets = [0, 24], sizes = [17, 8], strides = [1, 1]} : vector<17x96xf32> to vector<17x8xf32>
    %83 = vector.extract_strided_slice %39 {offsets = [0, 56], sizes = [17, 8], strides = [1, 1]} : vector<17x96xf32> to vector<17x8xf32>
    %84 = vector.extract_strided_slice %39 {offsets = [0, 88], sizes = [17, 8], strides = [1, 1]} : vector<17x96xf32> to vector<17x8xf32>
    "tpu.trace_start"() <{level = 10 : i32, message = "nd,md->nm"}> : () -> ()
    %cst_33 = arith.constant dense<0.000000e+00> : vector<17x17xf32>
    %85 = tpu.matmul %82, %83, %cst_33 {dimension_numbers = #tpu.dot_dimension_numbers<[1], [1], [0], [0], [0, 0, 1, 0], [], []>} : vector<17x8xf32>, vector<17x8xf32>, vector<17x17xf32> -> vector<17x17xf32>
    "tpu.trace_stop"() : () -> ()
    %cst_34 = arith.constant dense<0xFF800000> : vector<17xf32>
    %86 = vector.multi_reduction <maximumf>, %85, %cst_34 [1] : vector<17x17xf32> to vector<17xf32>
    %87 = vector.shape_cast %86 : vector<17xf32> to vector<17x1xf32>
    %88 = vector.broadcast %87 : vector<17x1xf32> to vector<17x17xf32>
    %89 = arith.subf %85, %88 : vector<17x17xf32>
    %90 = math.exp %89 : vector<17x17xf32>
    %cst_35 = arith.constant dense<0.000000e+00> : vector<17xf32>
    %91 = vector.multi_reduction <add>, %90, %cst_35 [1] : vector<17x17xf32> to vector<17xf32>
    %92 = vector.shape_cast %91 : vector<17xf32> to vector<17x1xf32>
    %93 = vector.broadcast %92 : vector<17x1xf32> to vector<17x17xf32>
    %94 = arith.divf %90, %93 : vector<17x17xf32>
    %cst_36 = arith.constant dense<0.000000e+00> : vector<17x8xf32>
    %95 = tpu.matmul %94, %84, %cst_36 {dimension_numbers = #tpu.dot_dimension_numbers<[1], [0], [0], [1], [0, 0, 1, 1], [], []>} : vector<17x17xf32>, vector<17x8xf32>, vector<17x8xf32> -> vector<17x8xf32>
    %96 = tpu.concatenate %53, %67, %81, %95 in 1 : vector<17x8xf32>, vector<17x8xf32>, vector<17x8xf32>, vector<17x8xf32> -> vector<17x32xf32>
    %97 = vector.extract_strided_slice %38 {offsets = [17, 0], sizes = [17, 96], strides = [1, 1]} : vector<34x96xf32> to vector<17x96xf32>
    %98 = vector.extract_strided_slice %97 {offsets = [0, 0], sizes = [17, 8], strides = [1, 1]} : vector<17x96xf32> to vector<17x8xf32>
    %99 = vector.extract_strided_slice %97 {offsets = [0, 32], sizes = [17, 8], strides = [1, 1]} : vector<17x96xf32> to vector<17x8xf32>
    %100 = vector.extract_strided_slice %97 {offsets = [0, 64], sizes = [17, 8], strides = [1, 1]} : vector<17x96xf32> to vector<17x8xf32>
    "tpu.trace_start"() <{level = 10 : i32, message = "nd,md->nm"}> : () -> ()
    %cst_37 = arith.constant dense<0.000000e+00> : vector<17x17xf32>
    %101 = tpu.matmul %98, %99, %cst_37 {dimension_numbers = #tpu.dot_dimension_numbers<[1], [1], [0], [0], [0, 0, 1, 0], [], []>} : vector<17x8xf32>, vector<17x8xf32>, vector<17x17xf32> -> vector<17x17xf32>
    "tpu.trace_stop"() : () -> ()
    %cst_38 = arith.constant dense<0xFF800000> : vector<17xf32>
    %102 = vector.multi_reduction <maximumf>, %101, %cst_38 [1] : vector<17x17xf32> to vector<17xf32>
    %103 = vector.shape_cast %102 : vector<17xf32> to vector<17x1xf32>
    %104 = vector.broadcast %103 : vector<17x1xf32> to vector<17x17xf32>
    %105 = arith.subf %101, %104 : vector<17x17xf32>
    %106 = math.exp %105 : vector<17x17xf32>
    %cst_39 = arith.constant dense<0.000000e+00> : vector<17xf32>
    %107 = vector.multi_reduction <add>, %106, %cst_39 [1] : vector<17x17xf32> to vector<17xf32>
    %108 = vector.shape_cast %107 : vector<17xf32> to vector<17x1xf32>
    %109 = vector.broadcast %108 : vector<17x1xf32> to vector<17x17xf32>
    %110 = arith.divf %106, %109 : vector<17x17xf32>
    %cst_40 = arith.constant dense<0.000000e+00> : vector<17x8xf32>
    %111 = tpu.matmul %110, %100, %cst_40 {dimension_numbers = #tpu.dot_dimension_numbers<[1], [0], [0], [1], [0, 0, 1, 1], [], []>} : vector<17x17xf32>, vector<17x8xf32>, vector<17x8xf32> -> vector<17x8xf32>
    %112 = vector.extract_strided_slice %97 {offsets = [0, 8], sizes = [17, 8], strides = [1, 1]} : vector<17x96xf32> to vector<17x8xf32>
    %113 = vector.extract_strided_slice %97 {offsets = [0, 40], sizes = [17, 8], strides = [1, 1]} : vector<17x96xf32> to vector<17x8xf32>
    %114 = vector.extract_strided_slice %97 {offsets = [0, 72], sizes = [17, 8], strides = [1, 1]} : vector<17x96xf32> to vector<17x8xf32>
    "tpu.trace_start"() <{level = 10 : i32, message = "nd,md->nm"}> : () -> ()
    %cst_41 = arith.constant dense<0.000000e+00> : vector<17x17xf32>
    %115 = tpu.matmul %112, %113, %cst_41 {dimension_numbers = #tpu.dot_dimension_numbers<[1], [1], [0], [0], [0, 0, 1, 0], [], []>} : vector<17x8xf32>, vector<17x8xf32>, vector<17x17xf32> -> vector<17x17xf32>
    "tpu.trace_stop"() : () -> ()
    %cst_42 = arith.constant dense<0xFF800000> : vector<17xf32>
    %116 = vector.multi_reduction <maximumf>, %115, %cst_42 [1] : vector<17x17xf32> to vector<17xf32>
    %117 = vector.shape_cast %116 : vector<17xf32> to vector<17x1xf32>
    %118 = vector.broadcast %117 : vector<17x1xf32> to vector<17x17xf32>
    %119 = arith.subf %115, %118 : vector<17x17xf32>
    %120 = math.exp %119 : vector<17x17xf32>
    %cst_43 = arith.constant dense<0.000000e+00> : vector<17xf32>
    %121 = vector.multi_reduction <add>, %120, %cst_43 [1] : vector<17x17xf32> to vector<17xf32>
    %122 = vector.shape_cast %121 : vector<17xf32> to vector<17x1xf32>
    %123 = vector.broadcast %122 : vector<17x1xf32> to vector<17x17xf32>
    %124 = arith.divf %120, %123 : vector<17x17xf32>
    %cst_44 = arith.constant dense<0.000000e+00> : vector<17x8xf32>
    %125 = tpu.matmul %124, %114, %cst_44 {dimension_numbers = #tpu.dot_dimension_numbers<[1], [0], [0], [1], [0, 0, 1, 1], [], []>} : vector<17x17xf32>, vector<17x8xf32>, vector<17x8xf32> -> vector<17x8xf32>
    %126 = vector.extract_strided_slice %97 {offsets = [0, 16], sizes = [17, 8], strides = [1, 1]} : vector<17x96xf32> to vector<17x8xf32>
    %127 = vector.extract_strided_slice %97 {offsets = [0, 48], sizes = [17, 8], strides = [1, 1]} : vector<17x96xf32> to vector<17x8xf32>
    %128 = vector.extract_strided_slice %97 {offsets = [0, 80], sizes = [17, 8], strides = [1, 1]} : vector<17x96xf32> to vector<17x8xf32>
    "tpu.trace_start"() <{level = 10 : i32, message = "nd,md->nm"}> : () -> ()
    %cst_45 = arith.constant dense<0.000000e+00> : vector<17x17xf32>
    %129 = tpu.matmul %126, %127, %cst_45 {dimension_numbers = #tpu.dot_dimension_numbers<[1], [1], [0], [0], [0, 0, 1, 0], [], []>} : vector<17x8xf32>, vector<17x8xf32>, vector<17x17xf32> -> vector<17x17xf32>
    "tpu.trace_stop"() : () -> ()
    %cst_46 = arith.constant dense<0xFF800000> : vector<17xf32>
    %130 = vector.multi_reduction <maximumf>, %129, %cst_46 [1] : vector<17x17xf32> to vector<17xf32>
    %131 = vector.shape_cast %130 : vector<17xf32> to vector<17x1xf32>
    %132 = vector.broadcast %131 : vector<17x1xf32> to vector<17x17xf32>
    %133 = arith.subf %129, %132 : vector<17x17xf32>
    %134 = math.exp %133 : vector<17x17xf32>
    %cst_47 = arith.constant dense<0.000000e+00> : vector<17xf32>
    %135 = vector.multi_reduction <add>, %134, %cst_47 [1] : vector<17x17xf32> to vector<17xf32>
    %136 = vector.shape_cast %135 : vector<17xf32> to vector<17x1xf32>
    %137 = vector.broadcast %136 : vector<17x1xf32> to vector<17x17xf32>
    %138 = arith.divf %134, %137 : vector<17x17xf32>
    %cst_48 = arith.constant dense<0.000000e+00> : vector<17x8xf32>
    %139 = tpu.matmul %138, %128, %cst_48 {dimension_numbers = #tpu.dot_dimension_numbers<[1], [0], [0], [1], [0, 0, 1, 1], [], []>} : vector<17x17xf32>, vector<17x8xf32>, vector<17x8xf32> -> vector<17x8xf32>
    %140 = vector.extract_strided_slice %97 {offsets = [0, 24], sizes = [17, 8], strides = [1, 1]} : vector<17x96xf32> to vector<17x8xf32>
    %141 = vector.extract_strided_slice %97 {offsets = [0, 56], sizes = [17, 8], strides = [1, 1]} : vector<17x96xf32> to vector<17x8xf32>
    %142 = vector.extract_strided_slice %97 {offsets = [0, 88], sizes = [17, 8], strides = [1, 1]} : vector<17x96xf32> to vector<17x8xf32>
    "tpu.trace_start"() <{level = 10 : i32, message = "nd,md->nm"}> : () -> ()
    %cst_49 = arith.constant dense<0.000000e+00> : vector<17x17xf32>
    %143 = tpu.matmul %140, %141, %cst_49 {dimension_numbers = #tpu.dot_dimension_numbers<[1], [1], [0], [0], [0, 0, 1, 0], [], []>} : vector<17x8xf32>, vector<17x8xf32>, vector<17x17xf32> -> vector<17x17xf32>
    "tpu.trace_stop"() : () -> ()
    %cst_50 = arith.constant dense<0xFF800000> : vector<17xf32>
    %144 = vector.multi_reduction <maximumf>, %143, %cst_50 [1] : vector<17x17xf32> to vector<17xf32>
    %145 = vector.shape_cast %144 : vector<17xf32> to vector<17x1xf32>
    %146 = vector.broadcast %145 : vector<17x1xf32> to vector<17x17xf32>
    %147 = arith.subf %143, %146 : vector<17x17xf32>
    %148 = math.exp %147 : vector<17x17xf32>
    %cst_51 = arith.constant dense<0.000000e+00> : vector<17xf32>
    %149 = vector.multi_reduction <add>, %148, %cst_51 [1] : vector<17x17xf32> to vector<17xf32>
    %150 = vector.shape_cast %149 : vector<17xf32> to vector<17x1xf32>
    %151 = vector.broadcast %150 : vector<17x1xf32> to vector<17x17xf32>
    %152 = arith.divf %148, %151 : vector<17x17xf32>
    %cst_52 = arith.constant dense<0.000000e+00> : vector<17x8xf32>
    %153 = tpu.matmul %152, %142, %cst_52 {dimension_numbers = #tpu.dot_dimension_numbers<[1], [0], [0], [1], [0, 0, 1, 1], [], []>} : vector<17x17xf32>, vector<17x8xf32>, vector<17x8xf32> -> vector<17x8xf32>
    %154 = tpu.concatenate %111, %125, %139, %153 in 1 : vector<17x8xf32>, vector<17x8xf32>, vector<17x8xf32>, vector<17x8xf32> -> vector<17x32xf32>
    %155 = tpu.concatenate %96, %154 in 0 : vector<17x32xf32>, vector<17x32xf32> -> vector<34x32xf32>
    %c0_53 = arith.constant 0 : index
    %c0_54 = arith.constant 0 : index
    %c0_55 = arith.constant 0 : index
    %156 = vector.load %arg6[%c0_53, %c0_54, %c0_55] : memref<2x32x32xf32, #tpu.memory_space<vmem>>, vector<1x32x32xf32>
    %157 = vector.shape_cast %156 : vector<1x32x32xf32> to vector<32x32xf32>
    %cst_56 = arith.constant dense<0.000000e+00> : vector<34x32xf32>
    %158 = tpu.matmul %155, %157, %cst_56 {dimension_numbers = #tpu.dot_dimension_numbers<[1], [0], [0], [1], [0, 0, 1, 1], [], []>} : vector<34x32xf32>, vector<32x32xf32>, vector<34x32xf32> -> vector<34x32xf32>
    %159 = arith.addf %9, %158 : vector<34x32xf32>
    %c0_57 = arith.constant 0 : index
    %c0_58 = arith.constant 0 : index
    %c0_59 = arith.constant 0 : index
    %160 = vector.load %arg7[%c0_57, %c0_58, %c0_59] : memref<2x1x32xf32, #tpu.memory_space<vmem>>, vector<1x1x32xf32>
    %161 = vector.shape_cast %160 : vector<1x1x32xf32> to vector<1x32xf32>
    %162 = vector.broadcast %161 : vector<1x32xf32> to vector<34x32xf32>
    %163 = arith.addf %159, %162 : vector<34x32xf32>
    %c0_60 = arith.constant 0 : index
    %c0_61 = arith.constant 0 : index
    %c0_62 = arith.constant 0 : index
    %164 = vector.load %arg8[%c0_60, %c0_61, %c0_62] : memref<2x1x32xf32, #tpu.memory_space<vmem>>, vector<1x1x32xf32>
    %165 = vector.shape_cast %164 : vector<1x1x32xf32> to vector<1x32xf32>
    %c0_63 = arith.constant 0 : index
    %c0_64 = arith.constant 0 : index
    %c0_65 = arith.constant 0 : index
    %166 = vector.load %arg9[%c0_63, %c0_64, %c0_65] : memref<2x1x32xf32, #tpu.memory_space<vmem>>, vector<1x1x32xf32>
    %167 = vector.shape_cast %166 : vector<1x1x32xf32> to vector<1x32xf32>
    %cst_66 = arith.constant dense<0.000000e+00> : vector<34xf32>
    %168 = vector.multi_reduction <add>, %163, %cst_66 [1] : vector<34x32xf32> to vector<34xf32>
    %169 = vector.shape_cast %168 : vector<34xf32> to vector<34x1xf32>
    %cst_67 = arith.constant 3.200000e+01 : f32
    %170 = vector.broadcast %cst_67 : f32 to vector<34x1xf32>
    %171 = arith.divf %169, %170 : vector<34x1xf32>
    %172 = vector.broadcast %171 : vector<34x1xf32> to vector<34x32xf32>
    %173 = arith.subf %163, %172 : vector<34x32xf32>
    %174 = arith.mulf %173, %173 : vector<34x32xf32>
    %cst_68 = arith.constant dense<0.000000e+00> : vector<34xf32>
    %175 = vector.multi_reduction <add>, %174, %cst_68 [1] : vector<34x32xf32> to vector<34xf32>
    %176 = vector.shape_cast %175 : vector<34xf32> to vector<34x1xf32>
    %cst_69 = arith.constant 3.200000e+01 : f32
    %177 = vector.broadcast %cst_69 : f32 to vector<34x1xf32>
    %178 = arith.divf %176, %177 : vector<34x1xf32>
    %179 = vector.broadcast %171 : vector<34x1xf32> to vector<34x32xf32>
    %180 = arith.subf %163, %179 : vector<34x32xf32>
    %cst_70 = arith.constant 9.99999974E-6 : f32
    %181 = vector.broadcast %cst_70 : f32 to vector<34x1xf32>
    %182 = arith.addf %178, %181 : vector<34x1xf32>
    %183 = math.rsqrt %182 : vector<34x1xf32>
    %184 = vector.broadcast %183 : vector<34x1xf32> to vector<34x32xf32>
    %185 = arith.mulf %180, %184 : vector<34x32xf32>
    %186 = vector.broadcast %165 : vector<1x32xf32> to vector<34x32xf32>
    %187 = arith.mulf %185, %186 : vector<34x32xf32>
    %188 = vector.broadcast %167 : vector<1x32xf32> to vector<34x32xf32>
    %189 = arith.addf %187, %188 : vector<34x32xf32>
    %c0_71 = arith.constant 0 : index
    %c0_72 = arith.constant 0 : index
    %c0_73 = arith.constant 0 : index
    %190 = vector.load %arg10[%c0_71, %c0_72, %c0_73] : memref<2x32x64xf32, #tpu.memory_space<vmem>>, vector<1x32x64xf32>
    %191 = vector.shape_cast %190 : vector<1x32x64xf32> to vector<32x64xf32>
    %cst_74 = arith.constant dense<0.000000e+00> : vector<34x64xf32>
    %192 = tpu.matmul %189, %191, %cst_74 {dimension_numbers = #tpu.dot_dimension_numbers<[1], [0], [0], [1], [0, 0, 1, 1], [], []>} : vector<34x32xf32>, vector<32x64xf32>, vector<34x64xf32> -> vector<34x64xf32>
    %c0_75 = arith.constant 0 : index
    %c0_76 = arith.constant 0 : index
    %c0_77 = arith.constant 0 : index
    %193 = vector.load %arg11[%c0_75, %c0_76, %c0_77] : memref<2x1x64xf32, #tpu.memory_space<vmem>>, vector<1x1x64xf32>
    %194 = vector.shape_cast %193 : vector<1x1x64xf32> to vector<1x64xf32>
    %195 = vector.broadcast %194 : vector<1x64xf32> to vector<34x64xf32>
    %196 = arith.addf %192, %195 : vector<34x64xf32>
    %cst_78 = arith.constant 5.000000e-01 : f32
    %197 = vector.broadcast %cst_78 : f32 to vector<34x64xf32>
    %198 = arith.mulf %197, %196 : vector<34x64xf32>
    %cst_79 = arith.constant 0.707106769 : f32
    %199 = vector.broadcast %cst_79 : f32 to vector<34x64xf32>
    %200 = arith.mulf %196, %199 : vector<34x64xf32>
    %201 = math.erf %200 : vector<34x64xf32>
    %cst_80 = arith.constant 1.000000e+00 : f32
    %202 = vector.broadcast %cst_80 : f32 to vector<34x64xf32>
    %203 = arith.addf %202, %201 : vector<34x64xf32>
    %204 = arith.mulf %198, %203 : vector<34x64xf32>
    %c0_81 = arith.constant 0 : index
    %c0_82 = arith.constant 0 : index
    %c0_83 = arith.constant 0 : index
    %205 = vector.load %arg12[%c0_81, %c0_82, %c0_83] : memref<2x64x32xf32, #tpu.memory_space<vmem>>, vector<1x64x32xf32>
    %206 = vector.shape_cast %205 : vector<1x64x32xf32> to vector<64x32xf32>
    %cst_84 = arith.constant dense<0.000000e+00> : vector<34x32xf32>
    %207 = tpu.matmul %204, %206, %cst_84 {dimension_numbers = #tpu.dot_dimension_numbers<[1], [0], [0], [1], [0, 0, 1, 1], [], []>} : vector<34x64xf32>, vector<64x32xf32>, vector<34x32xf32> -> vector<34x32xf32>
    %208 = arith.addf %163, %207 : vector<34x32xf32>
    %c0_85 = arith.constant 0 : index
    %c0_86 = arith.constant 0 : index
    %c0_87 = arith.constant 0 : index
    %209 = vector.load %arg13[%c0_85, %c0_86, %c0_87] : memref<2x1x32xf32, #tpu.memory_space<vmem>>, vector<1x1x32xf32>
    %210 = vector.shape_cast %209 : vector<1x1x32xf32> to vector<1x32xf32>
    %211 = vector.broadcast %210 : vector<1x32xf32> to vector<34x32xf32>
    %212 = arith.addf %208, %211 : vector<34x32xf32>
    %c1_88 = arith.constant 1 : index
    %c0_89 = arith.constant 0 : index
    %c0_90 = arith.constant 0 : index
    %213 = vector.load %arg3[%c1_88, %c0_89, %c0_90] : memref<2x1x32xf32, #tpu.memory_space<vmem>>, vector<1x1x32xf32>
    %214 = vector.shape_cast %213 : vector<1x1x32xf32> to vector<1x32xf32>
    %c1_91 = arith.constant 1 : index
    %c0_92 = arith.constant 0 : index
    %c0_93 = arith.constant 0 : index
    %215 = vector.load %arg4[%c1_91, %c0_92, %c0_93] : memref<2x1x32xf32, #tpu.memory_space<vmem>>, vector<1x1x32xf32>
    %216 = vector.shape_cast %215 : vector<1x1x32xf32> to vector<1x32xf32>
    %cst_94 = arith.constant dense<0.000000e+00> : vector<34xf32>
    %217 = vector.multi_reduction <add>, %212, %cst_94 [1] : vector<34x32xf32> to vector<34xf32>
    %218 = vector.shape_cast %217 : vector<34xf32> to vector<34x1xf32>
    %cst_95 = arith.constant 3.200000e+01 : f32
    %219 = vector.broadcast %cst_95 : f32 to vector<34x1xf32>
    %220 = arith.divf %218, %219 : vector<34x1xf32>
    %221 = vector.broadcast %220 : vector<34x1xf32> to vector<34x32xf32>
    %222 = arith.subf %212, %221 : vector<34x32xf32>
    %223 = arith.mulf %222, %222 : vector<34x32xf32>
    %cst_96 = arith.constant dense<0.000000e+00> : vector<34xf32>
    %224 = vector.multi_reduction <add>, %223, %cst_96 [1] : vector<34x32xf32> to vector<34xf32>
    %225 = vector.shape_cast %224 : vector<34xf32> to vector<34x1xf32>
    %cst_97 = arith.constant 3.200000e+01 : f32
    %226 = vector.broadcast %cst_97 : f32 to vector<34x1xf32>
    %227 = arith.divf %225, %226 : vector<34x1xf32>
    %228 = vector.broadcast %220 : vector<34x1xf32> to vector<34x32xf32>
    %229 = arith.subf %212, %228 : vector<34x32xf32>
    %cst_98 = arith.constant 9.99999974E-6 : f32
    %230 = vector.broadcast %cst_98 : f32 to vector<34x1xf32>
    %231 = arith.addf %227, %230 : vector<34x1xf32>
    %232 = math.rsqrt %231 : vector<34x1xf32>
    %233 = vector.broadcast %232 : vector<34x1xf32> to vector<34x32xf32>
    %234 = arith.mulf %229, %233 : vector<34x32xf32>
    %235 = vector.broadcast %214 : vector<1x32xf32> to vector<34x32xf32>
    %236 = arith.mulf %234, %235 : vector<34x32xf32>
    %237 = vector.broadcast %216 : vector<1x32xf32> to vector<34x32xf32>
    %238 = arith.addf %236, %237 : vector<34x32xf32>
    %c1_99 = arith.constant 1 : index
    %c0_100 = arith.constant 0 : index
    %c0_101 = arith.constant 0 : index
    %239 = vector.load %arg5[%c1_99, %c0_100, %c0_101] : memref<2x32x96xf32, #tpu.memory_space<vmem>>, vector<1x32x96xf32>
    %240 = vector.shape_cast %239 : vector<1x32x96xf32> to vector<32x96xf32>
    %cst_102 = arith.constant dense<0.000000e+00> : vector<34x96xf32>
    %241 = tpu.matmul %238, %240, %cst_102 {dimension_numbers = #tpu.dot_dimension_numbers<[1], [0], [0], [1], [0, 0, 1, 1], [], []>} : vector<34x32xf32>, vector<32x96xf32>, vector<34x96xf32> -> vector<34x96xf32>
    %242 = vector.extract_strided_slice %241 {offsets = [0, 0], sizes = [17, 96], strides = [1, 1]} : vector<34x96xf32> to vector<17x96xf32>
    %243 = vector.extract_strided_slice %242 {offsets = [0, 0], sizes = [17, 8], strides = [1, 1]} : vector<17x96xf32> to vector<17x8xf32>
    %244 = vector.extract_strided_slice %242 {offsets = [0, 32], sizes = [17, 8], strides = [1, 1]} : vector<17x96xf32> to vector<17x8xf32>
    %245 = vector.extract_strided_slice %242 {offsets = [0, 64], sizes = [17, 8], strides = [1, 1]} : vector<17x96xf32> to vector<17x8xf32>
    "tpu.trace_start"() <{level = 10 : i32, message = "nd,md->nm"}> : () -> ()
    %cst_103 = arith.constant dense<0.000000e+00> : vector<17x17xf32>
    %246 = tpu.matmul %243, %244, %cst_103 {dimension_numbers = #tpu.dot_dimension_numbers<[1], [1], [0], [0], [0, 0, 1, 0], [], []>} : vector<17x8xf32>, vector<17x8xf32>, vector<17x17xf32> -> vector<17x17xf32>
    "tpu.trace_stop"() : () -> ()
    %cst_104 = arith.constant dense<0xFF800000> : vector<17xf32>
    %247 = vector.multi_reduction <maximumf>, %246, %cst_104 [1] : vector<17x17xf32> to vector<17xf32>
    %248 = vector.shape_cast %247 : vector<17xf32> to vector<17x1xf32>
    %249 = vector.broadcast %248 : vector<17x1xf32> to vector<17x17xf32>
    %250 = arith.subf %246, %249 : vector<17x17xf32>
    %251 = math.exp %250 : vector<17x17xf32>
    %cst_105 = arith.constant dense<0.000000e+00> : vector<17xf32>
    %252 = vector.multi_reduction <add>, %251, %cst_105 [1] : vector<17x17xf32> to vector<17xf32>
    %253 = vector.shape_cast %252 : vector<17xf32> to vector<17x1xf32>
    %254 = vector.broadcast %253 : vector<17x1xf32> to vector<17x17xf32>
    %255 = arith.divf %251, %254 : vector<17x17xf32>
    %cst_106 = arith.constant dense<0.000000e+00> : vector<17x8xf32>
    %256 = tpu.matmul %255, %245, %cst_106 {dimension_numbers = #tpu.dot_dimension_numbers<[1], [0], [0], [1], [0, 0, 1, 1], [], []>} : vector<17x17xf32>, vector<17x8xf32>, vector<17x8xf32> -> vector<17x8xf32>
    %257 = vector.extract_strided_slice %242 {offsets = [0, 8], sizes = [17, 8], strides = [1, 1]} : vector<17x96xf32> to vector<17x8xf32>
    %258 = vector.extract_strided_slice %242 {offsets = [0, 40], sizes = [17, 8], strides = [1, 1]} : vector<17x96xf32> to vector<17x8xf32>
    %259 = vector.extract_strided_slice %242 {offsets = [0, 72], sizes = [17, 8], strides = [1, 1]} : vector<17x96xf32> to vector<17x8xf32>
    "tpu.trace_start"() <{level = 10 : i32, message = "nd,md->nm"}> : () -> ()
    %cst_107 = arith.constant dense<0.000000e+00> : vector<17x17xf32>
    %260 = tpu.matmul %257, %258, %cst_107 {dimension_numbers = #tpu.dot_dimension_numbers<[1], [1], [0], [0], [0, 0, 1, 0], [], []>} : vector<17x8xf32>, vector<17x8xf32>, vector<17x17xf32> -> vector<17x17xf32>
    "tpu.trace_stop"() : () -> ()
    %cst_108 = arith.constant dense<0xFF800000> : vector<17xf32>
    %261 = vector.multi_reduction <maximumf>, %260, %cst_108 [1] : vector<17x17xf32> to vector<17xf32>
    %262 = vector.shape_cast %261 : vector<17xf32> to vector<17x1xf32>
    %263 = vector.broadcast %262 : vector<17x1xf32> to vector<17x17xf32>
    %264 = arith.subf %260, %263 : vector<17x17xf32>
    %265 = math.exp %264 : vector<17x17xf32>
    %cst_109 = arith.constant dense<0.000000e+00> : vector<17xf32>
    %266 = vector.multi_reduction <add>, %265, %cst_109 [1] : vector<17x17xf32> to vector<17xf32>
    %267 = vector.shape_cast %266 : vector<17xf32> to vector<17x1xf32>
    %268 = vector.broadcast %267 : vector<17x1xf32> to vector<17x17xf32>
    %269 = arith.divf %265, %268 : vector<17x17xf32>
    %cst_110 = arith.constant dense<0.000000e+00> : vector<17x8xf32>
    %270 = tpu.matmul %269, %259, %cst_110 {dimension_numbers = #tpu.dot_dimension_numbers<[1], [0], [0], [1], [0, 0, 1, 1], [], []>} : vector<17x17xf32>, vector<17x8xf32>, vector<17x8xf32> -> vector<17x8xf32>
    %271 = vector.extract_strided_slice %242 {offsets = [0, 16], sizes = [17, 8], strides = [1, 1]} : vector<17x96xf32> to vector<17x8xf32>
    %272 = vector.extract_strided_slice %242 {offsets = [0, 48], sizes = [17, 8], strides = [1, 1]} : vector<17x96xf32> to vector<17x8xf32>
    %273 = vector.extract_strided_slice %242 {offsets = [0, 80], sizes = [17, 8], strides = [1, 1]} : vector<17x96xf32> to vector<17x8xf32>
    "tpu.trace_start"() <{level = 10 : i32, message = "nd,md->nm"}> : () -> ()
    %cst_111 = arith.constant dense<0.000000e+00> : vector<17x17xf32>
    %274 = tpu.matmul %271, %272, %cst_111 {dimension_numbers = #tpu.dot_dimension_numbers<[1], [1], [0], [0], [0, 0, 1, 0], [], []>} : vector<17x8xf32>, vector<17x8xf32>, vector<17x17xf32> -> vector<17x17xf32>
    "tpu.trace_stop"() : () -> ()
    %cst_112 = arith.constant dense<0xFF800000> : vector<17xf32>
    %275 = vector.multi_reduction <maximumf>, %274, %cst_112 [1] : vector<17x17xf32> to vector<17xf32>
    %276 = vector.shape_cast %275 : vector<17xf32> to vector<17x1xf32>
    %277 = vector.broadcast %276 : vector<17x1xf32> to vector<17x17xf32>
    %278 = arith.subf %274, %277 : vector<17x17xf32>
    %279 = math.exp %278 : vector<17x17xf32>
    %cst_113 = arith.constant dense<0.000000e+00> : vector<17xf32>
    %280 = vector.multi_reduction <add>, %279, %cst_113 [1] : vector<17x17xf32> to vector<17xf32>
    %281 = vector.shape_cast %280 : vector<17xf32> to vector<17x1xf32>
    %282 = vector.broadcast %281 : vector<17x1xf32> to vector<17x17xf32>
    %283 = arith.divf %279, %282 : vector<17x17xf32>
    %cst_114 = arith.constant dense<0.000000e+00> : vector<17x8xf32>
    %284 = tpu.matmul %283, %273, %cst_114 {dimension_numbers = #tpu.dot_dimension_numbers<[1], [0], [0], [1], [0, 0, 1, 1], [], []>} : vector<17x17xf32>, vector<17x8xf32>, vector<17x8xf32> -> vector<17x8xf32>
    %285 = vector.extract_strided_slice %242 {offsets = [0, 24], sizes = [17, 8], strides = [1, 1]} : vector<17x96xf32> to vector<17x8xf32>
    %286 = vector.extract_strided_slice %242 {offsets = [0, 56], sizes = [17, 8], strides = [1, 1]} : vector<17x96xf32> to vector<17x8xf32>
    %287 = vector.extract_strided_slice %242 {offsets = [0, 88], sizes = [17, 8], strides = [1, 1]} : vector<17x96xf32> to vector<17x8xf32>
    "tpu.trace_start"() <{level = 10 : i32, message = "nd,md->nm"}> : () -> ()
    %cst_115 = arith.constant dense<0.000000e+00> : vector<17x17xf32>
    %288 = tpu.matmul %285, %286, %cst_115 {dimension_numbers = #tpu.dot_dimension_numbers<[1], [1], [0], [0], [0, 0, 1, 0], [], []>} : vector<17x8xf32>, vector<17x8xf32>, vector<17x17xf32> -> vector<17x17xf32>
    "tpu.trace_stop"() : () -> ()
    %cst_116 = arith.constant dense<0xFF800000> : vector<17xf32>
    %289 = vector.multi_reduction <maximumf>, %288, %cst_116 [1] : vector<17x17xf32> to vector<17xf32>
    %290 = vector.shape_cast %289 : vector<17xf32> to vector<17x1xf32>
    %291 = vector.broadcast %290 : vector<17x1xf32> to vector<17x17xf32>
    %292 = arith.subf %288, %291 : vector<17x17xf32>
    %293 = math.exp %292 : vector<17x17xf32>
    %cst_117 = arith.constant dense<0.000000e+00> : vector<17xf32>
    %294 = vector.multi_reduction <add>, %293, %cst_117 [1] : vector<17x17xf32> to vector<17xf32>
    %295 = vector.shape_cast %294 : vector<17xf32> to vector<17x1xf32>
    %296 = vector.broadcast %295 : vector<17x1xf32> to vector<17x17xf32>
    %297 = arith.divf %293, %296 : vector<17x17xf32>
    %cst_118 = arith.constant dense<0.000000e+00> : vector<17x8xf32>
    %298 = tpu.matmul %297, %287, %cst_118 {dimension_numbers = #tpu.dot_dimension_numbers<[1], [0], [0], [1], [0, 0, 1, 1], [], []>} : vector<17x17xf32>, vector<17x8xf32>, vector<17x8xf32> -> vector<17x8xf32>
    %299 = tpu.concatenate %256, %270, %284, %298 in 1 : vector<17x8xf32>, vector<17x8xf32>, vector<17x8xf32>, vector<17x8xf32> -> vector<17x32xf32>
    %300 = vector.extract_strided_slice %241 {offsets = [17, 0], sizes = [17, 96], strides = [1, 1]} : vector<34x96xf32> to vector<17x96xf32>
    %301 = vector.extract_strided_slice %300 {offsets = [0, 0], sizes = [17, 8], strides = [1, 1]} : vector<17x96xf32> to vector<17x8xf32>
    %302 = vector.extract_strided_slice %300 {offsets = [0, 32], sizes = [17, 8], strides = [1, 1]} : vector<17x96xf32> to vector<17x8xf32>
    %303 = vector.extract_strided_slice %300 {offsets = [0, 64], sizes = [17, 8], strides = [1, 1]} : vector<17x96xf32> to vector<17x8xf32>
    "tpu.trace_start"() <{level = 10 : i32, message = "nd,md->nm"}> : () -> ()
    %cst_119 = arith.constant dense<0.000000e+00> : vector<17x17xf32>
    %304 = tpu.matmul %301, %302, %cst_119 {dimension_numbers = #tpu.dot_dimension_numbers<[1], [1], [0], [0], [0, 0, 1, 0], [], []>} : vector<17x8xf32>, vector<17x8xf32>, vector<17x17xf32> -> vector<17x17xf32>
    "tpu.trace_stop"() : () -> ()
    %cst_120 = arith.constant dense<0xFF800000> : vector<17xf32>
    %305 = vector.multi_reduction <maximumf>, %304, %cst_120 [1] : vector<17x17xf32> to vector<17xf32>
    %306 = vector.shape_cast %305 : vector<17xf32> to vector<17x1xf32>
    %307 = vector.broadcast %306 : vector<17x1xf32> to vector<17x17xf32>
    %308 = arith.subf %304, %307 : vector<17x17xf32>
    %309 = math.exp %308 : vector<17x17xf32>
    %cst_121 = arith.constant dense<0.000000e+00> : vector<17xf32>
    %310 = vector.multi_reduction <add>, %309, %cst_121 [1] : vector<17x17xf32> to vector<17xf32>
    %311 = vector.shape_cast %310 : vector<17xf32> to vector<17x1xf32>
    %312 = vector.broadcast %311 : vector<17x1xf32> to vector<17x17xf32>
    %313 = arith.divf %309, %312 : vector<17x17xf32>
    %cst_122 = arith.constant dense<0.000000e+00> : vector<17x8xf32>
    %314 = tpu.matmul %313, %303, %cst_122 {dimension_numbers = #tpu.dot_dimension_numbers<[1], [0], [0], [1], [0, 0, 1, 1], [], []>} : vector<17x17xf32>, vector<17x8xf32>, vector<17x8xf32> -> vector<17x8xf32>
    %315 = vector.extract_strided_slice %300 {offsets = [0, 8], sizes = [17, 8], strides = [1, 1]} : vector<17x96xf32> to vector<17x8xf32>
    %316 = vector.extract_strided_slice %300 {offsets = [0, 40], sizes = [17, 8], strides = [1, 1]} : vector<17x96xf32> to vector<17x8xf32>
    %317 = vector.extract_strided_slice %300 {offsets = [0, 72], sizes = [17, 8], strides = [1, 1]} : vector<17x96xf32> to vector<17x8xf32>
    "tpu.trace_start"() <{level = 10 : i32, message = "nd,md->nm"}> : () -> ()
    %cst_123 = arith.constant dense<0.000000e+00> : vector<17x17xf32>
    %318 = tpu.matmul %315, %316, %cst_123 {dimension_numbers = #tpu.dot_dimension_numbers<[1], [1], [0], [0], [0, 0, 1, 0], [], []>} : vector<17x8xf32>, vector<17x8xf32>, vector<17x17xf32> -> vector<17x17xf32>
    "tpu.trace_stop"() : () -> ()
    %cst_124 = arith.constant dense<0xFF800000> : vector<17xf32>
    %319 = vector.multi_reduction <maximumf>, %318, %cst_124 [1] : vector<17x17xf32> to vector<17xf32>
    %320 = vector.shape_cast %319 : vector<17xf32> to vector<17x1xf32>
    %321 = vector.broadcast %320 : vector<17x1xf32> to vector<17x17xf32>
    %322 = arith.subf %318, %321 : vector<17x17xf32>
    %323 = math.exp %322 : vector<17x17xf32>
    %cst_125 = arith.constant dense<0.000000e+00> : vector<17xf32>
    %324 = vector.multi_reduction <add>, %323, %cst_125 [1] : vector<17x17xf32> to vector<17xf32>
    %325 = vector.shape_cast %324 : vector<17xf32> to vector<17x1xf32>
    %326 = vector.broadcast %325 : vector<17x1xf32> to vector<17x17xf32>
    %327 = arith.divf %323, %326 : vector<17x17xf32>
    %cst_126 = arith.constant dense<0.000000e+00> : vector<17x8xf32>
    %328 = tpu.matmul %327, %317, %cst_126 {dimension_numbers = #tpu.dot_dimension_numbers<[1], [0], [0], [1], [0, 0, 1, 1], [], []>} : vector<17x17xf32>, vector<17x8xf32>, vector<17x8xf32> -> vector<17x8xf32>
    %329 = vector.extract_strided_slice %300 {offsets = [0, 16], sizes = [17, 8], strides = [1, 1]} : vector<17x96xf32> to vector<17x8xf32>
    %330 = vector.extract_strided_slice %300 {offsets = [0, 48], sizes = [17, 8], strides = [1, 1]} : vector<17x96xf32> to vector<17x8xf32>
    %331 = vector.extract_strided_slice %300 {offsets = [0, 80], sizes = [17, 8], strides = [1, 1]} : vector<17x96xf32> to vector<17x8xf32>
    "tpu.trace_start"() <{level = 10 : i32, message = "nd,md->nm"}> : () -> ()
    %cst_127 = arith.constant dense<0.000000e+00> : vector<17x17xf32>
    %332 = tpu.matmul %329, %330, %cst_127 {dimension_numbers = #tpu.dot_dimension_numbers<[1], [1], [0], [0], [0, 0, 1, 0], [], []>} : vector<17x8xf32>, vector<17x8xf32>, vector<17x17xf32> -> vector<17x17xf32>
    "tpu.trace_stop"() : () -> ()
    %cst_128 = arith.constant dense<0xFF800000> : vector<17xf32>
    %333 = vector.multi_reduction <maximumf>, %332, %cst_128 [1] : vector<17x17xf32> to vector<17xf32>
    %334 = vector.shape_cast %333 : vector<17xf32> to vector<17x1xf32>
    %335 = vector.broadcast %334 : vector<17x1xf32> to vector<17x17xf32>
    %336 = arith.subf %332, %335 : vector<17x17xf32>
    %337 = math.exp %336 : vector<17x17xf32>
    %cst_129 = arith.constant dense<0.000000e+00> : vector<17xf32>
    %338 = vector.multi_reduction <add>, %337, %cst_129 [1] : vector<17x17xf32> to vector<17xf32>
    %339 = vector.shape_cast %338 : vector<17xf32> to vector<17x1xf32>
    %340 = vector.broadcast %339 : vector<17x1xf32> to vector<17x17xf32>
    %341 = arith.divf %337, %340 : vector<17x17xf32>
    %cst_130 = arith.constant dense<0.000000e+00> : vector<17x8xf32>
    %342 = tpu.matmul %341, %331, %cst_130 {dimension_numbers = #tpu.dot_dimension_numbers<[1], [0], [0], [1], [0, 0, 1, 1], [], []>} : vector<17x17xf32>, vector<17x8xf32>, vector<17x8xf32> -> vector<17x8xf32>
    %343 = vector.extract_strided_slice %300 {offsets = [0, 24], sizes = [17, 8], strides = [1, 1]} : vector<17x96xf32> to vector<17x8xf32>
    %344 = vector.extract_strided_slice %300 {offsets = [0, 56], sizes = [17, 8], strides = [1, 1]} : vector<17x96xf32> to vector<17x8xf32>
    %345 = vector.extract_strided_slice %300 {offsets = [0, 88], sizes = [17, 8], strides = [1, 1]} : vector<17x96xf32> to vector<17x8xf32>
    "tpu.trace_start"() <{level = 10 : i32, message = "nd,md->nm"}> : () -> ()
    %cst_131 = arith.constant dense<0.000000e+00> : vector<17x17xf32>
    %346 = tpu.matmul %343, %344, %cst_131 {dimension_numbers = #tpu.dot_dimension_numbers<[1], [1], [0], [0], [0, 0, 1, 0], [], []>} : vector<17x8xf32>, vector<17x8xf32>, vector<17x17xf32> -> vector<17x17xf32>
    "tpu.trace_stop"() : () -> ()
    %cst_132 = arith.constant dense<0xFF800000> : vector<17xf32>
    %347 = vector.multi_reduction <maximumf>, %346, %cst_132 [1] : vector<17x17xf32> to vector<17xf32>
    %348 = vector.shape_cast %347 : vector<17xf32> to vector<17x1xf32>
    %349 = vector.broadcast %348 : vector<17x1xf32> to vector<17x17xf32>
    %350 = arith.subf %346, %349 : vector<17x17xf32>
    %351 = math.exp %350 : vector<17x17xf32>
    %cst_133 = arith.constant dense<0.000000e+00> : vector<17xf32>
    %352 = vector.multi_reduction <add>, %351, %cst_133 [1] : vector<17x17xf32> to vector<17xf32>
    %353 = vector.shape_cast %352 : vector<17xf32> to vector<17x1xf32>
    %354 = vector.broadcast %353 : vector<17x1xf32> to vector<17x17xf32>
    %355 = arith.divf %351, %354 : vector<17x17xf32>
    %cst_134 = arith.constant dense<0.000000e+00> : vector<17x8xf32>
    %356 = tpu.matmul %355, %345, %cst_134 {dimension_numbers = #tpu.dot_dimension_numbers<[1], [0], [0], [1], [0, 0, 1, 1], [], []>} : vector<17x17xf32>, vector<17x8xf32>, vector<17x8xf32> -> vector<17x8xf32>
    %357 = tpu.concatenate %314, %328, %342, %356 in 1 : vector<17x8xf32>, vector<17x8xf32>, vector<17x8xf32>, vector<17x8xf32> -> vector<17x32xf32>
    %358 = tpu.concatenate %299, %357 in 0 : vector<17x32xf32>, vector<17x32xf32> -> vector<34x32xf32>
    %c1_135 = arith.constant 1 : index
    %c0_136 = arith.constant 0 : index
    %c0_137 = arith.constant 0 : index
    %359 = vector.load %arg6[%c1_135, %c0_136, %c0_137] : memref<2x32x32xf32, #tpu.memory_space<vmem>>, vector<1x32x32xf32>
    %360 = vector.shape_cast %359 : vector<1x32x32xf32> to vector<32x32xf32>
    %cst_138 = arith.constant dense<0.000000e+00> : vector<34x32xf32>
    %361 = tpu.matmul %358, %360, %cst_138 {dimension_numbers = #tpu.dot_dimension_numbers<[1], [0], [0], [1], [0, 0, 1, 1], [], []>} : vector<34x32xf32>, vector<32x32xf32>, vector<34x32xf32> -> vector<34x32xf32>
    %362 = arith.addf %212, %361 : vector<34x32xf32>
    %c1_139 = arith.constant 1 : index
    %c0_140 = arith.constant 0 : index
    %c0_141 = arith.constant 0 : index
    %363 = vector.load %arg7[%c1_139, %c0_140, %c0_141] : memref<2x1x32xf32, #tpu.memory_space<vmem>>, vector<1x1x32xf32>
    %364 = vector.shape_cast %363 : vector<1x1x32xf32> to vector<1x32xf32>
    %365 = vector.broadcast %364 : vector<1x32xf32> to vector<34x32xf32>
    %366 = arith.addf %362, %365 : vector<34x32xf32>
    %c1_142 = arith.constant 1 : index
    %c0_143 = arith.constant 0 : index
    %c0_144 = arith.constant 0 : index
    %367 = vector.load %arg8[%c1_142, %c0_143, %c0_144] : memref<2x1x32xf32, #tpu.memory_space<vmem>>, vector<1x1x32xf32>
    %368 = vector.shape_cast %367 : vector<1x1x32xf32> to vector<1x32xf32>
    %c1_145 = arith.constant 1 : index
    %c0_146 = arith.constant 0 : index
    %c0_147 = arith.constant 0 : index
    %369 = vector.load %arg9[%c1_145, %c0_146, %c0_147] : memref<2x1x32xf32, #tpu.memory_space<vmem>>, vector<1x1x32xf32>
    %370 = vector.shape_cast %369 : vector<1x1x32xf32> to vector<1x32xf32>
    %cst_148 = arith.constant dense<0.000000e+00> : vector<34xf32>
    %371 = vector.multi_reduction <add>, %366, %cst_148 [1] : vector<34x32xf32> to vector<34xf32>
    %372 = vector.shape_cast %371 : vector<34xf32> to vector<34x1xf32>
    %cst_149 = arith.constant 3.200000e+01 : f32
    %373 = vector.broadcast %cst_149 : f32 to vector<34x1xf32>
    %374 = arith.divf %372, %373 : vector<34x1xf32>
    %375 = vector.broadcast %374 : vector<34x1xf32> to vector<34x32xf32>
    %376 = arith.subf %366, %375 : vector<34x32xf32>
    %377 = arith.mulf %376, %376 : vector<34x32xf32>
    %cst_150 = arith.constant dense<0.000000e+00> : vector<34xf32>
    %378 = vector.multi_reduction <add>, %377, %cst_150 [1] : vector<34x32xf32> to vector<34xf32>
    %379 = vector.shape_cast %378 : vector<34xf32> to vector<34x1xf32>
    %cst_151 = arith.constant 3.200000e+01 : f32
    %380 = vector.broadcast %cst_151 : f32 to vector<34x1xf32>
    %381 = arith.divf %379, %380 : vector<34x1xf32>
    %382 = vector.broadcast %374 : vector<34x1xf32> to vector<34x32xf32>
    %383 = arith.subf %366, %382 : vector<34x32xf32>
    %cst_152 = arith.constant 9.99999974E-6 : f32
    %384 = vector.broadcast %cst_152 : f32 to vector<34x1xf32>
    %385 = arith.addf %381, %384 : vector<34x1xf32>
    %386 = math.rsqrt %385 : vector<34x1xf32>
    %387 = vector.broadcast %386 : vector<34x1xf32> to vector<34x32xf32>
    %388 = arith.mulf %383, %387 : vector<34x32xf32>
    %389 = vector.broadcast %368 : vector<1x32xf32> to vector<34x32xf32>
    %390 = arith.mulf %388, %389 : vector<34x32xf32>
    %391 = vector.broadcast %370 : vector<1x32xf32> to vector<34x32xf32>
    %392 = arith.addf %390, %391 : vector<34x32xf32>
    %c1_153 = arith.constant 1 : index
    %c0_154 = arith.constant 0 : index
    %c0_155 = arith.constant 0 : index
    %393 = vector.load %arg10[%c1_153, %c0_154, %c0_155] : memref<2x32x64xf32, #tpu.memory_space<vmem>>, vector<1x32x64xf32>
    %394 = vector.shape_cast %393 : vector<1x32x64xf32> to vector<32x64xf32>
    %cst_156 = arith.constant dense<0.000000e+00> : vector<34x64xf32>
    %395 = tpu.matmul %392, %394, %cst_156 {dimension_numbers = #tpu.dot_dimension_numbers<[1], [0], [0], [1], [0, 0, 1, 1], [], []>} : vector<34x32xf32>, vector<32x64xf32>, vector<34x64xf32> -> vector<34x64xf32>
    %c1_157 = arith.constant 1 : index
    %c0_158 = arith.constant 0 : index
    %c0_159 = arith.constant 0 : index
    %396 = vector.load %arg11[%c1_157, %c0_158, %c0_159] : memref<2x1x64xf32, #tpu.memory_space<vmem>>, vector<1x1x64xf32>
    %397 = vector.shape_cast %396 : vector<1x1x64xf32> to vector<1x64xf32>
    %398 = vector.broadcast %397 : vector<1x64xf32> to vector<34x64xf32>
    %399 = arith.addf %395, %398 : vector<34x64xf32>
    %cst_160 = arith.constant 5.000000e-01 : f32
    %400 = vector.broadcast %cst_160 : f32 to vector<34x64xf32>
    %401 = arith.mulf %400, %399 : vector<34x64xf32>
    %cst_161 = arith.constant 0.707106769 : f32
    %402 = vector.broadcast %cst_161 : f32 to vector<34x64xf32>
    %403 = arith.mulf %399, %402 : vector<34x64xf32>
    %404 = math.erf %403 : vector<34x64xf32>
    %cst_162 = arith.constant 1.000000e+00 : f32
    %405 = vector.broadcast %cst_162 : f32 to vector<34x64xf32>
    %406 = arith.addf %405, %404 : vector<34x64xf32>
    %407 = arith.mulf %401, %406 : vector<34x64xf32>
    %c1_163 = arith.constant 1 : index
    %c0_164 = arith.constant 0 : index
    %c0_165 = arith.constant 0 : index
    %408 = vector.load %arg12[%c1_163, %c0_164, %c0_165] : memref<2x64x32xf32, #tpu.memory_space<vmem>>, vector<1x64x32xf32>
    %409 = vector.shape_cast %408 : vector<1x64x32xf32> to vector<64x32xf32>
    %cst_166 = arith.constant dense<0.000000e+00> : vector<34x32xf32>
    %410 = tpu.matmul %407, %409, %cst_166 {dimension_numbers = #tpu.dot_dimension_numbers<[1], [0], [0], [1], [0, 0, 1, 1], [], []>} : vector<34x64xf32>, vector<64x32xf32>, vector<34x32xf32> -> vector<34x32xf32>
    %411 = arith.addf %366, %410 : vector<34x32xf32>
    %c1_167 = arith.constant 1 : index
    %c0_168 = arith.constant 0 : index
    %c0_169 = arith.constant 0 : index
    %412 = vector.load %arg13[%c1_167, %c0_168, %c0_169] : memref<2x1x32xf32, #tpu.memory_space<vmem>>, vector<1x1x32xf32>
    %413 = vector.shape_cast %412 : vector<1x1x32xf32> to vector<1x32xf32>
    %414 = vector.broadcast %413 : vector<1x32xf32> to vector<34x32xf32>
    %415 = arith.addf %411, %414 : vector<34x32xf32>
    %416 = vector.extract_strided_slice %415 {offsets = [0, 0], sizes = [1, 32], strides = [1, 1]} : vector<34x32xf32> to vector<1x32xf32>
    %417 = vector.extract_strided_slice %415 {offsets = [17, 0], sizes = [1, 32], strides = [1, 1]} : vector<34x32xf32> to vector<1x32xf32>
    %418 = tpu.concatenate %416, %417 in 0 : vector<1x32xf32>, vector<1x32xf32> -> vector<2x32xf32>
    %c0_170 = arith.constant 0 : index
    %c0_171 = arith.constant 0 : index
    %419 = vector.load %arg14[%c0_170, %c0_171] : memref<1x32xf32, #tpu.memory_space<vmem>>, vector<1x32xf32>
    %c0_172 = arith.constant 0 : index
    %c0_173 = arith.constant 0 : index
    %420 = vector.load %arg15[%c0_172, %c0_173] : memref<1x32xf32, #tpu.memory_space<vmem>>, vector<1x32xf32>
    %cst_174 = arith.constant dense<0.000000e+00> : vector<2xf32>
    %421 = vector.multi_reduction <add>, %418, %cst_174 [1] : vector<2x32xf32> to vector<2xf32>
    %422 = vector.shape_cast %421 : vector<2xf32> to vector<2x1xf32>
    %cst_175 = arith.constant 3.200000e+01 : f32
    %423 = vector.broadcast %cst_175 : f32 to vector<2x1xf32>
    %424 = arith.divf %422, %423 : vector<2x1xf32>
    %425 = vector.broadcast %424 : vector<2x1xf32> to vector<2x32xf32>
    %426 = arith.subf %418, %425 : vector<2x32xf32>
    %427 = arith.mulf %426, %426 : vector<2x32xf32>
    %cst_176 = arith.constant dense<0.000000e+00> : vector<2xf32>
    %428 = vector.multi_reduction <add>, %427, %cst_176 [1] : vector<2x32xf32> to vector<2xf32>
    %429 = vector.shape_cast %428 : vector<2xf32> to vector<2x1xf32>
    %cst_177 = arith.constant 3.200000e+01 : f32
    %430 = vector.broadcast %cst_177 : f32 to vector<2x1xf32>
    %431 = arith.divf %429, %430 : vector<2x1xf32>
    %432 = vector.broadcast %424 : vector<2x1xf32> to vector<2x32xf32>
    %433 = arith.subf %418, %432 : vector<2x32xf32>
    %cst_178 = arith.constant 9.99999974E-6 : f32
    %434 = vector.broadcast %cst_178 : f32 to vector<2x1xf32>
    %435 = arith.addf %431, %434 : vector<2x1xf32>
    %436 = math.rsqrt %435 : vector<2x1xf32>
    %437 = vector.broadcast %436 : vector<2x1xf32> to vector<2x32xf32>
    %438 = arith.mulf %433, %437 : vector<2x32xf32>
    %439 = vector.broadcast %419 : vector<1x32xf32> to vector<2x32xf32>
    %440 = arith.mulf %438, %439 : vector<2x32xf32>
    %441 = vector.broadcast %420 : vector<1x32xf32> to vector<2x32xf32>
    %442 = arith.addf %440, %441 : vector<2x32xf32>
    %c0_179 = arith.constant 0 : index
    %c0_180 = arith.constant 0 : index
    %443 = vector.load %arg16[%c0_179, %c0_180] : memref<32x10xf32, #tpu.memory_space<vmem>>, vector<32x10xf32>
    %cst_181 = arith.constant dense<0.000000e+00> : vector<2x10xf32>
    %444 = tpu.matmul %442, %443, %cst_181 {dimension_numbers = #tpu.dot_dimension_numbers<[1], [0], [0], [1], [0, 0, 1, 1], [], []>} : vector<2x32xf32>, vector<32x10xf32>, vector<2x10xf32> -> vector<2x10xf32>
    %c0_182 = arith.constant 0 : index
    %c0_183 = arith.constant 0 : index
    %445 = vector.load %arg17[%c0_182, %c0_183] : memref<1x10xf32, #tpu.memory_space<vmem>>, vector<1x10xf32>
    %446 = vector.broadcast %445 : vector<1x10xf32> to vector<2x10xf32>
    %447 = arith.addf %444, %446 : vector<2x10xf32>
    %c0_184 = arith.constant 0 : index
    %c0_185 = arith.constant 0 : index
    %448 = vector.load %arg18[%c0_184, %c0_185] : memref<2x10xf32, #tpu.memory_space<vmem>>, vector<2x10xf32>
    tpu.vector_store %arg18[%c0_184, %c0_185], %447 {strides = array<i32>} : memref<2x10xf32, #tpu.memory_space<vmem>>, vector<2x10xf32>,
    return
  }
}

</mosaic_0001>

<llo_original>
// kernel: vit_forward.1
$region0: #{vit_forward.1}
  #allocation0 [shape = 'u32[]', space=smem, size = 0x4, offset = 0x4, fixed_abs, tag = 'smem constant byte address 0x4 - core index']
  #allocation1 [shape = 'u32[144,128]{1,0:T(1,128)}', space=vmem, size = 0x12000, scoped, tag = 'internal scratch']
  %s0 = inlined_call_operand.vmem [shape: f32[32,48], index: 0, kind: input, shape index: {}]
  %s1 = inlined_call_operand.vmem [shape: f32[48,32], index: 1, kind: input, shape index: {}]
  %s2 = inlined_call_operand.vmem [shape: f32[17,32], index: 2, kind: input, shape index: {}]
  %s3 = inlined_call_operand.vmem [shape: f32[2,1,32], index: 3, kind: input, shape index: {}]
  %s4 = inlined_call_operand.vmem [shape: f32[2,1,32], index: 4, kind: input, shape index: {}]
  %s5 = inlined_call_operand.vmem [shape: f32[2,32,96], index: 5, kind: input, shape index: {}]
  %s6 = inlined_call_operand.vmem [shape: f32[2,32,32], index: 6, kind: input, shape index: {}]
  %s7 = inlined_call_operand.vmem [shape: f32[2,1,32], index: 7, kind: input, shape index: {}]
  %s8 = inlined_call_operand.vmem [shape: f32[2,1,32], index: 8, kind: input, shape index: {}]
  %s9 = inlined_call_operand.vmem [shape: f32[2,1,32], index: 9, kind: input, shape index: {}]
  %s10 = inlined_call_operand.vmem [shape: f32[2,32,64], index: 10, kind: input, shape index: {}]
  %s11 = inlined_call_operand.vmem [shape: f32[2,1,64], index: 11, kind: input, shape index: {}]
  %s12 = inlined_call_operand.vmem [shape: f32[2,64,32], index: 12, kind: input, shape index: {}]
  %s13 = inlined_call_operand.vmem [shape: f32[2,1,32], index: 13, kind: input, shape index: {}]
  %s14 = inlined_call_operand.vmem [shape: f32[1,32], index: 14, kind: input, shape index: {}]
  %s15 = inlined_call_operand.vmem [shape: f32[1,32], index: 15, kind: input, shape index: {}]
  %s16 = inlined_call_operand.vmem [shape: f32[32,10], index: 16, kind: input, shape index: {}]
  %s17 = inlined_call_operand.vmem [shape: f32[1,10], index: 17, kind: input, shape index: {}]
  %s18 = inlined_call_operand.hbm [shape: f32[2,10], index: 18, kind: output, shape index: {}]
  %s19 = sld [smem:[#allocation0]]
  $region82: #{vit_forward.1} parent=0
    _
  %s21 = ssub.s32 1, %s19
  %s22 = scalar_select 0, %s21, %s19
  $region1: #{vit_forward.1} parent=0
    #allocation2 [shape = 'u8[1024]{0}', space=vmem, size = 0x400, scoped, tag = 'output window, operand 0, single buffered']
    #allocation3 [shape = 's32[1]{0}', space=sflag, size = 0x4, scoped, tag = 'scoped memory for vit_forward.1']
    %23 = vsyncpa [#allocation3], 0
    // Predicated region
    $region2: #{vit_forward.1} parent=1 // pred_check
      _
    $region3: #{vit_forward.1} parent=1 // pred_check_branch
      %25 = sbr.rel (0) target = $region5
    $region4: #{vit_forward.1} parent=1 // pred_region
      _
    $region5: #{vit_forward.1} parent=1 // pred_fallthru
      _
    // Predicated region
    $region6: #{vit_forward.1} parent=1 // pred_check
      _
    $region7: #{vit_forward.1} parent=1 // pred_check_branch
      %27 = sbr.rel (0) target = $region9
    $region8: #{vit_forward.1} parent=1 // pred_region
      _
    $region9: #{vit_forward.1} parent=1 // pred_fallthru
      _
    // Predicated region
    $region10: #{vit_forward.1} parent=1 // pred_check
      _
    $region11: #{vit_forward.1} parent=1 // pred_check_branch
      %29 = sbr.rel (0) target = $region13
    $region12: #{vit_forward.1} parent=1 // pred_region
      _
    $region13: #{vit_forward.1} parent=1 // pred_fallthru
      _
    // Predicated region
    $region14: #{vit_forward.1} parent=1 // pred_check
      _
    $region15: #{vit_forward.1} parent=1 // pred_check_branch
      %31 = sbr.rel (0) target = $region17
    $region16: #{vit_forward.1} parent=1 // pred_region
      _
    $region17: #{vit_forward.1} parent=1 // pred_fallthru
      _
    // Predicated region
    $region18: #{vit_forward.1} parent=1 // pred_check
      _
    $region19: #{vit_forward.1} parent=1 // pred_check_branch
      %33 = sbr.rel (0) target = $region21
    $region20: #{vit_forward.1} parent=1 // pred_region
      _
    $region21: #{vit_forward.1} parent=1 // pred_fallthru
      _
    // Predicated region
    $region22: #{vit_forward.1} parent=1 // pred_check
      _
    $region23: #{vit_forward.1} parent=1 // pred_check_branch
      %35 = sbr.rel (0) target = $region25
    $region24: #{vit_forward.1} parent=1 // pred_region
      _
    $region25: #{vit_forward.1} parent=1 // pred_fallthru
      _
    // Predicated region
    $region26: #{vit_forward.1} parent=1 // pred_check
      _
    $region27: #{vit_forward.1} parent=1 // pred_check_branch
      %37 = sbr.rel (0) target = $region29
    $region28: #{vit_forward.1} parent=1 // pred_region
      _
    $region29: #{vit_forward.1} parent=1 // pred_fallthru
      _
    // Predicated region
    $region30: #{vit_forward.1} parent=1 // pred_check
      _
    $region31: #{vit_forward.1} parent=1 // pred_check_branch
      %39 = sbr.rel (0) target = $region33
    $region32: #{vit_forward.1} parent=1 // pred_region
      _
    $region33: #{vit_forward.1} parent=1 // pred_fallthru
      _
    // Predicated region
    $region34: #{vit_forward.1} parent=1 // pred_check
      _
    $region35: #{vit_forward.1} parent=1 // pred_check_branch
      %41 = sbr.rel (0) target = $region37
    $region36: #{vit_forward.1} parent=1 // pred_region
      _
    $region37: #{vit_forward.1} parent=1 // pred_fallthru
      _
    // Predicated region
    $region38: #{vit_forward.1} parent=1 // pred_check
      _
    $region39: #{vit_forward.1} parent=1 // pred_check_branch
      %43 = sbr.rel (0) target = $region41
    $region40: #{vit_forward.1} parent=1 // pred_region
      _
    $region41: #{vit_forward.1} parent=1 // pred_fallthru
      _
    // Predicated region
    $region42: #{vit_forward.1} parent=1 // pred_check
      _
    $region43: #{vit_forward.1} parent=1 // pred_check_branch
      %45 = sbr.rel (0) target = $region45
    $region44: #{vit_forward.1} parent=1 // pred_region
      _
    $region45: #{vit_forward.1} parent=1 // pred_fallthru
      _
    // Predicated region
    $region46: #{vit_forward.1} parent=1 // pred_check
      _
    $region47: #{vit_forward.1} parent=1 // pred_check_branch
      %47 = sbr.rel (0) target = $region49
    $region48: #{vit_forward.1} parent=1 // pred_region
      _
    $region49: #{vit_forward.1} parent=1 // pred_fallthru
      _
    // Predicated region
    $region50: #{vit_forward.1} parent=1 // pred_check
      _
    $region51: #{vit_forward.1} parent=1 // pred_check_branch
      %49 = sbr.rel (0) target = $region53
    $region52: #{vit_forward.1} parent=1 // pred_region
      _
    $region53: #{vit_forward.1} parent=1 // pred_fallthru
      _
    // Predicated region
    $region54: #{vit_forward.1} parent=1 // pred_check
      _
    $region55: #{vit_forward.1} parent=1 // pred_check_branch
      %51 = sbr.rel (0) target = $region57
    $region56: #{vit_forward.1} parent=1 // pred_region
      _
    $region57: #{vit_forward.1} parent=1 // pred_fallthru
      _
    // Predicated region
    $region58: #{vit_forward.1} parent=1 // pred_check
      _
    $region59: #{vit_forward.1} parent=1 // pred_check_branch
      %53 = sbr.rel (0) target = $region61
    $region60: #{vit_forward.1} parent=1 // pred_region
      _
    $region61: #{vit_forward.1} parent=1 // pred_fallthru
      _
    // Predicated region
    $region62: #{vit_forward.1} parent=1 // pred_check
      _
    $region63: #{vit_forward.1} parent=1 // pred_check_branch
      %55 = sbr.rel (0) target = $region65
    $region64: #{vit_forward.1} parent=1 // pred_region
      _
    $region65: #{vit_forward.1} parent=1 // pred_fallthru
      _
    // Predicated region
    $region66: #{vit_forward.1} parent=1 // pred_check
      _
    $region67: #{vit_forward.1} parent=1 // pred_check_branch
      %57 = sbr.rel (0) target = $region69
    $region68: #{vit_forward.1} parent=1 // pred_region
      _
    $region69: #{vit_forward.1} parent=1 // pred_fallthru
      _
    // Predicated region
    $region70: #{vit_forward.1} parent=1 // pred_check
      _
    $region71: #{vit_forward.1} parent=1 // pred_check_branch
      %59 = sbr.rel (0) target = $region73
    $region72: #{vit_forward.1} parent=1 // pred_region
      _
    $region73: #{vit_forward.1} parent=1 // pred_fallthru
      _
    %v60 = vld [vmem:[%s0] sm:$0xff]
    %v61 = vld [vmem:[%s0 + $0x8] sm:$0xff]
    %v62 = vld [vmem:[%s0 + $0x10] sm:$0xff]
    %v63 = vld [vmem:[%s0 + $0x18] sm:$0xff]
    %v64 = vld [vmem:[%s1] sm:$0xff]
    %v65 = vld [vmem:[%s1 + $0x8] sm:$0xff]
    %v66 = vld [vmem:[%s1 + $0x10] sm:$0xff]
    %v67 = vld [vmem:[%s1 + $0x18] sm:$0xff]
    %v68 = vld [vmem:[%s1 + $0x20] sm:$0xff]
    %v69 = vld [vmem:[%s1 + $0x28] sm:$0xff]
    %vm70 = vcmask 392192
    %v72 = vsel %vm70, %v60, 0
    %v75 = vsel %vm70, %v61, 0
    %v78 = vsel %vm70, %v62, 0
    %v81 = vsel %vm70, %v63, 0
    %83 = vmatprep.subr.mxu0 0.0
    %84 = vmatpush1.msra.mxu0 0.0
    %85 = vmatprep.subr.mxu0 0.0
    %86 = vmatpush1.msra.mxu0 0.0
    %87 = vmatprep.subr.mxu0 0.0
    %88 = vmatpush1.msra.mxu0 0.0
    %89 = vmatprep.subr.mxu0 0.0
    %90 = vmatpush1.msra.mxu0 0.0
    %91 = vmatprep.subr.mxu0 0.0
    %92 = vmatpush1.msra.mxu0 0.0
    %93 = vmatprep.subr.mxu0 0.0
    %94 = vmatpush1.msra.mxu0 0.0
    %95 = vmatprep.subr.mxu0 0.0
    %96 = vmatpush1.msra.mxu0 0.0
    %97 = vmatprep.subr.mxu0 0.0
    %98 = vmatpush1.msra.mxu0 0.0
    %99 = vmatprep.subr.mxu0 0.0
    %100 = vmatpush1.msra.mxu0 0.0
    %101 = vmatprep.subr.mxu0 0.0
    %102 = vmatpush1.msra.mxu0 0.0
    %103 = vmatprep.subr.mxu0 0.0
    %104 = vmatpush1.msra.mxu0 %v69
    %105 = vmatprep.subr.mxu0 0.0
    %106 = vmatpush1.msra.mxu0 %v68
    %107 = vmatprep.subr.mxu0 0.0
    %108 = vmatpush1.msra.mxu0 %v67
    %109 = vmatprep.subr.mxu0 0.0
    %110 = vmatpush1.msra.mxu0 %v66
    %111 = vmatprep.subr.mxu0 0.0
    %112 = vmatpush1.msra.mxu0 %v65
    %113 = vmatprep.subr.mxu0 0.0
    %114 = vmatpush1.msra.mxu0 %v64
    %115 = vmatprep.subr.mxu0 0.0
    %116 = vmatpush2.msra.mxu0 0.0
    %117 = vmatprep.subr.mxu0 0.0
    %118 = vmatpush2.msra.mxu0 0.0
    %119 = vmatprep.subr.mxu0 0.0
    %120 = vmatpush2.msra.mxu0 0.0
    %121 = vmatprep.subr.mxu0 0.0
    %122 = vmatpush2.msra.mxu0 0.0
    %123 = vmatprep.subr.mxu0 0.0
    %124 = vmatpush2.msra.mxu0 0.0
    %125 = vmatprep.subr.mxu0 0.0
    %126 = vmatpush2.msra.mxu0 0.0
    %127 = vmatprep.subr.mxu0 0.0
    %128 = vmatpush2.msra.mxu0 0.0
    %129 = vmatprep.subr.mxu0 0.0
    %130 = vmatpush2.msra.mxu0 0.0
    %131 = vmatprep.subr.mxu0 0.0
    %132 = vmatpush2.msra.mxu0 0.0
    %133 = vmatprep.subr.mxu0 0.0
    %134 = vmatpush2.msra.mxu0 0.0
    %135 = vmatprep.subr.mxu0 0.0
    %136 = vmatpush2.msra.mxu0 0.0
    %137 = vmatprep.subr.mxu0 0.0
    %138 = vmatpush2.msra.mxu0 0.0
    %139 = vmatprep.subr.mxu0 0.0
    %140 = vmatpush2.msra.mxu0 0.0
    %141 = vmatprep.subr.mxu0 0.0
    %142 = vmatpush2.msra.mxu0 0.0
    %143 = vmatprep.subr.mxu0 0.0
    %144 = vmatpush2.msra.mxu0 0.0
    %145 = vmatprep.subr.mxu0 0.0
    %146 = vmatpush2.msra.mxu0 0.0
    %147 = vmatprep.mubr.f32.mxu0 0.0
    %148 = vmatmul.mubr.f32.gmra.mxu0 %v72
    %v149 = vpop.f32.mrf.mxu0
    %v150 = vadd.f32 0.0, %v149
    %v151 = vpop.f32.mrf.mxu0
    %152 = vmatprep.mubr.f32.mxu0 0.0
    %153 = vmatmul.mubr.f32.gmra.mxu0 %v75
    %v154 = vpop.f32.mrf.mxu0
    %v155 = vadd.f32 0.0, %v154
    %v156 = vpop.f32.mrf.mxu0
    %157 = vmatprep.mubr.f32.mxu0 0.0
    %158 = vmatmul.mubr.f32.gmra.mxu0 %v78
    %v159 = vpop.f32.mrf.mxu0
    %v160 = vadd.f32 0.0, %v159
    %v161 = vpop.f32.mrf.mxu0
    %162 = vmatprep.mubr.f32.mxu0 0.0
    %163 = vmatmul.mubr.f32.gmra.mxu0 %v81
    %v164 = vpop.f32.mrf.mxu0
    %v165 = vadd.f32 0.0, %v164
    %v166 = vpop.f32.mrf.mxu0
    %167 = vdwg.mxu0
    %v168 = vld [vmem:[%s2] sm:$0x1]
    %v169 = vld [vmem:[%s2 + $0x1] sm:$0xff]
    %v170 = vld [vmem:[%s2 + $0x9] sm:$0xff]
    %v171 = vadd.f32 %v150, %v169
    %v172 = vadd.f32 %v155, %v170
    %v173 = vadd.f32 %v160, %v169
    %v174 = vadd.f32 %v165, %v170
    %vm177 = vcmask 1040384
    %v178 = vrot.slane %v171, 7
    %v179 = vrot.slane %v172, 7
    %v180 = vsel %vm177, %v178, %v179
    %v185 = vrot.slane %v168, 7
    %vm189 = vcmask 1041408
    %v190 = vrot.slane %v173, 6
    %v191 = vrot.slane %v174, 6
    %v192 = vsel %vm189, %v190, %v191
    %v196 = vsel %vm177, %v168, %v178
    %v197 = vsel %vm177, %v179, %v185
    %v198 = vsel %vm189, %v197, %v190
    %v199 = vld [vmem:[%s3] sm:$0x1]
    %v200 = vld [vmem:[%s4] sm:$0x1]
    %vm201 = vcmask 261120
    %v202 = vsel %vm201, %v196, 0.0
    %203 = vadd.xlane.f32.xlu0 %v202
    %v204 = vpop.xlane.xlu0 %203
    %v205 = vsel %vm201, %v180, 0.0
    %206 = vadd.xlane.f32.xlu0 %v205
    %v207 = vpop.xlane.xlu0 %206
    %v208 = vsel %vm201, %v198, 0.0
    %209 = vadd.xlane.f32.xlu0 %v208
    %v210 = vpop.xlane.xlu0 %209
    %v211 = vsel %vm201, %v192, 0.0
    %212 = vadd.xlane.f32.xlu0 %v211
    %v213 = vpop.xlane.xlu0 %212
    %vm214 = vcmask 254976
    %v215 = vsel %vm214, %v191, 0.0
    %216 = vadd.xlane.f32.xlu0 %v215
    %v217 = vpop.xlane.xlu0 %216
    %v218 = vrcp.pop 32.0
    %v219 = vmul.f32 %v204, %v218
    %v220 = vmul.f32 %v207, %v218
    %v221 = vmul.f32 %v210, %v218
    %v222 = vmul.f32 %v213, %v218
    %v223 = vmul.f32 %v217, %v218
    %v224 = vsub.f32 %v196, %v219
    %v225 = vsub.f32 %v180, %v220
    %v226 = vsub.f32 %v198, %v221
    %v227 = vsub.f32 %v192, %v222
    %v228 = vsub.f32 %v191, %v223
    %v229 = vmul.f32 %v224, %v224
    %v230 = vmul.f32 %v225, %v225
    %v231 = vmul.f32 %v226, %v226
    %v232 = vmul.f32 %v227, %v227
    %v233 = vmul.f32 %v228, %v228
    %v234 = vsel %vm201, %v229, 0.0
    %235 = vadd.xlane.f32.xlu0 %v234
    %v236 = vpop.xlane.xlu0 %235
    %v237 = vsel %vm201, %v230, 0.0
    %238 = vadd.xlane.f32.xlu0 %v237
    %v239 = vpop.xlane.xlu0 %238
    %v240 = vsel %vm201, %v231, 0.0
    %241 = vadd.xlane.f32.xlu0 %v240
    %v242 = vpop.xlane.xlu0 %241
    %v243 = vsel %vm201, %v232, 0.0
    %244 = vadd.xlane.f32.xlu0 %v243
    %v245 = vpop.xlane.xlu0 %244
    %v246 = vsel %vm214, %v233, 0.0
    %247 = vadd.xlane.f32.xlu0 %v246
    %v248 = vpop.xlane.xlu0 %247
    %v249 = vmul.f32 %v236, %v218
    %v250 = vmul.f32 %v239, %v218
    %v251 = vmul.f32 %v242, %v218
    %v252 = vmul.f32 %v245, %v218
    %v253 = vmul.f32 %v248, %v218
    %v254 = vadd.f32 %v249, 1e-05
    %v255 = vadd.f32 %v250, 1e-05
    %v256 = vadd.f32 %v251, 1e-05
    %v257 = vadd.f32 %v252, 1e-05
    %v258 = vadd.f32 %v253, 1e-05
    %v259 = vrsqrt.pop %v254
    %v260 = vrsqrt.pop %v255
    %v261 = vrsqrt.pop %v256
    %v262 = vrsqrt.pop %v257
    %v263 = vrsqrt.pop %v258
    %v264 = vmul.f32 %v224, %v259
    %v265 = vmul.f32 %v225, %v260
    %v266 = vmul.f32 %v226, %v261
    %v267 = vmul.f32 %v227, %v262
    %v268 = vmul.f32 %v228, %v263
    %v270 = vlaneseq
    %v271 = vshrl.u32 %v270, 7
    %v272 = vsub.s32 0, %v271
    %v273 = vrot.slane %v199, %v272
    %v275 = vmul.f32 %v264, %v273
    %v276 = vmul.f32 %v265, %v273
    %v277 = vmul.f32 %v266, %v273
    %v278 = vmul.f32 %v267, %v273
    %v279 = vmul.f32 %v268, %v273
    %v281 = vlaneseq
    %v282 = vshrl.u32 %v281, 7
    %v283 = vsub.s32 0, %v282
    %v284 = vrot.slane %v200, %v283
    %v286 = vadd.f32 %v275, %v284
    %v287 = vadd.f32 %v276, %v284
    %v288 = vadd.f32 %v277, %v284
    %v289 = vadd.f32 %v278, %v284
    %v290 = vadd.f32 %v279, %v284
    %v291 = vld [vmem:[%s5] sm:$0xff]
    %v292 = vld [vmem:[%s5 + $0x8] sm:$0xff]
    %v293 = vld [vmem:[%s5 + $0x10] sm:$0xff]
    %v294 = vld [vmem:[%s5 + $0x18] sm:$0xff]
    %v296 = vsel %vm201, %v286, 0
    %v299 = vsel %vm201, %v287, 0
    %v302 = vsel %vm201, %v288, 0
    %v305 = vsel %vm201, %v289, 0
    %v308 = vsel %vm201, %v290, 0
    %310 = vmatprep.subr.mxu0 0.0
    %311 = vmatpush1.msra.mxu0 0.0
    %312 = vmatprep.subr.mxu0 0.0
    %313 = vmatpush1.msra.mxu0 0.0
    %314 = vmatprep.subr.mxu0 0.0
    %315 = vmatpush1.msra.mxu0 0.0
    %316 = vmatprep.subr.mxu0 0.0
    %317 = vmatpush1.msra.mxu0 0.0
    %318 = vmatprep.subr.mxu0 0.0
    %319 = vmatpush1.msra.mxu0 0.0
    %320 = vmatprep.subr.mxu0 0.0
    %321 = vmatpush1.msra.mxu0 0.0
    %322 = vmatprep.subr.mxu0 0.0
    %323 = vmatpush1.msra.mxu0 0.0
    %324 = vmatprep.subr.mxu0 0.0
    %325 = vmatpush1.msra.mxu0 0.0
    %326 = vmatprep.subr.mxu0 0.0
    %327 = vmatpush1.msra.mxu0 0.0
    %328 = vmatprep.subr.mxu0 0.0
    %329 = vmatpush1.msra.mxu0 0.0
    %330 = vmatprep.subr.mxu0 0.0
    %331 = vmatpush1.msra.mxu0 0.0
    %332 = vmatprep.subr.mxu0 0.0
    %333 = vmatpush1.msra.mxu0 0.0
    %334 = vmatprep.subr.mxu0 0.0
    %335 = vmatpush1.msra.mxu0 %v294
    %336 = vmatprep.subr.mxu0 0.0
    %337 = vmatpush1.msra.mxu0 %v293
    %338 = vmatprep.subr.mxu0 0.0
    %339 = vmatpush1.msra.mxu0 %v292
    %340 = vmatprep.subr.mxu0 0.0
    %341 = vmatpush1.msra.mxu0 %v291
    %342 = vmatprep.subr.mxu0 0.0
    %343 = vmatpush2.msra.mxu0 0.0
    %344 = vmatprep.subr.mxu0 0.0
    %345 = vmatpush2.msra.mxu0 0.0
    %346 = vmatprep.subr.mxu0 0.0
    %347 = vmatpush2.msra.mxu0 0.0
    %348 = vmatprep.subr.mxu0 0.0
    %349 = vmatpush2.msra.mxu0 0.0
    %350 = vmatprep.subr.mxu0 0.0
    %351 = vmatpush2.msra.mxu0 0.0
    %352 = vmatprep.subr.mxu0 0.0
    %353 = vmatpush2.msra.mxu0 0.0
    %354 = vmatprep.subr.mxu0 0.0
    %355 = vmatpush2.msra.mxu0 0.0
    %356 = vmatprep.subr.mxu0 0.0
    %357 = vmatpush2.msra.mxu0 0.0
    %358 = vmatprep.subr.mxu0 0.0
    %359 = vmatpush2.msra.mxu0 0.0
    %360 = vmatprep.subr.mxu0 0.0
    %361 = vmatpush2.msra.mxu0 0.0
    %362 = vmatprep.subr.mxu0 0.0
    %363 = vmatpush2.msra.mxu0 0.0
    %364 = vmatprep.subr.mxu0 0.0
    %365 = vmatpush2.msra.mxu0 0.0
    %366 = vmatprep.subr.mxu0 0.0
    %367 = vmatpush2.msra.mxu0 0.0
    %368 = vmatprep.subr.mxu0 0.0
    %369 = vmatpush2.msra.mxu0 0.0
    %370 = vmatprep.subr.mxu0 0.0
    %371 = vmatpush2.msra.mxu0 0.0
    %372 = vmatprep.subr.mxu0 0.0
    %373 = vmatpush2.msra.mxu0 0.0
    %374 = vmatprep.mubr.f32.mxu0 0.0
    %375 = vmatmul.mubr.f32.gmra.mxu0 %v296
    %v376 = vpop.f32.mrf.mxu0
    %v377 = vadd.f32 0.0, %v376
    %v378 = vpop.f32.mrf.mxu0
    %379 = vmatprep.mubr.f32.mxu0 0.0
    %380 = vmatmul.mubr.f32.gmra.mxu0 %v299
    %v381 = vpop.f32.mrf.mxu0
    %v382 = vadd.f32 0.0, %v381
    %v383 = vpop.f32.mrf.mxu0
    %384 = vmatprep.mubr.f32.mxu0 0.0
    %385 = vmatmul.mubr.f32.gmra.mxu0 %v302
    %v386 = vpop.f32.mrf.mxu0
    %v387 = vadd.f32 0.0, %v386
    %v388 = vpop.f32.mrf.mxu0
    %389 = vmatprep.mubr.f32.mxu0 0.0
    %390 = vmatmul.mubr.f32.gmra.mxu0 %v305
    %v391 = vpop.f32.mrf.mxu0
    %v392 = vadd.f32 0.0, %v391
    %v393 = vpop.f32.mrf.mxu0
    %394 = vmatprep.mubr.f32.mxu0 0.0
    %395 = vmatmul.mubr.f32.gmra.mxu0 %v308
    %v396 = vpop.f32.mrf.mxu0
    %v397 = vadd.f32 0.0, %v396
    %v398 = vpop.f32.mrf.mxu0
    %399 = vdwg.mxu0
    %403 = vrot.lane.b32.xlu0 %v377, 96
    %v404 = vpop.permute.xlu0 %403
    %405 = vrot.lane.b32.xlu0 %v382, 96
    %v406 = vpop.permute.xlu0 %405
    %407 = vrot.lane.b32.xlu0 %v387, 96
    %v408 = vpop.permute.xlu0 %407
    %vm409 = vcmask 64512
    %v410 = vsel %vm409, %v377, 0
    %v412 = vsel %vm409, %v382, 0
    %v414 = vsel %vm409, %v387, 0
    %v416 = vsel %vm409, %v404, 0
    %v418 = vsel %vm409, %v406, 0
    %v420 = vsel %vm409, %v408, 0
    %422 = vmatprep.subr.mxu0 0.0
    %423 = vmatpush1.xpose.msra.mxu0 0.0
    %424 = vmatprep.subr.mxu0 0.0
    %425 = vmatpush1.xpose.msra.mxu0 0.0
    %426 = vmatprep.subr.mxu0 0.0
    %427 = vmatpush1.xpose.msra.mxu0 0.0
    %428 = vmatprep.subr.mxu0 0.0
    %429 = vmatpush1.xpose.msra.mxu0 0.0
    %430 = vmatprep.subr.mxu0 0.0
    %431 = vmatpush1.xpose.msra.mxu0 0.0
    %432 = vmatprep.subr.mxu0 0.0
    %433 = vmatpush1.xpose.msra.mxu0 0.0
    %434 = vmatprep.subr.mxu0 0.0
    %435 = vmatpush1.xpose.msra.mxu0 0.0
    %436 = vmatprep.subr.mxu0 0.0
    %437 = vmatpush1.xpose.msra.mxu0 0.0
    %438 = vmatprep.subr.mxu0 0.0
    %439 = vmatpush1.xpose.msra.mxu0 0.0
    %440 = vmatprep.subr.mxu0 0.0
    %441 = vmatpush1.xpose.msra.mxu0 0.0
    %442 = vmatprep.subr.mxu0 0.0
    %443 = vmatpush1.xpose.msra.mxu0 0.0
    %444 = vmatprep.subr.mxu0 0.0
    %445 = vmatpush1.xpose.msra.mxu0 0.0
    %446 = vmatprep.subr.mxu0 0.0
    %447 = vmatpush1.xpose.msra.mxu0 0.0
    %448 = vmatprep.subr.mxu0 0.0
    %449 = vmatpush1.xpose.msra.mxu0 %v420
    %450 = vmatprep.subr.mxu0 0.0
    %451 = vmatpush1.xpose.msra.mxu0 %v418
    %452 = vmatprep.subr.mxu0 0.0
    %453 = vmatpush1.xpose.msra.mxu0 %v416
    %454 = vmatprep.subr.mxu0 0.0
    %455 = vmatpush2.xpose.msra.mxu0 0.0
    %456 = vmatprep.subr.mxu0 0.0
    %457 = vmatpush2.xpose.msra.mxu0 0.0
    %458 = vmatprep.subr.mxu0 0.0
    %459 = vmatpush2.xpose.msra.mxu0 0.0
    %460 = vmatprep.subr.mxu0 0.0
    %461 = vmatpush2.xpose.msra.mxu0 0.0
    %462 = vmatprep.subr.mxu0 0.0
    %463 = vmatpush2.xpose.msra.mxu0 0.0
    %464 = vmatprep.subr.mxu0 0.0
    %465 = vmatpush2.xpose.msra.mxu0 0.0
    %466 = vmatprep.subr.mxu0 0.0
    %467 = vmatpush2.xpose.msra.mxu0 0.0
    %468 = vmatprep.subr.mxu0 0.0
    %469 = vmatpush2.xpose.msra.mxu0 0.0
    %470 = vmatprep.subr.mxu0 0.0
    %471 = vmatpush2.xpose.msra.mxu0 0.0
    %472 = vmatprep.subr.mxu0 0.0
    %473 = vmatpush2.xpose.msra.mxu0 0.0
    %474 = vmatprep.subr.mxu0 0.0
    %475 = vmatpush2.xpose.msra.mxu0 0.0
    %476 = vmatprep.subr.mxu0 0.0
    %477 = vmatpush2.xpose.msra.mxu0 0.0
    %478 = vmatprep.subr.mxu0 0.0
    %479 = vmatpush2.xpose.msra.mxu0 0.0
    %480 = vmatprep.subr.mxu0 0.0
    %481 = vmatpush2.xpose.msra.mxu0 0.0
    %482 = vmatprep.subr.mxu0 0.0
    %483 = vmatpush2.xpose.msra.mxu0 0.0
    %484 = vmatprep.subr.mxu0 0.0
    %485 = vmatpush2.xpose.msra.mxu0 0.0
    %486 = vmatprep.mubr.f32.mxu0 0.0
    %487 = vmatmul.mubr.f32.gmra.mxu0 %v410
    %v488 = vpop.f32.mrf.mxu0
    %v489 = vadd.f32 0.0, %v488
    %v490 = vpop.f32.mrf.mxu0
    %491 = vmatprep.mubr.f32.mxu0 0.0
    %492 = vmatmul.mubr.f32.gmra.mxu0 %v412
    %v493 = vpop.f32.mrf.mxu0
    %v494 = vadd.f32 0.0, %v493
    %v495 = vpop.f32.mrf.mxu0
    %496 = vmatprep.mubr.f32.mxu0 0.0
    %497 = vmatmul.mubr.f32.gmra.mxu0 %v414
    %v498 = vpop.f32.mrf.mxu0
    %v499 = vadd.f32 0.0, %v498
    %v500 = vpop.f32.mrf.mxu0
    %501 = vdwg.mxu0
    %vm502 = vcmask 138240
    %v503 = vsel %vm502, %v489, -inf
    %504 = vmax.xlane.f32.xlu0 %v503
    %v505 = vpop.xlane.xlu0 %504
    %v506 = vsel %vm502, %v494, -inf
    %507 = vmax.xlane.f32.xlu0 %v506
    %v508 = vpop.xlane.xlu0 %507
    %vm509 = vcmask 131072
    %v510 = vsel %vm509, %v499, -inf
    %511 = vmax.xlane.f32.xlu0 %v510
    %v512 = vpop.xlane.xlu0 %511
    %v513 = vsub.f32 %v489, %v505
    %v514 = vsub.f32 %v494, %v508
    %v515 = vsub.f32 %v499, %v512
    %v516 = vmul.f32 %v513, 1.442695
    %v517 = vpow.pop %v516
    %v518 = vmul.f32 %v514, 1.442695
    %v519 = vpow.pop %v518
    %v520 = vmul.f32 %v515, 1.442695
    %v521 = vpow.pop %v520
    %v522 = vsel %vm502, %v517, 0.0
    %523 = vadd.xlane.f32.xlu0 %v522
    %v524 = vpop.xlane.xlu0 %523
    %v525 = vsel %vm502, %v519, 0.0
    %526 = vadd.xlane.f32.xlu0 %v525
    %v527 = vpop.xlane.xlu0 %526
    %v528 = vsel %vm509, %v521, 0.0
    %529 = vadd.xlane.f32.xlu0 %v528
    %v530 = vpop.xlane.xlu0 %529
    %v531 = vrcp.pop %v524
    %v532 = vmul.f32 %v517, %v531
    %v533 = vrcp.pop %v527
    %v534 = vmul.f32 %v519, %v533
    %v535 = vrcp.pop %v530
    %v536 = vmul.f32 %v521, %v535
    %537 = vrot.lane.b32.xlu0 %v377, 64
    %v538 = vpop.permute.xlu0 %537
    %539 = vrot.lane.b32.xlu0 %v382, 64
    %v540 = vpop.permute.xlu0 %539
    %541 = vrot.lane.b32.xlu0 %v387, 64
    %v542 = vpop.permute.xlu0 %541
    %v546 = vsel %vm502, %v532, 0
    %v549 = vsel %vm502, %v534, 0
    %v552 = vsel %vm502, %v536, 0
    %v554 = vsel %vm177, %v542, 0
    %556 = vmatprep.subr.mxu0 0.0
    %557 = vmatpush1.msra.mxu0 0.0
    %558 = vmatprep.subr.mxu0 0.0
    %559 = vmatpush1.msra.mxu0 0.0
    %560 = vmatprep.subr.mxu0 0.0
    %561 = vmatpush1.msra.mxu0 0.0
    %562 = vmatprep.subr.mxu0 0.0
    %563 = vmatpush1.msra.mxu0 0.0
    %564 = vmatprep.subr.mxu0 0.0
    %565 = vmatpush1.msra.mxu0 0.0
    %566 = vmatprep.subr.mxu0 0.0
    %567 = vmatpush1.msra.mxu0 0.0
    %568 = vmatprep.subr.mxu0 0.0
    %569 = vmatpush1.msra.mxu0 0.0
    %570 = vmatprep.subr.mxu0 0.0
    %571 = vmatpush1.msra.mxu0 0.0
    %572 = vmatprep.subr.mxu0 0.0
    %573 = vmatpush1.msra.mxu0 0.0
    %574 = vmatprep.subr.mxu0 0.0
    %575 = vmatpush1.msra.mxu0 0.0
    %576 = vmatprep.subr.mxu0 0.0
    %577 = vmatpush1.msra.mxu0 0.0
    %578 = vmatprep.subr.mxu0 0.0
    %579 = vmatpush1.msra.mxu0 0.0
    %580 = vmatprep.subr.mxu0 0.0
    %581 = vmatpush1.msra.mxu0 0.0
    %582 = vmatprep.subr.mxu0 0.0
    %583 = vmatpush1.msra.mxu0 %v554
    %584 = vmatprep.subr.mxu0 0.0
    %585 = vmatpush1.msra.mxu0 %v540
    %586 = vmatprep.subr.mxu0 0.0
    %587 = vmatpush1.msra.mxu0 %v538
    %588 = vmatprep.subr.mxu0 0.0
    %589 = vmatpush2.msra.mxu0 0.0
    %590 = vmatprep.subr.mxu0 0.0
    %591 = vmatpush2.msra.mxu0 0.0
    %592 = vmatprep.subr.mxu0 0.0
    %593 = vmatpush2.msra.mxu0 0.0
    %594 = vmatprep.subr.mxu0 0.0
    %595 = vmatpush2.msra.mxu0 0.0
    %596 = vmatprep.subr.mxu0 0.0
    %597 = vmatpush2.msra.mxu0 0.0
    %598 = vmatprep.subr.mxu0 0.0
    %599 = vmatpush2.msra.mxu0 0.0
    %600 = vmatprep.subr.mxu0 0.0
    %601 = vmatpush2.msra.mxu0 0.0
    %602 = vmatprep.subr.mxu0 0.0
    %603 = vmatpush2.msra.mxu0 0.0
    %604 = vmatprep.subr.mxu0 0.0
    %605 = vmatpush2.msra.mxu0 0.0
    %606 = vmatprep.subr.mxu0 0.0
    %607 = vmatpush2.msra.mxu0 0.0
    %608 = vmatprep.subr.mxu0 0.0
    %609 = vmatpush2.msra.mxu0 0.0
    %610 = vmatprep.subr.mxu0 0.0
    %611 = vmatpush2.msra.mxu0 0.0
    %612 = vmatprep.subr.mxu0 0.0
    %613 = vmatpush2.msra.mxu0 0.0
    %614 = vmatprep.subr.mxu0 0.0
    %615 = vmatpush2.msra.mxu0 0.0
    %616 = vmatprep.subr.mxu0 0.0
    %617 = vmatpush2.msra.mxu0 0.0
    %618 = vmatprep.subr.mxu0 0.0
    %619 = vmatpush2.msra.mxu0 0.0
    %620 = vmatprep.mubr.f32.mxu0 0.0
    %621 = vmatmul.mubr.f32.gmra.mxu0 %v546
    %v622 = vpop.f32.mrf.mxu0
    %v623 = vadd.f32 0.0, %v622
    %v624 = vpop.f32.mrf.mxu0
    %625 = vmatprep.mubr.f32.mxu0 0.0
    %626 = vmatmul.mubr.f32.gmra.mxu0 %v549
    %v627 = vpop.f32.mrf.mxu0
    %v628 = vadd.f32 0.0, %v627
    %v629 = vpop.f32.mrf.mxu0
    %630 = vmatprep.mubr.f32.mxu0 0.0
    %631 = vmatmul.mubr.f32.gmra.mxu0 %v552
    %v632 = vpop.f32.mrf.mxu0
    %v633 = vadd.f32 0.0, %v632
    %v634 = vpop.f32.mrf.mxu0
    %635 = vdwg.mxu0
    %636 = vrot.lane.b32.xlu0 %v377, 120
    %v637 = vpop.permute.xlu0 %636
    %638 = vrot.lane.b32.xlu0 %v382, 120
    %v639 = vpop.permute.xlu0 %638
    %640 = vrot.lane.b32.xlu0 %v387, 120
    %v641 = vpop.permute.xlu0 %640
    %642 = vrot.lane.b32.xlu0 %v377, 88
    %v643 = vpop.permute.xlu0 %642
    %644 = vrot.lane.b32.xlu0 %v382, 88
    %v645 = vpop.permute.xlu0 %644
    %646 = vrot.lane.b32.xlu0 %v387, 88
    %v647 = vpop.permute.xlu0 %646
    %v648 = vsel %vm409, %v637, 0
    %v650 = vsel %vm409, %v639, 0
    %v652 = vsel %vm409, %v641, 0
    %v654 = vsel %vm409, %v643, 0
    %v656 = vsel %vm409, %v645, 0
    %v658 = vsel %vm409, %v647, 0
    %660 = vmatprep.subr.mxu0 0.0
    %661 = vmatpush1.xpose.msra.mxu0 0.0
    %662 = vmatprep.subr.mxu0 0.0
    %663 = vmatpush1.xpose.msra.mxu0 0.0
    %664 = vmatprep.subr.mxu0 0.0
    %665 = vmatpush1.xpose.msra.mxu0 0.0
    %666 = vmatprep.subr.mxu0 0.0
    %667 = vmatpush1.xpose.msra.mxu0 0.0
    %668 = vmatprep.subr.mxu0 0.0
    %669 = vmatpush1.xpose.msra.mxu0 0.0
    %670 = vmatprep.subr.mxu0 0.0
    %671 = vmatpush1.xpose.msra.mxu0 0.0
    %672 = vmatprep.subr.mxu0 0.0
    %673 = vmatpush1.xpose.msra.mxu0 0.0
    %674 = vmatprep.subr.mxu0 0.0
    %675 = vmatpush1.xpose.msra.mxu0 0.0
    %676 = vmatprep.subr.mxu0 0.0
    %677 = vmatpush1.xpose.msra.mxu0 0.0
    %678 = vmatprep.subr.mxu0 0.0
    %679 = vmatpush1.xpose.msra.mxu0 0.0
    %680 = vmatprep.subr.mxu0 0.0
    %681 = vmatpush1.xpose.msra.mxu0 0.0
    %682 = vmatprep.subr.mxu0 0.0
    %683 = vmatpush1.xpose.msra.mxu0 0.0
    %684 = vmatprep.subr.mxu0 0.0
    %685 = vmatpush1.xpose.msra.mxu0 0.0
    %686 = vmatprep.subr.mxu0 0.0
    %687 = vmatpush1.xpose.msra.mxu0 %v658
    %688 = vmatprep.subr.mxu0 0.0
    %689 = vmatpush1.xpose.msra.mxu0 %v656
    %690 = vmatprep.subr.mxu0 0.0
    %691 = vmatpush1.xpose.msra.mxu0 %v654
    %692 = vmatprep.subr.mxu0 0.0
    %693 = vmatpush2.xpose.msra.mxu0 0.0
    %694 = vmatprep.subr.mxu0 0.0
    %695 = vmatpush2.xpose.msra.mxu0 0.0
    %696 = vmatprep.subr.mxu0 0.0
    %697 = vmatpush2.xpose.msra.mxu0 0.0
    %698 = vmatprep.subr.mxu0 0.0
    %699 = vmatpush2.xpose.msra.mxu0 0.0
    %700 = vmatprep.subr.mxu0 0.0
    %701 = vmatpush2.xpose.msra.mxu0 0.0
    %702 = vmatprep.subr.mxu0 0.0
    %703 = vmatpush2.xpose.msra.mxu0 0.0
    %704 = vmatprep.subr.mxu0 0.0
    %705 = vmatpush2.xpose.msra.mxu0 0.0
    %706 = vmatprep.subr.mxu0 0.0
    %707 = vmatpush2.xpose.msra.mxu0 0.0
    %708 = vmatprep.subr.mxu0 0.0
    %709 = vmatpush2.xpose.msra.mxu0 0.0
    %710 = vmatprep.subr.mxu0 0.0
    %711 = vmatpush2.xpose.msra.mxu0 0.0
    %712 = vmatprep.subr.mxu0 0.0
    %713 = vmatpush2.xpose.msra.mxu0 0.0
    %714 = vmatprep.subr.mxu0 0.0
    %715 = vmatpush2.xpose.msra.mxu0 0.0
    %716 = vmatprep.subr.mxu0 0.0
    %717 = vmatpush2.xpose.msra.mxu0 0.0
    %718 = vmatprep.subr.mxu0 0.0
    %719 = vmatpush2.xpose.msra.mxu0 0.0
    %720 = vmatprep.subr.mxu0 0.0
    %721 = vmatpush2.xpose.msra.mxu0 0.0
    %722 = vmatprep.subr.mxu0 0.0
    %723 = vmatpush2.xpose.msra.mxu0 0.0
    %724 = vmatprep.mubr.f32.mxu0 0.0
    %725 = vmatmul.mubr.f32.gmra.mxu0 %v648
    %v726 = vpop.f32.mrf.mxu0
    %v727 = vadd.f32 0.0, %v726
    %v728 = vpop.f32.mrf.mxu0
    %729 = vmatprep.mubr.f32.mxu0 0.0
    %730 = vmatmul.mubr.f32.gmra.mxu0 %v650
    %v731 = vpop.f32.mrf.mxu0
    %v732 = vadd.f32 0.0, %v731
    %v733 = vpop.f32.mrf.mxu0
    %734 = vmatprep.mubr.f32.mxu0 0.0
    %735 = vmatmul.mubr.f32.gmra.mxu0 %v652
    %v736 = vpop.f32.mrf.mxu0
    %v737 = vadd.f32 0.0, %v736
    %v738 = vpop.f32.mrf.mxu0
    %739 = vdwg.mxu0
    %v740 = vsel %vm502, %v727, -inf
    %741 = vmax.xlane.f32.xlu0 %v740
    %v742 = vpop.xlane.xlu0 %741
    %v743 = vsel %vm502, %v732, -inf
    %744 = vmax.xlane.f32.xlu0 %v743
    %v745 = vpop.xlane.xlu0 %744
    %v746 = vsel %vm509, %v737, -inf
    %747 = vmax.xlane.f32.xlu0 %v746
    %v748 = vpop.xlane.xlu0 %747
    %v749 = vsub.f32 %v727, %v742
    %v750 = vsub.f32 %v732, %v745
    %v751 = vsub.f32 %v737, %v748
    %v752 = vmul.f32 %v749, 1.442695
    %v753 = vpow.pop %v752
    %v754 = vmul.f32 %v750, 1.442695
    %v755 = vpow.pop %v754
    %v756 = vmul.f32 %v751, 1.442695
    %v757 = vpow.pop %v756
    %v758 = vsel %vm502, %v753, 0.0
    %759 = vadd.xlane.f32.xlu0 %v758
    %v760 = vpop.xlane.xlu0 %759
    %v761 = vsel %vm502, %v755, 0.0
    %762 = vadd.xlane.f32.xlu0 %v761
    %v763 = vpop.xlane.xlu0 %762
    %v764 = vsel %vm509, %v757, 0.0
    %765 = vadd.xlane.f32.xlu0 %v764
    %v766 = vpop.xlane.xlu0 %765
    %v767 = vrcp.pop %v760
    %v768 = vmul.f32 %v753, %v767
    %v769 = vrcp.pop %v763
    %v770 = vmul.f32 %v755, %v769
    %v771 = vrcp.pop %v766
    %v772 = vmul.f32 %v757, %v771
    %773 = vrot.lane.b32.xlu0 %v377, 56
    %v774 = vpop.permute.xlu0 %773
    %775 = vrot.lane.b32.xlu0 %v382, 56
    %v776 = vpop.permute.xlu0 %775
    %777 = vrot.lane.b32.xlu0 %v387, 56
    %v778 = vpop.permute.xlu0 %777
    %v782 = vsel %vm502, %v768, 0
    %v785 = vsel %vm502, %v770, 0
    %v788 = vsel %vm502, %v772, 0
    %v790 = vsel %vm177, %v778, 0
    %792 = vmatprep.subr.mxu0 0.0
    %793 = vmatpush1.msra.mxu0 0.0
    %794 = vmatprep.subr.mxu0 0.0
    %795 = vmatpush1.msra.mxu0 0.0
    %796 = vmatprep.subr.mxu0 0.0
    %797 = vmatpush1.msra.mxu0 0.0
    %798 = vmatprep.subr.mxu0 0.0
    %799 = vmatpush1.msra.mxu0 0.0
    %800 = vmatprep.subr.mxu0 0.0
    %801 = vmatpush1.msra.mxu0 0.0
    %802 = vmatprep.subr.mxu0 0.0
    %803 = vmatpush1.msra.mxu0 0.0
    %804 = vmatprep.subr.mxu0 0.0
    %805 = vmatpush1.msra.mxu0 0.0
    %806 = vmatprep.subr.mxu0 0.0
    %807 = vmatpush1.msra.mxu0 0.0
    %808 = vmatprep.subr.mxu0 0.0
    %809 = vmatpush1.msra.mxu0 0.0
    %810 = vmatprep.subr.mxu0 0.0
    %811 = vmatpush1.msra.mxu0 0.0
    %812 = vmatprep.subr.mxu0 0.0
    %813 = vmatpush1.msra.mxu0 0.0
    %814 = vmatprep.subr.mxu0 0.0
    %815 = vmatpush1.msra.mxu0 0.0
    %816 = vmatprep.subr.mxu0 0.0
    %817 = vmatpush1.msra.mxu0 0.0
    %818 = vmatprep.subr.mxu0 0.0
    %819 = vmatpush1.msra.mxu0 %v790
    %820 = vmatprep.subr.mxu0 0.0
    %821 = vmatpush1.msra.mxu0 %v776
    %822 = vmatprep.subr.mxu0 0.0
    %823 = vmatpush1.msra.mxu0 %v774
    %824 = vmatprep.subr.mxu0 0.0
    %825 = vmatpush2.msra.mxu0 0.0
    %826 = vmatprep.subr.mxu0 0.0
    %827 = vmatpush2.msra.mxu0 0.0
    %828 = vmatprep.subr.mxu0 0.0
    %829 = vmatpush2.msra.mxu0 0.0
    %830 = vmatprep.subr.mxu0 0.0
    %831 = vmatpush2.msra.mxu0 0.0
    %832 = vmatprep.subr.mxu0 0.0
    %833 = vmatpush2.msra.mxu0 0.0
    %834 = vmatprep.subr.mxu0 0.0
    %835 = vmatpush2.msra.mxu0 0.0
    %836 = vmatprep.subr.mxu0 0.0
    %837 = vmatpush2.msra.mxu0 0.0
    %838 = vmatprep.subr.mxu0 0.0
    %839 = vmatpush2.msra.mxu0 0.0
    %840 = vmatprep.subr.mxu0 0.0
    %841 = vmatpush2.msra.mxu0 0.0
    %842 = vmatprep.subr.mxu0 0.0
    %843 = vmatpush2.msra.mxu0 0.0
    %844 = vmatprep.subr.mxu0 0.0
    %845 = vmatpush2.msra.mxu0 0.0
    %846 = vmatprep.subr.mxu0 0.0
    %847 = vmatpush2.msra.mxu0 0.0
    %848 = vmatprep.subr.mxu0 0.0
    %849 = vmatpush2.msra.mxu0 0.0
    %850 = vmatprep.subr.mxu0 0.0
    %851 = vmatpush2.msra.mxu0 0.0
    %852 = vmatprep.subr.mxu0 0.0
    %853 = vmatpush2.msra.mxu0 0.0
    %854 = vmatprep.subr.mxu0 0.0
    %855 = vmatpush2.msra.mxu0 0.0
    %856 = vmatprep.mubr.f32.mxu0 0.0
    %857 = vmatmul.mubr.f32.gmra.mxu0 %v782
    %v858 = vpop.f32.mrf.mxu0
    %v859 = vadd.f32 0.0, %v858
    %v860 = vpop.f32.mrf.mxu0
    %861 = vmatprep.mubr.f32.mxu0 0.0
    %862 = vmatmul.mubr.f32.gmra.mxu0 %v785
    %v863 = vpop.f32.mrf.mxu0
    %v864 = vadd.f32 0.0, %v863
    %v865 = vpop.f32.mrf.mxu0
    %866 = vmatprep.mubr.f32.mxu0 0.0
    %867 = vmatmul.mubr.f32.gmra.mxu0 %v788
    %v868 = vpop.f32.mrf.mxu0
    %v869 = vadd.f32 0.0, %v868
    %v870 = vpop.f32.mrf.mxu0
    %871 = vdwg.mxu0
    %872 = vrot.lane.b32.xlu0 %v377, 112
    %v873 = vpop.permute.xlu0 %872
    %874 = vrot.lane.b32.xlu0 %v382, 112
    %v875 = vpop.permute.xlu0 %874
    %876 = vrot.lane.b32.xlu0 %v387, 112
    %v877 = vpop.permute.xlu0 %876
    %878 = vrot.lane.b32.xlu0 %v377, 80
    %v879 = vpop.permute.xlu0 %878
    %880 = vrot.lane.b32.xlu0 %v382, 80
    %v881 = vpop.permute.xlu0 %880
    %882 = vrot.lane.b32.xlu0 %v387, 80
    %v883 = vpop.permute.xlu0 %882
    %v884 = vsel %vm409, %v873, 0
    %v886 = vsel %vm409, %v875, 0
    %v888 = vsel %vm409, %v877, 0
    %v890 = vsel %vm409, %v879, 0
    %v892 = vsel %vm409, %v881, 0
    %v894 = vsel %vm409, %v883, 0
    %896 = vmatprep.subr.mxu0 0.0
    %897 = vmatpush1.xpose.msra.mxu0 0.0
    %898 = vmatprep.subr.mxu0 0.0
    %899 = vmatpush1.xpose.msra.mxu0 0.0
    %900 = vmatprep.subr.mxu0 0.0
    %901 = vmatpush1.xpose.msra.mxu0 0.0
    %902 = vmatprep.subr.mxu0 0.0
    %903 = vmatpush1.xpose.msra.mxu0 0.0
    %904 = vmatprep.subr.mxu0 0.0
    %905 = vmatpush1.xpose.msra.mxu0 0.0
    %906 = vmatprep.subr.mxu0 0.0
    %907 = vmatpush1.xpose.msra.mxu0 0.0
    %908 = vmatprep.subr.mxu0 0.0
    %909 = vmatpush1.xpose.msra.mxu0 0.0
    %910 = vmatprep.subr.mxu0 0.0
    %911 = vmatpush1.xpose.msra.mxu0 0.0
    %912 = vmatprep.subr.mxu0 0.0
    %913 = vmatpush1.xpose.msra.mxu0 0.0
    %914 = vmatprep.subr.mxu0 0.0
    %915 = vmatpush1.xpose.msra.mxu0 0.0
    %916 = vmatprep.subr.mxu0 0.0
    %917 = vmatpush1.xpose.msra.mxu0 0.0
    %918 = vmatprep.subr.mxu0 0.0
    %919 = vmatpush1.xpose.msra.mxu0 0.0
    %920 = vmatprep.subr.mxu0 0.0
    %921 = vmatpush1.xpose.msra.mxu0 0.0
    %922 = vmatprep.subr.mxu0 0.0
    %923 = vmatpush1.xpose.msra.mxu0 %v894
    %924 = vmatprep.subr.mxu0 0.0
    %925 = vmatpush1.xpose.msra.mxu0 %v892
    %926 = vmatprep.subr.mxu0 0.0
    %927 = vmatpush1.xpose.msra.mxu0 %v890
    %928 = vmatprep.subr.mxu0 0.0
    %929 = vmatpush2.xpose.msra.mxu0 0.0
    %930 = vmatprep.subr.mxu0 0.0
    %931 = vmatpush2.xpose.msra.mxu0 0.0
    %932 = vmatprep.subr.mxu0 0.0
    %933 = vmatpush2.xpose.msra.mxu0 0.0
    %934 = vmatprep.subr.mxu0 0.0
    %935 = vmatpush2.xpose.msra.mxu0 0.0
    %936 = vmatprep.subr.mxu0 0.0
    %937 = vmatpush2.xpose.msra.mxu0 0.0
    %938 = vmatprep.subr.mxu0 0.0
    %939 = vmatpush2.xpose.msra.mxu0 0.0
    %940 = vmatprep.subr.mxu0 0.0
    %941 = vmatpush2.xpose.msra.mxu0 0.0
    %942 = vmatprep.subr.mxu0 0.0
    %943 = vmatpush2.xpose.msra.mxu0 0.0
    %944 = vmatprep.subr.mxu0 0.0
    %945 = vmatpush2.xpose.msra.mxu0 0.0
    %946 = vmatprep.subr.mxu0 0.0
    %947 = vmatpush2.xpose.msra.mxu0 0.0
    %948 = vmatprep.subr.mxu0 0.0
    %949 = vmatpush2.xpose.msra.mxu0 0.0
    %950 = vmatprep.subr.mxu0 0.0
    %951 = vmatpush2.xpose.msra.mxu0 0.0
    %952 = vmatprep.subr.mxu0 0.0
    %953 = vmatpush2.xpose.msra.mxu0 0.0
    %954 = vmatprep.subr.mxu0 0.0
    %955 = vmatpush2.xpose.msra.mxu0 0.0
    %956 = vmatprep.subr.mxu0 0.0
    %957 = vmatpush2.xpose.msra.mxu0 0.0
    %958 = vmatprep.subr.mxu0 0.0
    %959 = vmatpush2.xpose.msra.mxu0 0.0
    %960 = vmatprep.mubr.f32.mxu0 0.0
    %961 = vmatmul.mubr.f32.gmra.mxu0 %v884
    %v962 = vpop.f32.mrf.mxu0
    %v963 = vadd.f32 0.0, %v962
    %v964 = vpop.f32.mrf.mxu0
    %965 = vmatprep.mubr.f32.mxu0 0.0
    %966 = vmatmul.mubr.f32.gmra.mxu0 %v886
    %v967 = vpop.f32.mrf.mxu0
    %v968 = vadd.f32 0.0, %v967
    %v969 = vpop.f32.mrf.mxu0
    %970 = vmatprep.mubr.f32.mxu0 0.0
    %971 = vmatmul.mubr.f32.gmra.mxu0 %v888
    %v972 = vpop.f32.mrf.mxu0
    %v973 = vadd.f32 0.0, %v972
    %v974 = vpop.f32.mrf.mxu0
    %975 = vdwg.mxu0
    %v976 = vsel %vm502, %v963, -inf
    %977 = vmax.xlane.f32.xlu0 %v976
    %v978 = vpop.xlane.xlu0 %977
    %v979 = vsel %vm502, %v968, -inf
    %980 = vmax.xlane.f32.xlu0 %v979
    %v981 = vpop.xlane.xlu0 %980
    %v982 = vsel %vm509, %v973, -inf
    %983 = vmax.xlane.f32.xlu0 %v982
    %v984 = vpop.xlane.xlu0 %983
    %v985 = vsub.f32 %v963, %v978
    %v986 = vsub.f32 %v968, %v981
    %v987 = vsub.f32 %v973, %v984
    %v988 = vmul.f32 %v985, 1.442695
    %v989 = vpow.pop %v988
    %v990 = vmul.f32 %v986, 1.442695
    %v991 = vpow.pop %v990
    %v992 = vmul.f32 %v987, 1.442695
    %v993 = vpow.pop %v992
    %v994 = vsel %vm502, %v989, 0.0
    %995 = vadd.xlane.f32.xlu0 %v994
    %v996 = vpop.xlane.xlu0 %995
    %v997 = vsel %vm502, %v991, 0.0
    %998 = vadd.xlane.f32.xlu0 %v997
    %v999 = vpop.xlane.xlu0 %998
    %v1000 = vsel %vm509, %v993, 0.0
    %1001 = vadd.xlane.f32.xlu0 %v1000
    %v1002 = vpop.xlane.xlu0 %1001
    %v1003 = vrcp.pop %v996
    %v1004 = vmul.f32 %v989, %v1003
    %v1005 = vrcp.pop %v999
    %v1006 = vmul.f32 %v991, %v1005
    %v1007 = vrcp.pop %v1002
    %v1008 = vmul.f32 %v993, %v1007
    %1009 = vrot.lane.b32.xlu0 %v377, 48
    %v1010 = vpop.permute.xlu0 %1009
    %1011 = vrot.lane.b32.xlu0 %v382, 48
    %v1012 = vpop.permute.xlu0 %1011
    %1013 = vrot.lane.b32.xlu0 %v387, 48
    %v1014 = vpop.permute.xlu0 %1013
    %v1018 = vsel %vm502, %v1004, 0
    %v1021 = vsel %vm502, %v1006, 0
    %v1024 = vsel %vm502, %v1008, 0
    %v1026 = vsel %vm177, %v1014, 0
    %1028 = vmatprep.subr.mxu0 0.0
    %1029 = vmatpush1.msra.mxu0 0.0
    %1030 = vmatprep.subr.mxu0 0.0
    %1031 = vmatpush1.msra.mxu0 0.0
    %1032 = vmatprep.subr.mxu0 0.0
    %1033 = vmatpush1.msra.mxu0 0.0
    %1034 = vmatprep.subr.mxu0 0.0
    %1035 = vmatpush1.msra.mxu0 0.0
    %1036 = vmatprep.subr.mxu0 0.0
    %1037 = vmatpush1.msra.mxu0 0.0
    %1038 = vmatprep.subr.mxu0 0.0
    %1039 = vmatpush1.msra.mxu0 0.0
    %1040 = vmatprep.subr.mxu0 0.0
    %1041 = vmatpush1.msra.mxu0 0.0
    %1042 = vmatprep.subr.mxu0 0.0
    %1043 = vmatpush1.msra.mxu0 0.0
    %1044 = vmatprep.subr.mxu0 0.0
    %1045 = vmatpush1.msra.mxu0 0.0
    %1046 = vmatprep.subr.mxu0 0.0
    %1047 = vmatpush1.msra.mxu0 0.0
    %1048 = vmatprep.subr.mxu0 0.0
    %1049 = vmatpush1.msra.mxu0 0.0
    %1050 = vmatprep.subr.mxu0 0.0
    %1051 = vmatpush1.msra.mxu0 0.0
    %1052 = vmatprep.subr.mxu0 0.0
    %1053 = vmatpush1.msra.mxu0 0.0
    %1054 = vmatprep.subr.mxu0 0.0
    %1055 = vmatpush1.msra.mxu0 %v1026
    %1056 = vmatprep.subr.mxu0 0.0
    %1057 = vmatpush1.msra.mxu0 %v1012
    %1058 = vmatprep.subr.mxu0 0.0
    %1059 = vmatpush1.msra.mxu0 %v1010
    %1060 = vmatprep.subr.mxu0 0.0
    %1061 = vmatpush2.msra.mxu0 0.0
    %1062 = vmatprep.subr.mxu0 0.0
    %1063 = vmatpush2.msra.mxu0 0.0
    %1064 = vmatprep.subr.mxu0 0.0
    %1065 = vmatpush2.msra.mxu0 0.0
    %1066 = vmatprep.subr.mxu0 0.0
    %1067 = vmatpush2.msra.mxu0 0.0
    %1068 = vmatprep.subr.mxu0 0.0
    %1069 = vmatpush2.msra.mxu0 0.0
    %1070 = vmatprep.subr.mxu0 0.0
    %1071 = vmatpush2.msra.mxu0 0.0
    %1072 = vmatprep.subr.mxu0 0.0
    %1073 = vmatpush2.msra.mxu0 0.0
    %1074 = vmatprep.subr.mxu0 0.0
    %1075 = vmatpush2.msra.mxu0 0.0
    %1076 = vmatprep.subr.mxu0 0.0
    %1077 = vmatpush2.msra.mxu0 0.0
    %1078 = vmatprep.subr.mxu0 0.0
    %1079 = vmatpush2.msra.mxu0 0.0
    %1080 = vmatprep.subr.mxu0 0.0
    %1081 = vmatpush2.msra.mxu0 0.0
    %1082 = vmatprep.subr.mxu0 0.0
    %1083 = vmatpush2.msra.mxu0 0.0
    %1084 = vmatprep.subr.mxu0 0.0
    %1085 = vmatpush2.msra.mxu0 0.0
    %1086 = vmatprep.subr.mxu0 0.0
    %1087 = vmatpush2.msra.mxu0 0.0
    %1088 = vmatprep.subr.mxu0 0.0
    %1089 = vmatpush2.msra.mxu0 0.0
    %1090 = vmatprep.subr.mxu0 0.0
    %1091 = vmatpush2.msra.mxu0 0.0
    %1092 = vmatprep.mubr.f32.mxu0 0.0
    %1093 = vmatmul.mubr.f32.gmra.mxu0 %v1018
    %v1094 = vpop.f32.mrf.mxu0
    %v1095 = vadd.f32 0.0, %v1094
    %v1096 = vpop.f32.mrf.mxu0
    %1097 = vmatprep.mubr.f32.mxu0 0.0
    %1098 = vmatmul.mubr.f32.gmra.mxu0 %v1021
    %v1099 = vpop.f32.mrf.mxu0
    %v1100 = vadd.f32 0.0, %v1099
    %v1101 = vpop.f32.mrf.mxu0
    %1102 = vmatprep.mubr.f32.mxu0 0.0
    %1103 = vmatmul.mubr.f32.gmra.mxu0 %v1024
    %v1104 = vpop.f32.mrf.mxu0
    %v1105 = vadd.f32 0.0, %v1104
    %v1106 = vpop.f32.mrf.mxu0
    %1107 = vdwg.mxu0
    %1108 = vrot.lane.b32.xlu0 %v377, 104
    %v1109 = vpop.permute.xlu0 %1108
    %1110 = vrot.lane.b32.xlu0 %v382, 104
    %v1111 = vpop.permute.xlu0 %1110
    %1112 = vrot.lane.b32.xlu0 %v387, 104
    %v1113 = vpop.permute.xlu0 %1112
    %1114 = vrot.lane.b32.xlu0 %v377, 72
    %v1115 = vpop.permute.xlu0 %1114
    %1116 = vrot.lane.b32.xlu0 %v382, 72
    %v1117 = vpop.permute.xlu0 %1116
    %1118 = vrot.lane.b32.xlu0 %v387, 72
    %v1119 = vpop.permute.xlu0 %1118
    %v1120 = vsel %vm409, %v1109, 0
    %v1122 = vsel %vm409, %v1111, 0
    %v1124 = vsel %vm409, %v1113, 0
    %v1126 = vsel %vm409, %v1115, 0
    %v1128 = vsel %vm409, %v1117, 0
    %v1130 = vsel %vm409, %v1119, 0
    %1132 = vmatprep.subr.mxu0 0.0
    %1133 = vmatpush1.xpose.msra.mxu0 0.0
    %1134 = vmatprep.subr.mxu0 0.0
    %1135 = vmatpush1.xpose.msra.mxu0 0.0
    %1136 = vmatprep.subr.mxu0 0.0
    %1137 = vmatpush1.xpose.msra.mxu0 0.0
    %1138 = vmatprep.subr.mxu0 0.0
    %1139 = vmatpush1.xpose.msra.mxu0 0.0
    %1140 = vmatprep.subr.mxu0 0.0
    %1141 = vmatpush1.xpose.msra.mxu0 0.0
    %1142 = vmatprep.subr.mxu0 0.0
    %1143 = vmatpush1.xpose.msra.mxu0 0.0
    %1144 = vmatprep.subr.mxu0 0.0
    %1145 = vmatpush1.xpose.msra.mxu0 0.0
    %1146 = vmatprep.subr.mxu0 0.0
    %1147 = vmatpush1.xpose.msra.mxu0 0.0
    %1148 = vmatprep.subr.mxu0 0.0
    %1149 = vmatpush1.xpose.msra.mxu0 0.0
    %1150 = vmatprep.subr.mxu0 0.0
    %1151 = vmatpush1.xpose.msra.mxu0 0.0
    %1152 = vmatprep.subr.mxu0 0.0
    %1153 = vmatpush1.xpose.msra.mxu0 0.0
    %1154 = vmatprep.subr.mxu0 0.0
    %1155 = vmatpush1.xpose.msra.mxu0 0.0
    %1156 = vmatprep.subr.mxu0 0.0
    %1157 = vmatpush1.xpose.msra.mxu0 0.0
    %1158 = vmatprep.subr.mxu0 0.0
    %1159 = vmatpush1.xpose.msra.mxu0 %v1130
    %1160 = vmatprep.subr.mxu0 0.0
    %1161 = vmatpush1.xpose.msra.mxu0 %v1128
    %1162 = vmatprep.subr.mxu0 0.0
    %1163 = vmatpush1.xpose.msra.mxu0 %v1126
    %1164 = vmatprep.subr.mxu0 0.0
    %1165 = vmatpush2.xpose.msra.mxu0 0.0
    %1166 = vmatprep.subr.mxu0 0.0
    %1167 = vmatpush2.xpose.msra.mxu0 0.0
    %1168 = vmatprep.subr.mxu0 0.0
    %1169 = vmatpush2.xpose.msra.mxu0 0.0
    %1170 = vmatprep.subr.mxu0 0.0
    %1171 = vmatpush2.xpose.msra.mxu0 0.0
    %1172 = vmatprep.subr.mxu0 0.0
    %1173 = vmatpush2.xpose.msra.mxu0 0.0
    %1174 = vmatprep.subr.mxu0 0.0
    %1175 = vmatpush2.xpose.msra.mxu0 0.0
    %1176 = vmatprep.subr.mxu0 0.0
    %1177 = vmatpush2.xpose.msra.mxu0 0.0
    %1178 = vmatprep.subr.mxu0 0.0
    %1179 = vmatpush2.xpose.msra.mxu0 0.0
    %1180 = vmatprep.subr.mxu0 0.0
    %1181 = vmatpush2.xpose.msra.mxu0 0.0
    %1182 = vmatprep.subr.mxu0 0.0
    %1183 = vmatpush2.xpose.msra.mxu0 0.0
    %1184 = vmatprep.subr.mxu0 0.0
    %1185 = vmatpush2.xpose.msra.mxu0 0.0
    %1186 = vmatprep.subr.mxu0 0.0
    %1187 = vmatpush2.xpose.msra.mxu0 0.0
    %1188 = vmatprep.subr.mxu0 0.0
    %1189 = vmatpush2.xpose.msra.mxu0 0.0
    %1190 = vmatprep.subr.mxu0 0.0
    %1191 = vmatpush2.xpose.msra.mxu0 0.0
    %1192 = vmatprep.subr.mxu0 0.0
    %1193 = vmatpush2.xpose.msra.mxu0 0.0
    %1194 = vmatprep.subr.mxu0 0.0
    %1195 = vmatpush2.xpose.msra.mxu0 0.0
    %1196 = vmatprep.mubr.f32.mxu0 0.0
    %1197 = vmatmul.mubr.f32.gmra.mxu0 %v1120
    %v1198 = vpop.f32.mrf.mxu0
    %v1199 = vadd.f32 0.0, %v1198
    %v1200 = vpop.f32.mrf.mxu0
    %1201 = vmatprep.mubr.f32.mxu0 0.0
    %1202 = vmatmul.mubr.f32.gmra.mxu0 %v1122
    %v1203 = vpop.f32.mrf.mxu0
    %v1204 = vadd.f32 0.0, %v1203
    %v1205 = vpop.f32.mrf.mxu0
    %1206 = vmatprep.mubr.f32.mxu0 0.0
    %1207 = vmatmul.mubr.f32.gmra.mxu0 %v1124
    %v1208 = vpop.f32.mrf.mxu0
    %v1209 = vadd.f32 0.0, %v1208
    %v1210 = vpop.f32.mrf.mxu0
    %1211 = vdwg.mxu0
    %v1212 = vsel %vm502, %v1199, -inf
    %1213 = vmax.xlane.f32.xlu0 %v1212
    %v1214 = vpop.xlane.xlu0 %1213
    %v1215 = vsel %vm502, %v1204, -inf
    %1216 = vmax.xlane.f32.xlu0 %v1215
    %v1217 = vpop.xlane.xlu0 %1216
    %v1218 = vsel %vm509, %v1209, -inf
    %1219 = vmax.xlane.f32.xlu0 %v1218
    %v1220 = vpop.xlane.xlu0 %1219
    %v1221 = vsub.f32 %v1199, %v1214
    %v1222 = vsub.f32 %v1204, %v1217
    %v1223 = vsub.f32 %v1209, %v1220
    %v1224 = vmul.f32 %v1221, 1.442695
    %v1225 = vpow.pop %v1224
    %v1226 = vmul.f32 %v1222, 1.442695
    %v1227 = vpow.pop %v1226
    %v1228 = vmul.f32 %v1223, 1.442695
    %v1229 = vpow.pop %v1228
    %v1230 = vsel %vm502, %v1225, 0.0
    %1231 = vadd.xlane.f32.xlu0 %v1230
    %v1232 = vpop.xlane.xlu0 %1231
    %v1233 = vsel %vm502, %v1227, 0.0
    %1234 = vadd.xlane.f32.xlu0 %v1233
    %v1235 = vpop.xlane.xlu0 %1234
    %v1236 = vsel %vm509, %v1229, 0.0
    %1237 = vadd.xlane.f32.xlu0 %v1236
    %v1238 = vpop.xlane.xlu0 %1237
    %v1239 = vrcp.pop %v1232
    %v1240 = vmul.f32 %v1225, %v1239
    %v1241 = vrcp.pop %v1235
    %v1242 = vmul.f32 %v1227, %v1241
    %v1243 = vrcp.pop %v1238
    %v1244 = vmul.f32 %v1229, %v1243
    %1245 = vrot.lane.b32.xlu0 %v377, 40
    %v1246 = vpop.permute.xlu0 %1245
    %1247 = vrot.lane.b32.xlu0 %v382, 40
    %v1248 = vpop.permute.xlu0 %1247
    %1249 = vrot.lane.b32.xlu0 %v387, 40
    %v1250 = vpop.permute.xlu0 %1249
    %v1254 = vsel %vm502, %v1240, 0
    %v1257 = vsel %vm502, %v1242, 0
    %v1260 = vsel %vm502, %v1244, 0
    %v1262 = vsel %vm177, %v1250, 0
    %1264 = vmatprep.subr.mxu0 0.0
    %1265 = vmatpush1.msra.mxu0 0.0
    %1266 = vmatprep.subr.mxu0 0.0
    %1267 = vmatpush1.msra.mxu0 0.0
    %1268 = vmatprep.subr.mxu0 0.0
    %1269 = vmatpush1.msra.mxu0 0.0
    %1270 = vmatprep.subr.mxu0 0.0
    %1271 = vmatpush1.msra.mxu0 0.0
    %1272 = vmatprep.subr.mxu0 0.0
    %1273 = vmatpush1.msra.mxu0 0.0
    %1274 = vmatprep.subr.mxu0 0.0
    %1275 = vmatpush1.msra.mxu0 0.0
    %1276 = vmatprep.subr.mxu0 0.0
    %1277 = vmatpush1.msra.mxu0 0.0
    %1278 = vmatprep.subr.mxu0 0.0
    %1279 = vmatpush1.msra.mxu0 0.0
    %1280 = vmatprep.subr.mxu0 0.0
    %1281 = vmatpush1.msra.mxu0 0.0
    %1282 = vmatprep.subr.mxu0 0.0
    %1283 = vmatpush1.msra.mxu0 0.0
    %1284 = vmatprep.subr.mxu0 0.0
    %1285 = vmatpush1.msra.mxu0 0.0
    %1286 = vmatprep.subr.mxu0 0.0
    %1287 = vmatpush1.msra.mxu0 0.0
    %1288 = vmatprep.subr.mxu0 0.0
    %1289 = vmatpush1.msra.mxu0 0.0
    %1290 = vmatprep.subr.mxu0 0.0
    %1291 = vmatpush1.msra.mxu0 %v1262
    %1292 = vmatprep.subr.mxu0 0.0
    %1293 = vmatpush1.msra.mxu0 %v1248
    %1294 = vmatprep.subr.mxu0 0.0
    %1295 = vmatpush1.msra.mxu0 %v1246
    %1296 = vmatprep.subr.mxu0 0.0
    %1297 = vmatpush2.msra.mxu0 0.0
    %1298 = vmatprep.subr.mxu0 0.0
    %1299 = vmatpush2.msra.mxu0 0.0
    %1300 = vmatprep.subr.mxu0 0.0
    %1301 = vmatpush2.msra.mxu0 0.0
    %1302 = vmatprep.subr.mxu0 0.0
    %1303 = vmatpush2.msra.mxu0 0.0
    %1304 = vmatprep.subr.mxu0 0.0
    %1305 = vmatpush2.msra.mxu0 0.0
    %1306 = vmatprep.subr.mxu0 0.0
    %1307 = vmatpush2.msra.mxu0 0.0
    %1308 = vmatprep.subr.mxu0 0.0
    %1309 = vmatpush2.msra.mxu0 0.0
    %1310 = vmatprep.subr.mxu0 0.0
    %1311 = vmatpush2.msra.mxu0 0.0
    %1312 = vmatprep.subr.mxu0 0.0
    %1313 = vmatpush2.msra.mxu0 0.0
    %1314 = vmatprep.subr.mxu0 0.0
    %1315 = vmatpush2.msra.mxu0 0.0
    %1316 = vmatprep.subr.mxu0 0.0
    %1317 = vmatpush2.msra.mxu0 0.0
    %1318 = vmatprep.subr.mxu0 0.0
    %1319 = vmatpush2.msra.mxu0 0.0
    %1320 = vmatprep.subr.mxu0 0.0
    %1321 = vmatpush2.msra.mxu0 0.0
    %1322 = vmatprep.subr.mxu0 0.0
    %1323 = vmatpush2.msra.mxu0 0.0
    %1324 = vmatprep.subr.mxu0 0.0
    %1325 = vmatpush2.msra.mxu0 0.0
    %1326 = vmatprep.subr.mxu0 0.0
    %1327 = vmatpush2.msra.mxu0 0.0
    %1328 = vmatprep.mubr.f32.mxu0 0.0
    %1329 = vmatmul.mubr.f32.gmra.mxu0 %v1254
    %v1330 = vpop.f32.mrf.mxu0
    %v1331 = vadd.f32 0.0, %v1330
    %v1332 = vpop.f32.mrf.mxu0
    %1333 = vmatprep.mubr.f32.mxu0 0.0
    %1334 = vmatmul.mubr.f32.gmra.mxu0 %v1257
    %v1335 = vpop.f32.mrf.mxu0
    %v1336 = vadd.f32 0.0, %v1335
    %v1337 = vpop.f32.mrf.mxu0
    %1338 = vmatprep.mubr.f32.mxu0 0.0
    %1339 = vmatmul.mubr.f32.gmra.mxu0 %v1260
    %v1340 = vpop.f32.mrf.mxu0
    %v1341 = vadd.f32 0.0, %v1340
    %v1342 = vpop.f32.mrf.mxu0
    %1343 = vdwg.mxu0
    %1347 = vrot.lane.b32.xlu0 %v859, 8
    %v1348 = vpop.permute.xlu0 %1347
    %1349 = vrot.lane.b32.xlu0 %v864, 8
    %v1350 = vpop.permute.xlu0 %1349
    %1351 = vrot.lane.b32.xlu0 %v869, 8
    %v1352 = vpop.permute.xlu0 %1351
    %1359 = vrot.lane.b32.xlu0 %v1095, 16
    %v1360 = vpop.permute.xlu0 %1359
    %1361 = vrot.lane.b32.xlu0 %v1100, 16
    %v1362 = vpop.permute.xlu0 %1361
    %1363 = vrot.lane.b32.xlu0 %v1105, 16
    %v1364 = vpop.permute.xlu0 %1363
    %1371 = vrot.lane.b32.xlu0 %v1331, 24
    %v1372 = vpop.permute.xlu0 %1371
    %1373 = vrot.lane.b32.xlu0 %v1336, 24
    %v1374 = vpop.permute.xlu0 %1373
    %1375 = vrot.lane.b32.xlu0 %v1341, 24
    %v1376 = vpop.permute.xlu0 %1375
    %v1380 = vsel %vm409, %v623, %v1348
    %v1381 = vsel %vm409, %v628, %v1350
    %v1382 = vsel %vm409, %v633, %v1352
    %vm1383 = vcmask 130048
    %v1384 = vsel %vm1383, %v1380, %v1360
    %v1385 = vsel %vm1383, %v1381, %v1362
    %v1386 = vsel %vm1383, %v1382, %v1364
    %vm1387 = vcmask 195584
    %v1388 = vsel %vm1387, %v1384, %v1372
    %v1389 = vsel %vm1387, %v1385, %v1374
    %v1390 = vsel %vm1387, %v1386, %v1376
    %vm1393 = vcmask 1046528
    %v1394 = vrot.slane %v387, 1
    %v1395 = vrot.slane %v392, 1
    %v1396 = vsel %vm1393, %v1394, %v1395
    %v1397 = vrot.slane %v397, 1
    %v1398 = vsel %vm1393, %v1395, %v1397
    %1399 = vrot.lane.b32.xlu0 %v1396, 96
    %v1400 = vpop.permute.xlu0 %1399
    %1401 = vrot.lane.b32.xlu0 %v1398, 96
    %v1402 = vpop.permute.xlu0 %1401
    %1403 = vrot.lane.b32.xlu0 %v1397, 96
    %v1404 = vpop.permute.xlu0 %1403
    %v1405 = vsel %vm409, %v1396, 0
    %v1407 = vsel %vm409, %v1398, 0
    %v1409 = vsel %vm409, %v1397, 0
    %v1411 = vsel %vm409, %v1400, 0
    %v1413 = vsel %vm409, %v1402, 0
    %v1415 = vsel %vm409, %v1404, 0
    %1417 = vmatprep.subr.mxu0 0.0
    %1418 = vmatpush1.xpose.msra.mxu0 0.0
    %1419 = vmatprep.subr.mxu0 0.0
    %1420 = vmatpush1.xpose.msra.mxu0 0.0
    %1421 = vmatprep.subr.mxu0 0.0
    %1422 = vmatpush1.xpose.msra.mxu0 0.0
    %1423 = vmatprep.subr.mxu0 0.0
    %1424 = vmatpush1.xpose.msra.mxu0 0.0
    %1425 = vmatprep.subr.mxu0 0.0
    %1426 = vmatpush1.xpose.msra.mxu0 0.0
    %1427 = vmatprep.subr.mxu0 0.0
    %1428 = vmatpush1.xpose.msra.mxu0 0.0
    %1429 = vmatprep.subr.mxu0 0.0
    %1430 = vmatpush1.xpose.msra.mxu0 0.0
    %1431 = vmatprep.subr.mxu0 0.0
    %1432 = vmatpush1.xpose.msra.mxu0 0.0
    %1433 = vmatprep.subr.mxu0 0.0
    %1434 = vmatpush1.xpose.msra.mxu0 0.0
    %1435 = vmatprep.subr.mxu0 0.0
    %1436 = vmatpush1.xpose.msra.mxu0 0.0
    %1437 = vmatprep.subr.mxu0 0.0
    %1438 = vmatpush1.xpose.msra.mxu0 0.0
    %1439 = vmatprep.subr.mxu0 0.0
    %1440 = vmatpush1.xpose.msra.mxu0 0.0
    %1441 = vmatprep.subr.mxu0 0.0
    %1442 = vmatpush1.xpose.msra.mxu0 0.0
    %1443 = vmatprep.subr.mxu0 0.0
    %1444 = vmatpush1.xpose.msra.mxu0 %v1415
    %1445 = vmatprep.subr.mxu0 0.0
    %1446 = vmatpush1.xpose.msra.mxu0 %v1413
    %1447 = vmatprep.subr.mxu0 0.0
    %1448 = vmatpush1.xpose.msra.mxu0 %v1411
    %1449 = vmatprep.subr.mxu0 0.0
    %1450 = vmatpush2.xpose.msra.mxu0 0.0
    %1451 = vmatprep.subr.mxu0 0.0
    %1452 = vmatpush2.xpose.msra.mxu0 0.0
    %1453 = vmatprep.subr.mxu0 0.0
    %1454 = vmatpush2.xpose.msra.mxu0 0.0
    %1455 = vmatprep.subr.mxu0 0.0
    %1456 = vmatpush2.xpose.msra.mxu0 0.0
    %1457 = vmatprep.subr.mxu0 0.0
    %1458 = vmatpush2.xpose.msra.mxu0 0.0
    %1459 = vmatprep.subr.mxu0 0.0
    %1460 = vmatpush2.xpose.msra.mxu0 0.0
    %1461 = vmatprep.subr.mxu0 0.0
    %1462 = vmatpush2.xpose.msra.mxu0 0.0
    %1463 = vmatprep.subr.mxu0 0.0
    %1464 = vmatpush2.xpose.msra.mxu0 0.0
    %1465 = vmatprep.subr.mxu0 0.0
    %1466 = vmatpush2.xpose.msra.mxu0 0.0
    %1467 = vmatprep.subr.mxu0 0.0
    %1468 = vmatpush2.xpose.msra.mxu0 0.0
    %1469 = vmatprep.subr.mxu0 0.0
    %1470 = vmatpush2.xpose.msra.mxu0 0.0
    %1471 = vmatprep.subr.mxu0 0.0
    %1472 = vmatpush2.xpose.msra.mxu0 0.0
    %1473 = vmatprep.subr.mxu0 0.0
    %1474 = vmatpush2.xpose.msra.mxu0 0.0
    %1475 = vmatprep.subr.mxu0 0.0
    %1476 = vmatpush2.xpose.msra.mxu0 0.0
    %1477 = vmatprep.subr.mxu0 0.0
    %1478 = vmatpush2.xpose.msra.mxu0 0.0
    %1479 = vmatprep.subr.mxu0 0.0
    %1480 = vmatpush2.xpose.msra.mxu0 0.0
    %1481 = vmatprep.mubr.f32.mxu0 0.0
    %1482 = vmatmul.mubr.f32.gmra.mxu0 %v1405
    %v1483 = vpop.f32.mrf.mxu0
    %v1484 = vadd.f32 0.0, %v1483
    %v1485 = vpop.f32.mrf.mxu0
    %1486 = vmatprep.mubr.f32.mxu0 0.0
    %1487 = vmatmul.mubr.f32.gmra.mxu0 %v1407
    %v1488 = vpop.f32.mrf.mxu0
    %v1489 = vadd.f32 0.0, %v1488
    %v1490 = vpop.f32.mrf.mxu0
    %1491 = vmatprep.mubr.f32.mxu0 0.0
    %1492 = vmatmul.mubr.f32.gmra.mxu0 %v1409
    %v1493 = vpop.f32.mrf.mxu0
    %v1494 = vadd.f32 0.0, %v1493
    %v1495 = vpop.f32.mrf.mxu0
    %1496 = vdwg.mxu0
    %v1497 = vsel %vm502, %v1484, -inf
    %1498 = vmax.xlane.f32.xlu0 %v1497
    %v1499 = vpop.xlane.xlu0 %1498
    %v1500 = vsel %vm502, %v1489, -inf
    %1501 = vmax.xlane.f32.xlu0 %v1500
    %v1502 = vpop.xlane.xlu0 %1501
    %v1503 = vsel %vm509, %v1494, -inf
    %1504 = vmax.xlane.f32.xlu0 %v1503
    %v1505 = vpop.xlane.xlu0 %1504
    %v1506 = vsub.f32 %v1484, %v1499
    %v1507 = vsub.f32 %v1489, %v1502
    %v1508 = vsub.f32 %v1494, %v1505
    %v1509 = vmul.f32 %v1506, 1.442695
    %v1510 = vpow.pop %v1509
    %v1511 = vmul.f32 %v1507, 1.442695
    %v1512 = vpow.pop %v1511
    %v1513 = vmul.f32 %v1508, 1.442695
    %v1514 = vpow.pop %v1513
    %v1515 = vsel %vm502, %v1510, 0.0
    %1516 = vadd.xlane.f32.xlu0 %v1515
    %v1517 = vpop.xlane.xlu0 %1516
    %v1518 = vsel %vm502, %v1512, 0.0
    %1519 = vadd.xlane.f32.xlu0 %v1518
    %v1520 = vpop.xlane.xlu0 %1519
    %v1521 = vsel %vm509, %v1514, 0.0
    %1522 = vadd.xlane.f32.xlu0 %v1521
    %v1523 = vpop.xlane.xlu0 %1522
    %v1524 = vrcp.pop %v1517
    %v1525 = vmul.f32 %v1510, %v1524
    %v1526 = vrcp.pop %v1520
    %v1527 = vmul.f32 %v1512, %v1526
    %v1528 = vrcp.pop %v1523
    %v1529 = vmul.f32 %v1514, %v1528
    %1530 = vrot.lane.b32.xlu0 %v1396, 64
    %v1531 = vpop.permute.xlu0 %1530
    %1532 = vrot.lane.b32.xlu0 %v1398, 64
    %v1533 = vpop.permute.xlu0 %1532
    %1534 = vrot.lane.b32.xlu0 %v1397, 64
    %v1535 = vpop.permute.xlu0 %1534
    %v1539 = vsel %vm502, %v1525, 0
    %v1542 = vsel %vm502, %v1527, 0
    %v1545 = vsel %vm502, %v1529, 0
    %v1547 = vsel %vm177, %v1535, 0
    %1549 = vmatprep.subr.mxu0 0.0
    %1550 = vmatpush1.msra.mxu0 0.0
    %1551 = vmatprep.subr.mxu0 0.0
    %1552 = vmatpush1.msra.mxu0 0.0
    %1553 = vmatprep.subr.mxu0 0.0
    %1554 = vmatpush1.msra.mxu0 0.0
    %1555 = vmatprep.subr.mxu0 0.0
    %1556 = vmatpush1.msra.mxu0 0.0
    %1557 = vmatprep.subr.mxu0 0.0
    %1558 = vmatpush1.msra.mxu0 0.0
    %1559 = vmatprep.subr.mxu0 0.0
    %1560 = vmatpush1.msra.mxu0 0.0
    %1561 = vmatprep.subr.mxu0 0.0
    %1562 = vmatpush1.msra.mxu0 0.0
    %1563 = vmatprep.subr.mxu0 0.0
    %1564 = vmatpush1.msra.mxu0 0.0
    %1565 = vmatprep.subr.mxu0 0.0
    %1566 = vmatpush1.msra.mxu0 0.0
    %1567 = vmatprep.subr.mxu0 0.0
    %1568 = vmatpush1.msra.mxu0 0.0
    %1569 = vmatprep.subr.mxu0 0.0
    %1570 = vmatpush1.msra.mxu0 0.0
    %1571 = vmatprep.subr.mxu0 0.0
    %1572 = vmatpush1.msra.mxu0 0.0
    %1573 = vmatprep.subr.mxu0 0.0
    %1574 = vmatpush1.msra.mxu0 0.0
    %1575 = vmatprep.subr.mxu0 0.0
    %1576 = vmatpush1.msra.mxu0 %v1547
    %1577 = vmatprep.subr.mxu0 0.0
    %1578 = vmatpush1.msra.mxu0 %v1533
    %1579 = vmatprep.subr.mxu0 0.0
    %1580 = vmatpush1.msra.mxu0 %v1531
    %1581 = vmatprep.subr.mxu0 0.0
    %1582 = vmatpush2.msra.mxu0 0.0
    %1583 = vmatprep.subr.mxu0 0.0
    %1584 = vmatpush2.msra.mxu0 0.0
    %1585 = vmatprep.subr.mxu0 0.0
    %1586 = vmatpush2.msra.mxu0 0.0
    %1587 = vmatprep.subr.mxu0 0.0
    %1588 = vmatpush2.msra.mxu0 0.0
    %1589 = vmatprep.subr.mxu0 0.0
    %1590 = vmatpush2.msra.mxu0 0.0
    %1591 = vmatprep.subr.mxu0 0.0
    %1592 = vmatpush2.msra.mxu0 0.0
    %1593 = vmatprep.subr.mxu0 0.0
    %1594 = vmatpush2.msra.mxu0 0.0
    %1595 = vmatprep.subr.mxu0 0.0
    %1596 = vmatpush2.msra.mxu0 0.0
    %1597 = vmatprep.subr.mxu0 0.0
    %1598 = vmatpush2.msra.mxu0 0.0
    %1599 = vmatprep.subr.mxu0 0.0
    %1600 = vmatpush2.msra.mxu0 0.0
    %1601 = vmatprep.subr.mxu0 0.0
    %1602 = vmatpush2.msra.mxu0 0.0
    %1603 = vmatprep.subr.mxu0 0.0
    %1604 = vmatpush2.msra.mxu0 0.0
    %1605 = vmatprep.subr.mxu0 0.0
    %1606 = vmatpush2.msra.mxu0 0.0
    %1607 = vmatprep.subr.mxu0 0.0
    %1608 = vmatpush2.msra.mxu0 0.0
    %1609 = vmatprep.subr.mxu0 0.0
    %1610 = vmatpush2.msra.mxu0 0.0
    %1611 = vmatprep.subr.mxu0 0.0
    %1612 = vmatpush2.msra.mxu0 0.0
    %1613 = vmatprep.mubr.f32.mxu0 0.0
    %1614 = vmatmul.mubr.f32.gmra.mxu0 %v1539
    %v1615 = vpop.f32.mrf.mxu0
    %v1616 = vadd.f32 0.0, %v1615
    %v1617 = vpop.f32.mrf.mxu0
    %1618 = vmatprep.mubr.f32.mxu0 0.0
    %1619 = vmatmul.mubr.f32.gmra.mxu0 %v1542
    %v1620 = vpop.f32.mrf.mxu0
    %v1621 = vadd.f32 0.0, %v1620
    %v1622 = vpop.f32.mrf.mxu0
    %1623 = vmatprep.mubr.f32.mxu0 0.0
    %1624 = vmatmul.mubr.f32.gmra.mxu0 %v1545
    %v1625 = vpop.f32.mrf.mxu0
    %v1626 = vadd.f32 0.0, %v1625
    %v1627 = vpop.f32.mrf.mxu0
    %1628 = vdwg.mxu0
    %1629 = vrot.lane.b32.xlu0 %v1396, 120
    %v1630 = vpop.permute.xlu0 %1629
    %1631 = vrot.lane.b32.xlu0 %v1398, 120
    %v1632 = vpop.permute.xlu0 %1631
    %1633 = vrot.lane.b32.xlu0 %v1397, 120
    %v1634 = vpop.permute.xlu0 %1633
    %1635 = vrot.lane.b32.xlu0 %v1396, 88
    %v1636 = vpop.permute.xlu0 %1635
    %1637 = vrot.lane.b32.xlu0 %v1398, 88
    %v1638 = vpop.permute.xlu0 %1637
    %1639 = vrot.lane.b32.xlu0 %v1397, 88
    %v1640 = vpop.permute.xlu0 %1639
    %v1641 = vsel %vm409, %v1630, 0
    %v1643 = vsel %vm409, %v1632, 0
    %v1645 = vsel %vm409, %v1634, 0
    %v1647 = vsel %vm409, %v1636, 0
    %v1649 = vsel %vm409, %v1638, 0
    %v1651 = vsel %vm409, %v1640, 0
    %1653 = vmatprep.subr.mxu0 0.0
    %1654 = vmatpush1.xpose.msra.mxu0 0.0
    %1655 = vmatprep.subr.mxu0 0.0
    %1656 = vmatpush1.xpose.msra.mxu0 0.0
    %1657 = vmatprep.subr.mxu0 0.0
    %1658 = vmatpush1.xpose.msra.mxu0 0.0
    %1659 = vmatprep.subr.mxu0 0.0
    %1660 = vmatpush1.xpose.msra.mxu0 0.0
    %1661 = vmatprep.subr.mxu0 0.0
    %1662 = vmatpush1.xpose.msra.mxu0 0.0
    %1663 = vmatprep.subr.mxu0 0.0
    %1664 = vmatpush1.xpose.msra.mxu0 0.0
    %1665 = vmatprep.subr.mxu0 0.0
    %1666 = vmatpush1.xpose.msra.mxu0 0.0
    %1667 = vmatprep.subr.mxu0 0.0
    %1668 = vmatpush1.xpose.msra.mxu0 0.0
    %1669 = vmatprep.subr.mxu0 0.0
    %1670 = vmatpush1.xpose.msra.mxu0 0.0
    %1671 = vmatprep.subr.mxu0 0.0
    %1672 = vmatpush1.xpose.msra.mxu0 0.0
    %1673 = vmatprep.subr.mxu0 0.0
    %1674 = vmatpush1.xpose.msra.mxu0 0.0
    %1675 = vmatprep.subr.mxu0 0.0
    %1676 = vmatpush1.xpose.msra.mxu0 0.0
    %1677 = vmatprep.subr.mxu0 0.0
    %1678 = vmatpush1.xpose.msra.mxu0 0.0
    %1679 = vmatprep.subr.mxu0 0.0
    %1680 = vmatpush1.xpose.msra.mxu0 %v1651
    %1681 = vmatprep.subr.mxu0 0.0
    %1682 = vmatpush1.xpose.msra.mxu0 %v1649
    %1683 = vmatprep.subr.mxu0 0.0
    %1684 = vmatpush1.xpose.msra.mxu0 %v1647
    %1685 = vmatprep.subr.mxu0 0.0
    %1686 = vmatpush2.xpose.msra.mxu0 0.0
    %1687 = vmatprep.subr.mxu0 0.0
    %1688 = vmatpush2.xpose.msra.mxu0 0.0
    %1689 = vmatprep.subr.mxu0 0.0
    %1690 = vmatpush2.xpose.msra.mxu0 0.0
    %1691 = vmatprep.subr.mxu0 0.0
    %1692 = vmatpush2.xpose.msra.mxu0 0.0
    %1693 = vmatprep.subr.mxu0 0.0
    %1694 = vmatpush2.xpose.msra.mxu0 0.0
    %1695 = vmatprep.subr.mxu0 0.0
    %1696 = vmatpush2.xpose.msra.mxu0 0.0
    %1697 = vmatprep.subr.mxu0 0.0
    %1698 = vmatpush2.xpose.msra.mxu0 0.0
    %1699 = vmatprep.subr.mxu0 0.0
    %1700 = vmatpush2.xpose.msra.mxu0 0.0
    %1701 = vmatprep.subr.mxu0 0.0
    %1702 = vmatpush2.xpose.msra.mxu0 0.0
    %1703 = vmatprep.subr.mxu0 0.0
    %1704 = vmatpush2.xpose.msra.mxu0 0.0
    %1705 = vmatprep.subr.mxu0 0.0
    %1706 = vmatpush2.xpose.msra.mxu0 0.0
    %1707 = vmatprep.subr.mxu0 0.0
    %1708 = vmatpush2.xpose.msra.mxu0 0.0
    %1709 = vmatprep.subr.mxu0 0.0
    %1710 = vmatpush2.xpose.msra.mxu0 0.0
    %1711 = vmatprep.subr.mxu0 0.0
    %1712 = vmatpush2.xpose.msra.mxu0 0.0
    %1713 = vmatprep.subr.mxu0 0.0
    %1714 = vmatpush2.xpose.msra.mxu0 0.0
    %1715 = vmatprep.subr.mxu0 0.0
    %1716 = vmatpush2.xpose.msra.mxu0 0.0
    %1717 = vmatprep.mubr.f32.mxu0 0.0
    %1718 = vmatmul.mubr.f32.gmra.mxu0 %v1641
    %v1719 = vpop.f32.mrf.mxu0
    %v1720 = vadd.f32 0.0, %v1719
    %v1721 = vpop.f32.mrf.mxu0
    %1722 = vmatprep.mubr.f32.mxu0 0.0
    %1723 = vmatmul.mubr.f32.gmra.mxu0 %v1643
    %v1724 = vpop.f32.mrf.mxu0
    %v1725 = vadd.f32 0.0, %v1724
    %v1726 = vpop.f32.mrf.mxu0
    %1727 = vmatprep.mubr.f32.mxu0 0.0
    %1728 = vmatmul.mubr.f32.gmra.mxu0 %v1645
    %v1729 = vpop.f32.mrf.mxu0
    %v1730 = vadd.f32 0.0, %v1729
    %v1731 = vpop.f32.mrf.mxu0
    %1732 = vdwg.mxu0
    %v1733 = vsel %vm502, %v1720, -inf
    %1734 = vmax.xlane.f32.xlu0 %v1733
    %v1735 = vpop.xlane.xlu0 %1734
    %v1736 = vsel %vm502, %v1725, -inf
    %1737 = vmax.xlane.f32.xlu0 %v1736
    %v1738 = vpop.xlane.xlu0 %1737
    %v1739 = vsel %vm509, %v1730, -inf
    %1740 = vmax.xlane.f32.xlu0 %v1739
    %v1741 = vpop.xlane.xlu0 %1740
    %v1742 = vsub.f32 %v1720, %v1735
    %v1743 = vsub.f32 %v1725, %v1738
    %v1744 = vsub.f32 %v1730, %v1741
    %v1745 = vmul.f32 %v1742, 1.442695
    %v1746 = vpow.pop %v1745
    %v1747 = vmul.f32 %v1743, 1.442695
    %v1748 = vpow.pop %v1747
    %v1749 = vmul.f32 %v1744, 1.442695
    %v1750 = vpow.pop %v1749
    %v1751 = vsel %vm502, %v1746, 0.0
    %1752 = vadd.xlane.f32.xlu0 %v1751
    %v1753 = vpop.xlane.xlu0 %1752
    %v1754 = vsel %vm502, %v1748, 0.0
    %1755 = vadd.xlane.f32.xlu0 %v1754
    %v1756 = vpop.xlane.xlu0 %1755
    %v1757 = vsel %vm509, %v1750, 0.0
    %1758 = vadd.xlane.f32.xlu0 %v1757
    %v1759 = vpop.xlane.xlu0 %1758
    %v1760 = vrcp.pop %v1753
    %v1761 = vmul.f32 %v1746, %v1760
    %v1762 = vrcp.pop %v1756
    %v1763 = vmul.f32 %v1748, %v1762
    %v1764 = vrcp.pop %v1759
    %v1765 = vmul.f32 %v1750, %v1764
    %1766 = vrot.lane.b32.xlu0 %v1396, 56
    %v1767 = vpop.permute.xlu0 %1766
    %1768 = vrot.lane.b32.xlu0 %v1398, 56
    %v1769 = vpop.permute.xlu0 %1768
    %1770 = vrot.lane.b32.xlu0 %v1397, 56
    %v1771 = vpop.permute.xlu0 %1770
    %v1775 = vsel %vm502, %v1761, 0
    %v1778 = vsel %vm502, %v1763, 0
    %v1781 = vsel %vm502, %v1765, 0
    %v1783 = vsel %vm177, %v1771, 0
    %1785 = vmatprep.subr.mxu0 0.0
    %1786 = vmatpush1.msra.mxu0 0.0
    %1787 = vmatprep.subr.mxu0 0.0
    %1788 = vmatpush1.msra.mxu0 0.0
    %1789 = vmatprep.subr.mxu0 0.0
    %1790 = vmatpush1.msra.mxu0 0.0
    %1791 = vmatprep.subr.mxu0 0.0
    %1792 = vmatpush1.msra.mxu0 0.0
    %1793 = vmatprep.subr.mxu0 0.0
    %1794 = vmatpush1.msra.mxu0 0.0
    %1795 = vmatprep.subr.mxu0 0.0
    %1796 = vmatpush1.msra.mxu0 0.0
    %1797 = vmatprep.subr.mxu0 0.0
    %1798 = vmatpush1.msra.mxu0 0.0
    %1799 = vmatprep.subr.mxu0 0.0
    %1800 = vmatpush1.msra.mxu0 0.0
    %1801 = vmatprep.subr.mxu0 0.0
    %1802 = vmatpush1.msra.mxu0 0.0
    %1803 = vmatprep.subr.mxu0 0.0
    %1804 = vmatpush1.msra.mxu0 0.0
    %1805 = vmatprep.subr.mxu0 0.0
    %1806 = vmatpush1.msra.mxu0 0.0
    %1807 = vmatprep.subr.mxu0 0.0
    %1808 = vmatpush1.msra.mxu0 0.0
    %1809 = vmatprep.subr.mxu0 0.0
    %1810 = vmatpush1.msra.mxu0 0.0
    %1811 = vmatprep.subr.mxu0 0.0
    %1812 = vmatpush1.msra.mxu0 %v1783
    %1813 = vmatprep.subr.mxu0 0.0
    %1814 = vmatpush1.msra.mxu0 %v1769
    %1815 = vmatprep.subr.mxu0 0.0
    %1816 = vmatpush1.msra.mxu0 %v1767
    %1817 = vmatprep.subr.mxu0 0.0
    %1818 = vmatpush2.msra.mxu0 0.0
    %1819 = vmatprep.subr.mxu0 0.0
    %1820 = vmatpush2.msra.mxu0 0.0
    %1821 = vmatprep.subr.mxu0 0.0
    %1822 = vmatpush2.msra.mxu0 0.0
    %1823 = vmatprep.subr.mxu0 0.0
    %1824 = vmatpush2.msra.mxu0 0.0
    %1825 = vmatprep.subr.mxu0 0.0
    %1826 = vmatpush2.msra.mxu0 0.0
    %1827 = vmatprep.subr.mxu0 0.0
    %1828 = vmatpush2.msra.mxu0 0.0
    %1829 = vmatprep.subr.mxu0 0.0
    %1830 = vmatpush2.msra.mxu0 0.0
    %1831 = vmatprep.subr.mxu0 0.0
    %1832 = vmatpush2.msra.mxu0 0.0
    %1833 = vmatprep.subr.mxu0 0.0
    %1834 = vmatpush2.msra.mxu0 0.0
    %1835 = vmatprep.subr.mxu0 0.0
    %1836 = vmatpush2.msra.mxu0 0.0
    %1837 = vmatprep.subr.mxu0 0.0
    %1838 = vmatpush2.msra.mxu0 0.0
    %1839 = vmatprep.subr.mxu0 0.0
    %1840 = vmatpush2.msra.mxu0 0.0
    %1841 = vmatprep.subr.mxu0 0.0
    %1842 = vmatpush2.msra.mxu0 0.0
    %1843 = vmatprep.subr.mxu0 0.0
    %1844 = vmatpush2.msra.mxu0 0.0
    %1845 = vmatprep.subr.mxu0 0.0
    %1846 = vmatpush2.msra.mxu0 0.0
    %1847 = vmatprep.subr.mxu0 0.0
    %1848 = vmatpush2.msra.mxu0 0.0
    %1849 = vmatprep.mubr.f32.mxu0 0.0
    %1850 = vmatmul.mubr.f32.gmra.mxu0 %v1775
    %v1851 = vpop.f32.mrf.mxu0
    %v1852 = vadd.f32 0.0, %v1851
    %v1853 = vpop.f32.mrf.mxu0
    %1854 = vmatprep.mubr.f32.mxu0 0.0
    %1855 = vmatmul.mubr.f32.gmra.mxu0 %v1778
    %v1856 = vpop.f32.mrf.mxu0
    %v1857 = vadd.f32 0.0, %v1856
    %v1858 = vpop.f32.mrf.mxu0
    %1859 = vmatprep.mubr.f32.mxu0 0.0
    %1860 = vmatmul.mubr.f32.gmra.mxu0 %v1781
    %v1861 = vpop.f32.mrf.mxu0
    %v1862 = vadd.f32 0.0, %v1861
    %v1863 = vpop.f32.mrf.mxu0
    %1864 = vdwg.mxu0
    %1865 = vrot.lane.b32.xlu0 %v1396, 112
    %v1866 = vpop.permute.xlu0 %1865
    %1867 = vrot.lane.b32.xlu0 %v1398, 112
    %v1868 = vpop.permute.xlu0 %1867
    %1869 = vrot.lane.b32.xlu0 %v1397, 112
    %v1870 = vpop.permute.xlu0 %1869
    %1871 = vrot.lane.b32.xlu0 %v1396, 80
    %v1872 = vpop.permute.xlu0 %1871
    %1873 = vrot.lane.b32.xlu0 %v1398, 80
    %v1874 = vpop.permute.xlu0 %1873
    %1875 = vrot.lane.b32.xlu0 %v1397, 80
    %v1876 = vpop.permute.xlu0 %1875
    %v1877 = vsel %vm409, %v1866, 0
    %v1879 = vsel %vm409, %v1868, 0
    %v1881 = vsel %vm409, %v1870, 0
    %v1883 = vsel %vm409, %v1872, 0
    %v1885 = vsel %vm409, %v1874, 0
    %v1887 = vsel %vm409, %v1876, 0
    %1889 = vmatprep.subr.mxu0 0.0
    %1890 = vmatpush1.xpose.msra.mxu0 0.0
    %1891 = vmatprep.subr.mxu0 0.0
    %1892 = vmatpush1.xpose.msra.mxu0 0.0
    %1893 = vmatprep.subr.mxu0 0.0
    %1894 = vmatpush1.xpose.msra.mxu0 0.0
    %1895 = vmatprep.subr.mxu0 0.0
    %1896 = vmatpush1.xpose.msra.mxu0 0.0
    %1897 = vmatprep.subr.mxu0 0.0
    %1898 = vmatpush1.xpose.msra.mxu0 0.0
    %1899 = vmatprep.subr.mxu0 0.0
    %1900 = vmatpush1.xpose.msra.mxu0 0.0
    %1901 = vmatprep.subr.mxu0 0.0
    %1902 = vmatpush1.xpose.msra.mxu0 0.0
    %1903 = vmatprep.subr.mxu0 0.0
    %1904 = vmatpush1.xpose.msra.mxu0 0.0
    %1905 = vmatprep.subr.mxu0 0.0
    %1906 = vmatpush1.xpose.msra.mxu0 0.0
    %1907 = vmatprep.subr.mxu0 0.0
    %1908 = vmatpush1.xpose.msra.mxu0 0.0
    %1909 = vmatprep.subr.mxu0 0.0
    %1910 = vmatpush1.xpose.msra.mxu0 0.0
    %1911 = vmatprep.subr.mxu0 0.0
    %1912 = vmatpush1.xpose.msra.mxu0 0.0
    %1913 = vmatprep.subr.mxu0 0.0
    %1914 = vmatpush1.xpose.msra.mxu0 0.0
    %1915 = vmatprep.subr.mxu0 0.0
    %1916 = vmatpush1.xpose.msra.mxu0 %v1887
    %1917 = vmatprep.subr.mxu0 0.0
    %1918 = vmatpush1.xpose.msra.mxu0 %v1885
    %1919 = vmatprep.subr.mxu0 0.0
    %1920 = vmatpush1.xpose.msra.mxu0 %v1883
    %1921 = vmatprep.subr.mxu0 0.0
    %1922 = vmatpush2.xpose.msra.mxu0 0.0
    %1923 = vmatprep.subr.mxu0 0.0
    %1924 = vmatpush2.xpose.msra.mxu0 0.0
    %1925 = vmatprep.subr.mxu0 0.0
    %1926 = vmatpush2.xpose.msra.mxu0 0.0
    %1927 = vmatprep.subr.mxu0 0.0
    %1928 = vmatpush2.xpose.msra.mxu0 0.0
    %1929 = vmatprep.subr.mxu0 0.0
    %1930 = vmatpush2.xpose.msra.mxu0 0.0
    %1931 = vmatprep.subr.mxu0 0.0
    %1932 = vmatpush2.xpose.msra.mxu0 0.0
    %1933 = vmatprep.subr.mxu0 0.0
    %1934 = vmatpush2.xpose.msra.mxu0 0.0
    %1935 = vmatprep.subr.mxu0 0.0
    %1936 = vmatpush2.xpose.msra.mxu0 0.0
    %1937 = vmatprep.subr.mxu0 0.0
    %1938 = vmatpush2.xpose.msra.mxu0 0.0
    %1939 = vmatprep.subr.mxu0 0.0
    %1940 = vmatpush2.xpose.msra.mxu0 0.0
    %1941 = vmatprep.subr.mxu0 0.0
    %1942 = vmatpush2.xpose.msra.mxu0 0.0
    %1943 = vmatprep.subr.mxu0 0.0
    %1944 = vmatpush2.xpose.msra.mxu0 0.0
    %1945 = vmatprep.subr.mxu0 0.0
    %1946 = vmatpush2.xpose.msra.mxu0 0.0
    %1947 = vmatprep.subr.mxu0 0.0
    %1948 = vmatpush2.xpose.msra.mxu0 0.0
    %1949 = vmatprep.subr.mxu0 0.0
    %1950 = vmatpush2.xpose.msra.mxu0 0.0
    %1951 = vmatprep.subr.mxu0 0.0
    %1952 = vmatpush2.xpose.msra.mxu0 0.0
    %1953 = vmatprep.mubr.f32.mxu0 0.0
    %1954 = vmatmul.mubr.f32.gmra.mxu0 %v1877
    %v1955 = vpop.f32.mrf.mxu0
    %v1956 = vadd.f32 0.0, %v1955
    %v1957 = vpop.f32.mrf.mxu0
    %1958 = vmatprep.mubr.f32.mxu0 0.0
    %1959 = vmatmul.mubr.f32.gmra.mxu0 %v1879
    %v1960 = vpop.f32.mrf.mxu0
    %v1961 = vadd.f32 0.0, %v1960
    %v1962 = vpop.f32.mrf.mxu0
    %1963 = vmatprep.mubr.f32.mxu0 0.0
    %1964 = vmatmul.mubr.f32.gmra.mxu0 %v1881
    %v1965 = vpop.f32.mrf.mxu0
    %v1966 = vadd.f32 0.0, %v1965
    %v1967 = vpop.f32.mrf.mxu0
    %1968 = vdwg.mxu0
    %v1969 = vsel %vm502, %v1956, -inf
    %1970 = vmax.xlane.f32.xlu0 %v1969
    %v1971 = vpop.xlane.xlu0 %1970
    %v1972 = vsel %vm502, %v1961, -inf
    %1973 = vmax.xlane.f32.xlu0 %v1972
    %v1974 = vpop.xlane.xlu0 %1973
    %v1975 = vsel %vm509, %v1966, -inf
    %1976 = vmax.xlane.f32.xlu0 %v1975
    %v1977 = vpop.xlane.xlu0 %1976
    %v1978 = vsub.f32 %v1956, %v1971
    %v1979 = vsub.f32 %v1961, %v1974
    %v1980 = vsub.f32 %v1966, %v1977
    %v1981 = vmul.f32 %v1978, 1.442695
    %v1982 = vpow.pop %v1981
    %v1983 = vmul.f32 %v1979, 1.442695
    %v1984 = vpow.pop %v1983
    %v1985 = vmul.f32 %v1980, 1.442695
    %v1986 = vpow.pop %v1985
    %v1987 = vsel %vm502, %v1982, 0.0
    %1988 = vadd.xlane.f32.xlu0 %v1987
    %v1989 = vpop.xlane.xlu0 %1988
    %v1990 = vsel %vm502, %v1984, 0.0
    %1991 = vadd.xlane.f32.xlu0 %v1990
    %v1992 = vpop.xlane.xlu0 %1991
    %v1993 = vsel %vm509, %v1986, 0.0
    %1994 = vadd.xlane.f32.xlu0 %v1993
    %v1995 = vpop.xlane.xlu0 %1994
    %v1996 = vrcp.pop %v1989
    %v1997 = vmul.f32 %v1982, %v1996
    %v1998 = vrcp.pop %v1992
    %v1999 = vmul.f32 %v1984, %v1998
    %v2000 = vrcp.pop %v1995
    %v2001 = vmul.f32 %v1986, %v2000
    %2002 = vrot.lane.b32.xlu0 %v1396, 48
    %v2003 = vpop.permute.xlu0 %2002
    %2004 = vrot.lane.b32.xlu0 %v1398, 48
    %v2005 = vpop.permute.xlu0 %2004
    %2006 = vrot.lane.b32.xlu0 %v1397, 48
    %v2007 = vpop.permute.xlu0 %2006
    %v2011 = vsel %vm502, %v1997, 0
    %v2014 = vsel %vm502, %v1999, 0
    %v2017 = vsel %vm502, %v2001, 0
    %v2019 = vsel %vm177, %v2007, 0
    %2021 = vmatprep.subr.mxu0 0.0
    %2022 = vmatpush1.msra.mxu0 0.0
    %2023 = vmatprep.subr.mxu0 0.0
    %2024 = vmatpush1.msra.mxu0 0.0
    %2025 = vmatprep.subr.mxu0 0.0
    %2026 = vmatpush1.msra.mxu0 0.0
    %2027 = vmatprep.subr.mxu0 0.0
    %2028 = vmatpush1.msra.mxu0 0.0
    %2029 = vmatprep.subr.mxu0 0.0
    %2030 = vmatpush1.msra.mxu0 0.0
    %2031 = vmatprep.subr.mxu0 0.0
    %2032 = vmatpush1.msra.mxu0 0.0
    %2033 = vmatprep.subr.mxu0 0.0
    %2034 = vmatpush1.msra.mxu0 0.0
    %2035 = vmatprep.subr.mxu0 0.0
    %2036 = vmatpush1.msra.mxu0 0.0
    %2037 = vmatprep.subr.mxu0 0.0
    %2038 = vmatpush1.msra.mxu0 0.0
    %2039 = vmatprep.subr.mxu0 0.0
    %2040 = vmatpush1.msra.mxu0 0.0
    %2041 = vmatprep.subr.mxu0 0.0
    %2042 = vmatpush1.msra.mxu0 0.0
    %2043 = vmatprep.subr.mxu0 0.0
    %2044 = vmatpush1.msra.mxu0 0.0
    %2045 = vmatprep.subr.mxu0 0.0
    %2046 = vmatpush1.msra.mxu0 0.0
    %2047 = vmatprep.subr.mxu0 0.0
    %2048 = vmatpush1.msra.mxu0 %v2019
    %2049 = vmatprep.subr.mxu0 0.0
    %2050 = vmatpush1.msra.mxu0 %v2005
    %2051 = vmatprep.subr.mxu0 0.0
    %2052 = vmatpush1.msra.mxu0 %v2003
    %2053 = vmatprep.subr.mxu0 0.0
    %2054 = vmatpush2.msra.mxu0 0.0
    %2055 = vmatprep.subr.mxu0 0.0
    %2056 = vmatpush2.msra.mxu0 0.0
    %2057 = vmatprep.subr.mxu0 0.0
    %2058 = vmatpush2.msra.mxu0 0.0
    %2059 = vmatprep.subr.mxu0 0.0
    %2060 = vmatpush2.msra.mxu0 0.0
    %2061 = vmatprep.subr.mxu0 0.0
    %2062 = vmatpush2.msra.mxu0 0.0
    %2063 = vmatprep.subr.mxu0 0.0
    %2064 = vmatpush2.msra.mxu0 0.0
    %2065 = vmatprep.subr.mxu0 0.0
    %2066 = vmatpush2.msra.mxu0 0.0
    %2067 = vmatprep.subr.mxu0 0.0
    %2068 = vmatpush2.msra.mxu0 0.0
    %2069 = vmatprep.subr.mxu0 0.0
    %2070 = vmatpush2.msra.mxu0 0.0
    %2071 = vmatprep.subr.mxu0 0.0
    %2072 = vmatpush2.msra.mxu0 0.0
    %2073 = vmatprep.subr.mxu0 0.0
    %2074 = vmatpush2.msra.mxu0 0.0
    %2075 = vmatprep.subr.mxu0 0.0
    %2076 = vmatpush2.msra.mxu0 0.0
    %2077 = vmatprep.subr.mxu0 0.0
    %2078 = vmatpush2.msra.mxu0 0.0
    %2079 = vmatprep.subr.mxu0 0.0
    %2080 = vmatpush2.msra.mxu0 0.0
    %2081 = vmatprep.subr.mxu0 0.0
    %2082 = vmatpush2.msra.mxu0 0.0
    %2083 = vmatprep.subr.mxu0 0.0
    %2084 = vmatpush2.msra.mxu0 0.0
    %2085 = vmatprep.mubr.f32.mxu0 0.0
    %2086 = vmatmul.mubr.f32.gmra.mxu0 %v2011
    %v2087 = vpop.f32.mrf.mxu0
    %v2088 = vadd.f32 0.0, %v2087
    %v2089 = vpop.f32.mrf.mxu0
    %2090 = vmatprep.mubr.f32.mxu0 0.0
    %2091 = vmatmul.mubr.f32.gmra.mxu0 %v2014
    %v2092 = vpop.f32.mrf.mxu0
    %v2093 = vadd.f32 0.0, %v2092
    %v2094 = vpop.f32.mrf.mxu0
    %2095 = vmatprep.mubr.f32.mxu0 0.0
    %2096 = vmatmul.mubr.f32.gmra.mxu0 %v2017
    %v2097 = vpop.f32.mrf.mxu0
    %v2098 = vadd.f32 0.0, %v2097
    %v2099 = vpop.f32.mrf.mxu0
    %2100 = vdwg.mxu0
    %2101 = vrot.lane.b32.xlu0 %v1396, 104
    %v2102 = vpop.permute.xlu0 %2101
    %2103 = vrot.lane.b32.xlu0 %v1398, 104
    %v2104 = vpop.permute.xlu0 %2103
    %2105 = vrot.lane.b32.xlu0 %v1397, 104
    %v2106 = vpop.permute.xlu0 %2105
    %2107 = vrot.lane.b32.xlu0 %v1396, 72
    %v2108 = vpop.permute.xlu0 %2107
    %2109 = vrot.lane.b32.xlu0 %v1398, 72
    %v2110 = vpop.permute.xlu0 %2109
    %2111 = vrot.lane.b32.xlu0 %v1397, 72
    %v2112 = vpop.permute.xlu0 %2111
    %v2113 = vsel %vm409, %v2102, 0
    %v2115 = vsel %vm409, %v2104, 0
    %v2117 = vsel %vm409, %v2106, 0
    %v2119 = vsel %vm409, %v2108, 0
    %v2121 = vsel %vm409, %v2110, 0
    %v2123 = vsel %vm409, %v2112, 0
    %2125 = vmatprep.subr.mxu0 0.0
    %2126 = vmatpush1.xpose.msra.mxu0 0.0
    %2127 = vmatprep.subr.mxu0 0.0
    %2128 = vmatpush1.xpose.msra.mxu0 0.0
    %2129 = vmatprep.subr.mxu0 0.0
    %2130 = vmatpush1.xpose.msra.mxu0 0.0
    %2131 = vmatprep.subr.mxu0 0.0
    %2132 = vmatpush1.xpose.msra.mxu0 0.0
    %2133 = vmatprep.subr.mxu0 0.0
    %2134 = vmatpush1.xpose.msra.mxu0 0.0
    %2135 = vmatprep.subr.mxu0 0.0
    %2136 = vmatpush1.xpose.msra.mxu0 0.0
    %2137 = vmatprep.subr.mxu0 0.0
    %2138 = vmatpush1.xpose.msra.mxu0 0.0
    %2139 = vmatprep.subr.mxu0 0.0
    %2140 = vmatpush1.xpose.msra.mxu0 0.0
    %2141 = vmatprep.subr.mxu0 0.0
    %2142 = vmatpush1.xpose.msra.mxu0 0.0
    %2143 = vmatprep.subr.mxu0 0.0
    %2144 = vmatpush1.xpose.msra.mxu0 0.0
    %2145 = vmatprep.subr.mxu0 0.0
    %2146 = vmatpush1.xpose.msra.mxu0 0.0
    %2147 = vmatprep.subr.mxu0 0.0
    %2148 = vmatpush1.xpose.msra.mxu0 0.0
    %2149 = vmatprep.subr.mxu0 0.0
    %2150 = vmatpush1.xpose.msra.mxu0 0.0
    %2151 = vmatprep.subr.mxu0 0.0
    %2152 = vmatpush1.xpose.msra.mxu0 %v2123
    %2153 = vmatprep.subr.mxu0 0.0
    %2154 = vmatpush1.xpose.msra.mxu0 %v2121
    %2155 = vmatprep.subr.mxu0 0.0
    %2156 = vmatpush1.xpose.msra.mxu0 %v2119
    %2157 = vmatprep.subr.mxu0 0.0
    %2158 = vmatpush2.xpose.msra.mxu0 0.0
    %2159 = vmatprep.subr.mxu0 0.0
    %2160 = vmatpush2.xpose.msra.mxu0 0.0
    %2161 = vmatprep.subr.mxu0 0.0
    %2162 = vmatpush2.xpose.msra.mxu0 0.0
    %2163 = vmatprep.subr.mxu0 0.0
    %2164 = vmatpush2.xpose.msra.mxu0 0.0
    %2165 = vmatprep.subr.mxu0 0.0
    %2166 = vmatpush2.xpose.msra.mxu0 0.0
    %2167 = vmatprep.subr.mxu0 0.0
    %2168 = vmatpush2.xpose.msra.mxu0 0.0
    %2169 = vmatprep.subr.mxu0 0.0
    %2170 = vmatpush2.xpose.msra.mxu0 0.0
    %2171 = vmatprep.subr.mxu0 0.0
    %2172 = vmatpush2.xpose.msra.mxu0 0.0
    %2173 = vmatprep.subr.mxu0 0.0
    %2174 = vmatpush2.xpose.msra.mxu0 0.0
    %2175 = vmatprep.subr.mxu0 0.0
    %2176 = vmatpush2.xpose.msra.mxu0 0.0
    %2177 = vmatprep.subr.mxu0 0.0
    %2178 = vmatpush2.xpose.msra.mxu0 0.0
    %2179 = vmatprep.subr.mxu0 0.0
    %2180 = vmatpush2.xpose.msra.mxu0 0.0
    %2181 = vmatprep.subr.mxu0 0.0
    %2182 = vmatpush2.xpose.msra.mxu0 0.0
    %2183 = vmatprep.subr.mxu0 0.0
    %2184 = vmatpush2.xpose.msra.mxu0 0.0
    %2185 = vmatprep.subr.mxu0 0.0
    %2186 = vmatpush2.xpose.msra.mxu0 0.0
    %2187 = vmatprep.subr.mxu0 0.0
    %2188 = vmatpush2.xpose.msra.mxu0 0.0
    %2189 = vmatprep.mubr.f32.mxu0 0.0
    %2190 = vmatmul.mubr.f32.gmra.mxu0 %v2113
    %v2191 = vpop.f32.mrf.mxu0
    %v2192 = vadd.f32 0.0, %v2191
    %v2193 = vpop.f32.mrf.mxu0
    %2194 = vmatprep.mubr.f32.mxu0 0.0
    %2195 = vmatmul.mubr.f32.gmra.mxu0 %v2115
    %v2196 = vpop.f32.mrf.mxu0
    %v2197 = vadd.f32 0.0, %v2196
    %v2198 = vpop.f32.mrf.mxu0
    %2199 = vmatprep.mubr.f32.mxu0 0.0
    %2200 = vmatmul.mubr.f32.gmra.mxu0 %v2117
    %v2201 = vpop.f32.mrf.mxu0
    %v2202 = vadd.f32 0.0, %v2201
    %v2203 = vpop.f32.mrf.mxu0
    %2204 = vdwg.mxu0
    %v2205 = vsel %vm502, %v2192, -inf
    %2206 = vmax.xlane.f32.xlu0 %v2205
    %v2207 = vpop.xlane.xlu0 %2206
    %v2208 = vsel %vm502, %v2197, -inf
    %2209 = vmax.xlane.f32.xlu0 %v2208
    %v2210 = vpop.xlane.xlu0 %2209
    %v2211 = vsel %vm509, %v2202, -inf
    %2212 = vmax.xlane.f32.xlu0 %v2211
    %v2213 = vpop.xlane.xlu0 %2212
    %v2214 = vsub.f32 %v2192, %v2207
    %v2215 = vsub.f32 %v2197, %v2210
    %v2216 = vsub.f32 %v2202, %v2213
    %v2217 = vmul.f32 %v2214, 1.442695
    %v2218 = vpow.pop %v2217
    %v2219 = vmul.f32 %v2215, 1.442695
    %v2220 = vpow.pop %v2219
    %v2221 = vmul.f32 %v2216, 1.442695
    %v2222 = vpow.pop %v2221
    %v2223 = vsel %vm502, %v2218, 0.0
    %2224 = vadd.xlane.f32.xlu0 %v2223
    %v2225 = vpop.xlane.xlu0 %2224
    %v2226 = vsel %vm502, %v2220, 0.0
    %2227 = vadd.xlane.f32.xlu0 %v2226
    %v2228 = vpop.xlane.xlu0 %2227
    %v2229 = vsel %vm509, %v2222, 0.0
    %2230 = vadd.xlane.f32.xlu0 %v2229
    %v2231 = vpop.xlane.xlu0 %2230
    %v2232 = vrcp.pop %v2225
    %v2233 = vmul.f32 %v2218, %v2232
    %v2234 = vrcp.pop %v2228
    %v2235 = vmul.f32 %v2220, %v2234
    %v2236 = vrcp.pop %v2231
    %v2237 = vmul.f32 %v2222, %v2236
    %2238 = vrot.lane.b32.xlu0 %v1396, 40
    %v2239 = vpop.permute.xlu0 %2238
    %2240 = vrot.lane.b32.xlu0 %v1398, 40
    %v2241 = vpop.permute.xlu0 %2240
    %2242 = vrot.lane.b32.xlu0 %v1397, 40
    %v2243 = vpop.permute.xlu0 %2242
    %v2247 = vsel %vm502, %v2233, 0
    %v2250 = vsel %vm502, %v2235, 0
    %v2253 = vsel %vm502, %v2237, 0
    %v2255 = vsel %vm177, %v2243, 0
    %2257 = vmatprep.subr.mxu0 0.0
    %2258 = vmatpush1.msra.mxu0 0.0
    %2259 = vmatprep.subr.mxu0 0.0
    %2260 = vmatpush1.msra.mxu0 0.0
    %2261 = vmatprep.subr.mxu0 0.0
    %2262 = vmatpush1.msra.mxu0 0.0
    %2263 = vmatprep.subr.mxu0 0.0
    %2264 = vmatpush1.msra.mxu0 0.0
    %2265 = vmatprep.subr.mxu0 0.0
    %2266 = vmatpush1.msra.mxu0 0.0
    %2267 = vmatprep.subr.mxu0 0.0
    %2268 = vmatpush1.msra.mxu0 0.0
    %2269 = vmatprep.subr.mxu0 0.0
    %2270 = vmatpush1.msra.mxu0 0.0
    %2271 = vmatprep.subr.mxu0 0.0
    %2272 = vmatpush1.msra.mxu0 0.0
    %2273 = vmatprep.subr.mxu0 0.0
    %2274 = vmatpush1.msra.mxu0 0.0
    %2275 = vmatprep.subr.mxu0 0.0
    %2276 = vmatpush1.msra.mxu0 0.0
    %2277 = vmatprep.subr.mxu0 0.0
    %2278 = vmatpush1.msra.mxu0 0.0
    %2279 = vmatprep.subr.mxu0 0.0
    %2280 = vmatpush1.msra.mxu0 0.0
    %2281 = vmatprep.subr.mxu0 0.0
    %2282 = vmatpush1.msra.mxu0 0.0
    %2283 = vmatprep.subr.mxu0 0.0
    %2284 = vmatpush1.msra.mxu0 %v2255
    %2285 = vmatprep.subr.mxu0 0.0
    %2286 = vmatpush1.msra.mxu0 %v2241
    %2287 = vmatprep.subr.mxu0 0.0
    %2288 = vmatpush1.msra.mxu0 %v2239
    %2289 = vmatprep.subr.mxu0 0.0
    %2290 = vmatpush2.msra.mxu0 0.0
    %2291 = vmatprep.subr.mxu0 0.0
    %2292 = vmatpush2.msra.mxu0 0.0
    %2293 = vmatprep.subr.mxu0 0.0
    %2294 = vmatpush2.msra.mxu0 0.0
    %2295 = vmatprep.subr.mxu0 0.0
    %2296 = vmatpush2.msra.mxu0 0.0
    %2297 = vmatprep.subr.mxu0 0.0
    %2298 = vmatpush2.msra.mxu0 0.0
    %2299 = vmatprep.subr.mxu0 0.0
    %2300 = vmatpush2.msra.mxu0 0.0
    %2301 = vmatprep.subr.mxu0 0.0
    %2302 = vmatpush2.msra.mxu0 0.0
    %2303 = vmatprep.subr.mxu0 0.0
    %2304 = vmatpush2.msra.mxu0 0.0
    %2305 = vmatprep.subr.mxu0 0.0
    %2306 = vmatpush2.msra.mxu0 0.0
    %2307 = vmatprep.subr.mxu0 0.0
    %2308 = vmatpush2.msra.mxu0 0.0
    %2309 = vmatprep.subr.mxu0 0.0
    %2310 = vmatpush2.msra.mxu0 0.0
    %2311 = vmatprep.subr.mxu0 0.0
    %2312 = vmatpush2.msra.mxu0 0.0
    %2313 = vmatprep.subr.mxu0 0.0
    %2314 = vmatpush2.msra.mxu0 0.0
    %2315 = vmatprep.subr.mxu0 0.0
    %2316 = vmatpush2.msra.mxu0 0.0
    %2317 = vmatprep.subr.mxu0 0.0
    %2318 = vmatpush2.msra.mxu0 0.0
    %2319 = vmatprep.subr.mxu0 0.0
    %2320 = vmatpush2.msra.mxu0 0.0
    %2321 = vmatprep.mubr.f32.mxu0 0.0
    %2322 = vmatmul.mubr.f32.gmra.mxu0 %v2247
    %v2323 = vpop.f32.mrf.mxu0
    %v2324 = vadd.f32 0.0, %v2323
    %v2325 = vpop.f32.mrf.mxu0
    %2326 = vmatprep.mubr.f32.mxu0 0.0
    %2327 = vmatmul.mubr.f32.gmra.mxu0 %v2250
    %v2328 = vpop.f32.mrf.mxu0
    %v2329 = vadd.f32 0.0, %v2328
    %v2330 = vpop.f32.mrf.mxu0
    %2331 = vmatprep.mubr.f32.mxu0 0.0
    %2332 = vmatmul.mubr.f32.gmra.mxu0 %v2253
    %v2333 = vpop.f32.mrf.mxu0
    %v2334 = vadd.f32 0.0, %v2333
    %v2335 = vpop.f32.mrf.mxu0
    %2336 = vdwg.mxu0
    %2340 = vrot.lane.b32.xlu0 %v1852, 8
    %v2341 = vpop.permute.xlu0 %2340
    %2342 = vrot.lane.b32.xlu0 %v1857, 8
    %v2343 = vpop.permute.xlu0 %2342
    %2344 = vrot.lane.b32.xlu0 %v1862, 8
    %v2345 = vpop.permute.xlu0 %2344
    %2352 = vrot.lane.b32.xlu0 %v2088, 16
    %v2353 = vpop.permute.xlu0 %2352
    %2354 = vrot.lane.b32.xlu0 %v2093, 16
    %v2355 = vpop.permute.xlu0 %2354
    %2356 = vrot.lane.b32.xlu0 %v2098, 16
    %v2357 = vpop.permute.xlu0 %2356
    %2364 = vrot.lane.b32.xlu0 %v2324, 24
    %v2365 = vpop.permute.xlu0 %2364
    %2366 = vrot.lane.b32.xlu0 %v2329, 24
    %v2367 = vpop.permute.xlu0 %2366
    %2368 = vrot.lane.b32.xlu0 %v2334, 24
    %v2369 = vpop.permute.xlu0 %2368
    %v2373 = vsel %vm409, %v1616, %v2341
    %v2374 = vsel %vm409, %v1621, %v2343
    %v2375 = vsel %vm409, %v1626, %v2345
    %v2376 = vsel %vm1383, %v2373, %v2353
    %v2377 = vsel %vm1383, %v2374, %v2355
    %v2378 = vsel %vm1383, %v2375, %v2357
    %v2379 = vsel %vm1387, %v2376, %v2365
    %v2380 = vsel %vm1387, %v2377, %v2367
    %v2381 = vsel %vm1387, %v2378, %v2369
    %v2385 = vrot.slane %v2379, 7
    %v2386 = vrot.slane %v2380, 7
    %v2387 = vsel %vm177, %v2385, %v2386
    %v2388 = vrot.slane %v2381, 7
    %v2389 = vsel %vm177, %v2386, %v2388
    %v2391 = vsel %vm177, %v1390, %v2385
    %v2392 = vld [vmem:[%s6] sm:$0xff]
    %v2393 = vld [vmem:[%s6 + $0x8] sm:$0xff]
    %v2394 = vld [vmem:[%s6 + $0x10] sm:$0xff]
    %v2395 = vld [vmem:[%s6 + $0x18] sm:$0xff]
    %v2397 = vsel %vm201, %v1388, 0
    %v2400 = vsel %vm201, %v1389, 0
    %v2403 = vsel %vm201, %v2391, 0
    %v2405 = vsel %vm201, %v2387, 0
    %v2407 = vsel %vm201, %v2389, 0
    %2409 = vmatprep.subr.mxu0 0.0
    %2410 = vmatpush1.msra.mxu0 0.0
    %2411 = vmatprep.subr.mxu0 0.0
    %2412 = vmatpush1.msra.mxu0 0.0
    %2413 = vmatprep.subr.mxu0 0.0
    %2414 = vmatpush1.msra.mxu0 0.0
    %2415 = vmatprep.subr.mxu0 0.0
    %2416 = vmatpush1.msra.mxu0 0.0
    %2417 = vmatprep.subr.mxu0 0.0
    %2418 = vmatpush1.msra.mxu0 0.0
    %2419 = vmatprep.subr.mxu0 0.0
    %2420 = vmatpush1.msra.mxu0 0.0
    %2421 = vmatprep.subr.mxu0 0.0
    %2422 = vmatpush1.msra.mxu0 0.0
    %2423 = vmatprep.subr.mxu0 0.0
    %2424 = vmatpush1.msra.mxu0 0.0
    %2425 = vmatprep.subr.mxu0 0.0
    %2426 = vmatpush1.msra.mxu0 0.0
    %2427 = vmatprep.subr.mxu0 0.0
    %2428 = vmatpush1.msra.mxu0 0.0
    %2429 = vmatprep.subr.mxu0 0.0
    %2430 = vmatpush1.msra.mxu0 0.0
    %2431 = vmatprep.subr.mxu0 0.0
    %2432 = vmatpush1.msra.mxu0 0.0
    %2433 = vmatprep.subr.mxu0 0.0
    %2434 = vmatpush1.msra.mxu0 %v2395
    %2435 = vmatprep.subr.mxu0 0.0
    %2436 = vmatpush1.msra.mxu0 %v2394
    %2437 = vmatprep.subr.mxu0 0.0
    %2438 = vmatpush1.msra.mxu0 %v2393
    %2439 = vmatprep.subr.mxu0 0.0
    %2440 = vmatpush1.msra.mxu0 %v2392
    %2441 = vmatprep.subr.mxu0 0.0
    %2442 = vmatpush2.msra.mxu0 0.0
    %2443 = vmatprep.subr.mxu0 0.0
    %2444 = vmatpush2.msra.mxu0 0.0
    %2445 = vmatprep.subr.mxu0 0.0
    %2446 = vmatpush2.msra.mxu0 0.0
    %2447 = vmatprep.subr.mxu0 0.0
    %2448 = vmatpush2.msra.mxu0 0.0
    %2449 = vmatprep.subr.mxu0 0.0
    %2450 = vmatpush2.msra.mxu0 0.0
    %2451 = vmatprep.subr.mxu0 0.0
    %2452 = vmatpush2.msra.mxu0 0.0
    %2453 = vmatprep.subr.mxu0 0.0
    %2454 = vmatpush2.msra.mxu0 0.0
    %2455 = vmatprep.subr.mxu0 0.0
    %2456 = vmatpush2.msra.mxu0 0.0
    %2457 = vmatprep.subr.mxu0 0.0
    %2458 = vmatpush2.msra.mxu0 0.0
    %2459 = vmatprep.subr.mxu0 0.0
    %2460 = vmatpush2.msra.mxu0 0.0
    %2461 = vmatprep.subr.mxu0 0.0
    %2462 = vmatpush2.msra.mxu0 0.0
    %2463 = vmatprep.subr.mxu0 0.0
    %2464 = vmatpush2.msra.mxu0 0.0
    %2465 = vmatprep.subr.mxu0 0.0
    %2466 = vmatpush2.msra.mxu0 0.0
    %2467 = vmatprep.subr.mxu0 0.0
    %2468 = vmatpush2.msra.mxu0 0.0
    %2469 = vmatprep.subr.mxu0 0.0
    %2470 = vmatpush2.msra.mxu0 0.0
    %2471 = vmatprep.subr.mxu0 0.0
    %2472 = vmatpush2.msra.mxu0 0.0
    %2473 = vmatprep.mubr.f32.mxu0 0.0
    %2474 = vmatmul.mubr.f32.gmra.mxu0 %v2397
    %v2475 = vpop.f32.mrf.mxu0
    %v2476 = vadd.f32 0.0, %v2475
    %v2477 = vpop.f32.mrf.mxu0
    %2478 = vmatprep.mubr.f32.mxu0 0.0
    %2479 = vmatmul.mubr.f32.gmra.mxu0 %v2400
    %v2480 = vpop.f32.mrf.mxu0
    %v2481 = vadd.f32 0.0, %v2480
    %v2482 = vpop.f32.mrf.mxu0
    %2483 = vmatprep.mubr.f32.mxu0 0.0
    %2484 = vmatmul.mubr.f32.gmra.mxu0 %v2403
    %v2485 = vpop.f32.mrf.mxu0
    %v2486 = vadd.f32 0.0, %v2485
    %v2487 = vpop.f32.mrf.mxu0
    %2488 = vmatprep.mubr.f32.mxu0 0.0
    %2489 = vmatmul.mubr.f32.gmra.mxu0 %v2405
    %v2490 = vpop.f32.mrf.mxu0
    %v2491 = vadd.f32 0.0, %v2490
    %v2492 = vpop.f32.mrf.mxu0
    %2493 = vmatprep.mubr.f32.mxu0 0.0
    %2494 = vmatmul.mubr.f32.gmra.mxu0 %v2407
    %v2495 = vpop.f32.mrf.mxu0
    %v2496 = vadd.f32 0.0, %v2495
    %v2497 = vpop.f32.mrf.mxu0
    %2498 = vdwg.mxu0
    %v2499 = vadd.f32 %v196, %v2476
    %v2500 = vadd.f32 %v180, %v2481
    %v2501 = vadd.f32 %v198, %v2486
    %v2502 = vadd.f32 %v192, %v2491
    %v2503 = vadd.f32 %v191, %v2496
    %v2504 = vld [vmem:[%s7] sm:$0x1]
    %v2506 = vlaneseq
    %v2507 = vshrl.u32 %v2506, 7
    %v2508 = vsub.s32 0, %v2507
    %v2509 = vrot.slane %v2504, %v2508
    %v2511 = vadd.f32 %v2499, %v2509
    %v2512 = vadd.f32 %v2500, %v2509
    %v2513 = vadd.f32 %v2501, %v2509
    %v2514 = vadd.f32 %v2502, %v2509
    %v2515 = vadd.f32 %v2503, %v2509
    %v2516 = vld [vmem:[%s8] sm:$0x1]
    %v2517 = vld [vmem:[%s9] sm:$0x1]
    %v2518 = vsel %vm201, %v2511, 0.0
    %2519 = vadd.xlane.f32.xlu0 %v2518
    %v2520 = vpop.xlane.xlu0 %2519
    %v2521 = vsel %vm201, %v2512, 0.0
    %2522 = vadd.xlane.f32.xlu0 %v2521
    %v2523 = vpop.xlane.xlu0 %2522
    %v2524 = vsel %vm201, %v2513, 0.0
    %2525 = vadd.xlane.f32.xlu0 %v2524
    %v2526 = vpop.xlane.xlu0 %2525
    %v2527 = vsel %vm201, %v2514, 0.0
    %2528 = vadd.xlane.f32.xlu0 %v2527
    %v2529 = vpop.xlane.xlu0 %2528
    %v2530 = vsel %vm214, %v2515, 0.0
    %2531 = vadd.xlane.f32.xlu0 %v2530
    %v2532 = vpop.xlane.xlu0 %2531
    %v2533 = vmul.f32 %v2520, %v218
    %v2534 = vmul.f32 %v2523, %v218
    %v2535 = vmul.f32 %v2526, %v218
    %v2536 = vmul.f32 %v2529, %v218
    %v2537 = vmul.f32 %v2532, %v218
    %v2538 = vsub.f32 %v2511, %v2533
    %v2539 = vsub.f32 %v2512, %v2534
    %v2540 = vsub.f32 %v2513, %v2535
    %v2541 = vsub.f32 %v2514, %v2536
    %v2542 = vsub.f32 %v2515, %v2537
    %v2543 = vmul.f32 %v2538, %v2538
    %v2544 = vmul.f32 %v2539, %v2539
    %v2545 = vmul.f32 %v2540, %v2540
    %v2546 = vmul.f32 %v2541, %v2541
    %v2547 = vmul.f32 %v2542, %v2542
    %v2548 = vsel %vm201, %v2543, 0.0
    %2549 = vadd.xlane.f32.xlu0 %v2548
    %v2550 = vpop.xlane.xlu0 %2549
    %v2551 = vsel %vm201, %v2544, 0.0
    %2552 = vadd.xlane.f32.xlu0 %v2551
    %v2553 = vpop.xlane.xlu0 %2552
    %v2554 = vsel %vm201, %v2545, 0.0
    %2555 = vadd.xlane.f32.xlu0 %v2554
    %v2556 = vpop.xlane.xlu0 %2555
    %v2557 = vsel %vm201, %v2546, 0.0
    %2558 = vadd.xlane.f32.xlu0 %v2557
    %v2559 = vpop.xlane.xlu0 %2558
    %v2560 = vsel %vm214, %v2547, 0.0
    %2561 = vadd.xlane.f32.xlu0 %v2560
    %v2562 = vpop.xlane.xlu0 %2561
    %v2563 = vmul.f32 %v2550, %v218
    %v2564 = vmul.f32 %v2553, %v218
    %v2565 = vmul.f32 %v2556, %v218
    %v2566 = vmul.f32 %v2559, %v218
    %v2567 = vmul.f32 %v2562, %v218
    %v2568 = vadd.f32 %v2563, 1e-05
    %v2569 = vadd.f32 %v2564, 1e-05
    %v2570 = vadd.f32 %v2565, 1e-05
    %v2571 = vadd.f32 %v2566, 1e-05
    %v2572 = vadd.f32 %v2567, 1e-05
    %v2573 = vrsqrt.pop %v2568
    %v2574 = vrsqrt.pop %v2569
    %v2575 = vrsqrt.pop %v2570
    %v2576 = vrsqrt.pop %v2571
    %v2577 = vrsqrt.pop %v2572
    %v2578 = vmul.f32 %v2538, %v2573
    %v2579 = vmul.f32 %v2539, %v2574
    %v2580 = vmul.f32 %v2540, %v2575
    %v2581 = vmul.f32 %v2541, %v2576
    %v2582 = vmul.f32 %v2542, %v2577
    %v2584 = vlaneseq
    %v2585 = vshrl.u32 %v2584, 7
    %v2586 = vsub.s32 0, %v2585
    %v2587 = vrot.slane %v2516, %v2586
    %v2589 = vmul.f32 %v2578, %v2587
    %v2590 = vmul.f32 %v2579, %v2587
    %v2591 = vmul.f32 %v2580, %v2587
    %v2592 = vmul.f32 %v2581, %v2587
    %v2593 = vmul.f32 %v2582, %v2587
    %v2595 = vlaneseq
    %v2596 = vshrl.u32 %v2595, 7
    %v2597 = vsub.s32 0, %v2596
    %v2598 = vrot.slane %v2517, %v2597
    %v2600 = vadd.f32 %v2589, %v2598
    %v2601 = vadd.f32 %v2590, %v2598
    %v2602 = vadd.f32 %v2591, %v2598
    %v2603 = vadd.f32 %v2592, %v2598
    %v2604 = vadd.f32 %v2593, %v2598
    %v2605 = vld [vmem:[%s10] sm:$0xff]
    %v2606 = vld [vmem:[%s10 + $0x8] sm:$0xff]
    %v2607 = vld [vmem:[%s10 + $0x10] sm:$0xff]
    %v2608 = vld [vmem:[%s10 + $0x18] sm:$0xff]
    %v2609 = vld [vmem:[%s11] sm:$0x1]
    %v2611 = vlaneseq
    %v2612 = vshrl.u32 %v2611, 7
    %v2613 = vsub.s32 0, %v2612
    %v2614 = vrot.slane %v2609, %v2613
    %v2617 = vsel %vm201, %v2600, 0
    %v2620 = vsel %vm201, %v2601, 0
    %v2623 = vsel %vm201, %v2602, 0
    %v2626 = vsel %vm201, %v2603, 0
    %v2629 = vsel %vm201, %v2604, 0
    %2631 = vmatprep.subr.mxu0 0.0
    %2632 = vmatpush1.msra.mxu0 0.0
    %2633 = vmatprep.subr.mxu0 0.0
    %2634 = vmatpush1.msra.mxu0 0.0
    %2635 = vmatprep.subr.mxu0 0.0
    %2636 = vmatpush1.msra.mxu0 0.0
    %2637 = vmatprep.subr.mxu0 0.0
    %2638 = vmatpush1.msra.mxu0 0.0
    %2639 = vmatprep.subr.mxu0 0.0
    %2640 = vmatpush1.msra.mxu0 0.0
    %2641 = vmatprep.subr.mxu0 0.0
    %2642 = vmatpush1.msra.mxu0 0.0
    %2643 = vmatprep.subr.mxu0 0.0
    %2644 = vmatpush1.msra.mxu0 0.0
    %2645 = vmatprep.subr.mxu0 0.0
    %2646 = vmatpush1.msra.mxu0 0.0
    %2647 = vmatprep.subr.mxu0 0.0
    %2648 = vmatpush1.msra.mxu0 0.0
    %2649 = vmatprep.subr.mxu0 0.0
    %2650 = vmatpush1.msra.mxu0 0.0
    %2651 = vmatprep.subr.mxu0 0.0
    %2652 = vmatpush1.msra.mxu0 0.0
    %2653 = vmatprep.subr.mxu0 0.0
    %2654 = vmatpush1.msra.mxu0 0.0
    %2655 = vmatprep.subr.mxu0 0.0
    %2656 = vmatpush1.msra.mxu0 %v2608
    %2657 = vmatprep.subr.mxu0 0.0
    %2658 = vmatpush1.msra.mxu0 %v2607
    %2659 = vmatprep.subr.mxu0 0.0
    %2660 = vmatpush1.msra.mxu0 %v2606
    %2661 = vmatprep.subr.mxu0 0.0
    %2662 = vmatpush1.msra.mxu0 %v2605
    %2663 = vmatprep.subr.mxu0 0.0
    %2664 = vmatpush2.msra.mxu0 0.0
    %2665 = vmatprep.subr.mxu0 0.0
    %2666 = vmatpush2.msra.mxu0 0.0
    %2667 = vmatprep.subr.mxu0 0.0
    %2668 = vmatpush2.msra.mxu0 0.0
    %2669 = vmatprep.subr.mxu0 0.0
    %2670 = vmatpush2.msra.mxu0 0.0
    %2671 = vmatprep.subr.mxu0 0.0
    %2672 = vmatpush2.msra.mxu0 0.0
    %2673 = vmatprep.subr.mxu0 0.0
    %2674 = vmatpush2.msra.mxu0 0.0
    %2675 = vmatprep.subr.mxu0 0.0
    %2676 = vmatpush2.msra.mxu0 0.0
    %2677 = vmatprep.subr.mxu0 0.0
    %2678 = vmatpush2.msra.mxu0 0.0
    %2679 = vmatprep.subr.mxu0 0.0
    %2680 = vmatpush2.msra.mxu0 0.0
    %2681 = vmatprep.subr.mxu0 0.0
    %2682 = vmatpush2.msra.mxu0 0.0
    %2683 = vmatprep.subr.mxu0 0.0
    %2684 = vmatpush2.msra.mxu0 0.0
    %2685 = vmatprep.subr.mxu0 0.0
    %2686 = vmatpush2.msra.mxu0 0.0
    %2687 = vmatprep.subr.mxu0 0.0
    %2688 = vmatpush2.msra.mxu0 0.0
    %2689 = vmatprep.subr.mxu0 0.0
    %2690 = vmatpush2.msra.mxu0 0.0
    %2691 = vmatprep.subr.mxu0 0.0
    %2692 = vmatpush2.msra.mxu0 0.0
    %2693 = vmatprep.subr.mxu0 0.0
    %2694 = vmatpush2.msra.mxu0 0.0
    %2695 = vmatprep.mubr.f32.mxu0 0.0
    %2696 = vmatmul.mubr.f32.gmra.mxu0 %v2617
    %v2697 = vpop.f32.mrf.mxu0
    %v2698 = vadd.f32 %v2614, %v2697
    %v2699 = vpop.f32.mrf.mxu0
    %2700 = vmatprep.mubr.f32.mxu0 0.0
    %2701 = vmatmul.mubr.f32.gmra.mxu0 %v2620
    %v2702 = vpop.f32.mrf.mxu0
    %v2703 = vadd.f32 %v2614, %v2702
    %v2704 = vpop.f32.mrf.mxu0
    %2705 = vmatprep.mubr.f32.mxu0 0.0
    %2706 = vmatmul.mubr.f32.gmra.mxu0 %v2623
    %v2707 = vpop.f32.mrf.mxu0
    %v2708 = vadd.f32 %v2614, %v2707
    %v2709 = vpop.f32.mrf.mxu0
    %2710 = vmatprep.mubr.f32.mxu0 0.0
    %2711 = vmatmul.mubr.f32.gmra.mxu0 %v2626
    %v2712 = vpop.f32.mrf.mxu0
    %v2713 = vadd.f32 %v2614, %v2712
    %v2714 = vpop.f32.mrf.mxu0
    %2715 = vmatprep.mubr.f32.mxu0 0.0
    %2716 = vmatmul.mubr.f32.gmra.mxu0 %v2629
    %v2717 = vpop.f32.mrf.mxu0
    %v2718 = vadd.f32 %v2614, %v2717
    %v2719 = vpop.f32.mrf.mxu0
    %2720 = vdwg.mxu0
    %v2721 = vmul.f32 %v2698, 0.5
    %v2722 = vmul.f32 %v2703, 0.5
    %v2723 = vmul.f32 %v2708, 0.5
    %v2724 = vmul.f32 %v2713, 0.5
    %v2725 = vmul.f32 %v2718, 0.5
    %v2726 = vmul.f32 %v2698, 0.70710677
    %v2727 = vmul.f32 %v2703, 0.70710677
    %v2728 = vmul.f32 %v2708, 0.70710677
    %v2729 = vmul.f32 %v2713, 0.70710677
    %v2730 = vmul.f32 %v2718, 0.70710677
    %v2731 = verf.f32.pop %v2726
    %v2732 = verf.f32.pop %v2727
    %v2733 = verf.f32.pop %v2728
    %v2734 = verf.f32.pop %v2729
    %v2735 = verf.f32.pop %v2730
    %v2736 = vadd.f32 %v2731, 1.0
    %v2737 = vadd.f32 %v2732, 1.0
    %v2738 = vadd.f32 %v2733, 1.0
    %v2739 = vadd.f32 %v2734, 1.0
    %v2740 = vadd.f32 %v2735, 1.0
    %v2741 = vmul.f32 %v2721, %v2736
    %v2742 = vmul.f32 %v2722, %v2737
    %v2743 = vmul.f32 %v2723, %v2738
    %v2744 = vmul.f32 %v2724, %v2739
    %v2745 = vmul.f32 %v2725, %v2740
    %v2746 = vld [vmem:[%s12] sm:$0xff]
    %v2747 = vld [vmem:[%s12 + $0x8] sm:$0xff]
    %v2748 = vld [vmem:[%s12 + $0x10] sm:$0xff]
    %v2749 = vld [vmem:[%s12 + $0x18] sm:$0xff]
    %v2750 = vld [vmem:[%s12 + $0x20] sm:$0xff]
    %v2751 = vld [vmem:[%s12 + $0x28] sm:$0xff]
    %v2752 = vld [vmem:[%s12 + $0x30] sm:$0xff]
    %v2753 = vld [vmem:[%s12 + $0x38] sm:$0xff]
    %vm2754 = vcmask 523264
    %v2756 = vsel %vm2754, %v2741, 0
    %v2759 = vsel %vm2754, %v2742, 0
    %v2762 = vsel %vm2754, %v2743, 0
    %v2765 = vsel %vm2754, %v2744, 0
    %v2768 = vsel %vm2754, %v2745, 0
    %2770 = vmatprep.subr.mxu0 0.0
    %2771 = vmatpush1.msra.mxu0 0.0
    %2772 = vmatprep.subr.mxu0 0.0
    %2773 = vmatpush1.msra.mxu0 0.0
    %2774 = vmatprep.subr.mxu0 0.0
    %2775 = vmatpush1.msra.mxu0 0.0
    %2776 = vmatprep.subr.mxu0 0.0
    %2777 = vmatpush1.msra.mxu0 0.0
    %2778 = vmatprep.subr.mxu0 0.0
    %2779 = vmatpush1.msra.mxu0 0.0
    %2780 = vmatprep.subr.mxu0 0.0
    %2781 = vmatpush1.msra.mxu0 0.0
    %2782 = vmatprep.subr.mxu0 0.0
    %2783 = vmatpush1.msra.mxu0 0.0
    %2784 = vmatprep.subr.mxu0 0.0
    %2785 = vmatpush1.msra.mxu0 0.0
    %2786 = vmatprep.subr.mxu0 0.0
    %2787 = vmatpush1.msra.mxu0 %v2753
    %2788 = vmatprep.subr.mxu0 0.0
    %2789 = vmatpush1.msra.mxu0 %v2752
    %2790 = vmatprep.subr.mxu0 0.0
    %2791 = vmatpush1.msra.mxu0 %v2751
    %2792 = vmatprep.subr.mxu0 0.0
    %2793 = vmatpush1.msra.mxu0 %v2750
    %2794 = vmatprep.subr.mxu0 0.0
    %2795 = vmatpush1.msra.mxu0 %v2749
    %2796 = vmatprep.subr.mxu0 0.0
    %2797 = vmatpush1.msra.mxu0 %v2748
    %2798 = vmatprep.subr.mxu0 0.0
    %2799 = vmatpush1.msra.mxu0 %v2747
    %2800 = vmatprep.subr.mxu0 0.0
    %2801 = vmatpush1.msra.mxu0 %v2746
    %2802 = vmatprep.subr.mxu0 0.0
    %2803 = vmatpush2.msra.mxu0 0.0
    %2804 = vmatprep.subr.mxu0 0.0
    %2805 = vmatpush2.msra.mxu0 0.0
    %2806 = vmatprep.subr.mxu0 0.0
    %2807 = vmatpush2.msra.mxu0 0.0
    %2808 = vmatprep.subr.mxu0 0.0
    %2809 = vmatpush2.msra.mxu0 0.0
    %2810 = vmatprep.subr.mxu0 0.0
    %2811 = vmatpush2.msra.mxu0 0.0
    %2812 = vmatprep.subr.mxu0 0.0
    %2813 = vmatpush2.msra.mxu0 0.0
    %2814 = vmatprep.subr.mxu0 0.0
    %2815 = vmatpush2.msra.mxu0 0.0
    %2816 = vmatprep.subr.mxu0 0.0
    %2817 = vmatpush2.msra.mxu0 0.0
    %2818 = vmatprep.subr.mxu0 0.0
    %2819 = vmatpush2.msra.mxu0 0.0
    %2820 = vmatprep.subr.mxu0 0.0
    %2821 = vmatpush2.msra.mxu0 0.0
    %2822 = vmatprep.subr.mxu0 0.0
    %2823 = vmatpush2.msra.mxu0 0.0
    %2824 = vmatprep.subr.mxu0 0.0
    %2825 = vmatpush2.msra.mxu0 0.0
    %2826 = vmatprep.subr.mxu0 0.0
    %2827 = vmatpush2.msra.mxu0 0.0
    %2828 = vmatprep.subr.mxu0 0.0
    %2829 = vmatpush2.msra.mxu0 0.0
    %2830 = vmatprep.subr.mxu0 0.0
    %2831 = vmatpush2.msra.mxu0 0.0
    %2832 = vmatprep.subr.mxu0 0.0
    %2833 = vmatpush2.msra.mxu0 0.0
    %2834 = vmatprep.mubr.f32.mxu0 0.0
    %2835 = vmatmul.mubr.f32.gmra.mxu0 %v2756
    %v2836 = vpop.f32.mrf.mxu0
    %v2837 = vadd.f32 0.0, %v2836
    %v2838 = vpop.f32.mrf.mxu0
    %2839 = vmatprep.mubr.f32.mxu0 0.0
    %2840 = vmatmul.mubr.f32.gmra.mxu0 %v2759
    %v2841 = vpop.f32.mrf.mxu0
    %v2842 = vadd.f32 0.0, %v2841
    %v2843 = vpop.f32.mrf.mxu0
    %2844 = vmatprep.mubr.f32.mxu0 0.0
    %2845 = vmatmul.mubr.f32.gmra.mxu0 %v2762
    %v2846 = vpop.f32.mrf.mxu0
    %v2847 = vadd.f32 0.0, %v2846
    %v2848 = vpop.f32.mrf.mxu0
    %2849 = vmatprep.mubr.f32.mxu0 0.0
    %2850 = vmatmul.mubr.f32.gmra.mxu0 %v2765
    %v2851 = vpop.f32.mrf.mxu0
    %v2852 = vadd.f32 0.0, %v2851
    %v2853 = vpop.f32.mrf.mxu0
    %2854 = vmatprep.mubr.f32.mxu0 0.0
    %2855 = vmatmul.mubr.f32.gmra.mxu0 %v2768
    %v2856 = vpop.f32.mrf.mxu0
    %v2857 = vadd.f32 0.0, %v2856
    %v2858 = vpop.f32.mrf.mxu0
    %2859 = vdwg.mxu0
    %v2860 = vadd.f32 %v2511, %v2837
    %v2861 = vadd.f32 %v2512, %v2842
    %v2862 = vadd.f32 %v2513, %v2847
    %v2863 = vadd.f32 %v2514, %v2852
    %v2864 = vadd.f32 %v2515, %v2857
    %v2865 = vld [vmem:[%s13] sm:$0x1]
    %v2867 = vlaneseq
    %v2868 = vshrl.u32 %v2867, 7
    %v2869 = vsub.s32 0, %v2868
    %v2870 = vrot.slane %v2865, %v2869
    %v2872 = vadd.f32 %v2860, %v2870
    %v2873 = vadd.f32 %v2861, %v2870
    %v2874 = vadd.f32 %v2862, %v2870
    %v2875 = vadd.f32 %v2863, %v2870
    %v2876 = vadd.f32 %v2864, %v2870
    %s2877 = scalar_lea.vmem %s3, 1
    %v2878 = vld [vmem:[%s2877] sm:$0x1]
    %s2879 = scalar_lea.vmem %s4, 1
    %v2880 = vld [vmem:[%s2879] sm:$0x1]
    %v2881 = vsel %vm201, %v2872, 0.0
    %2882 = vadd.xlane.f32.xlu0 %v2881
    %v2883 = vpop.xlane.xlu0 %2882
    %v2884 = vsel %vm201, %v2873, 0.0
    %2885 = vadd.xlane.f32.xlu0 %v2884
    %v2886 = vpop.xlane.xlu0 %2885
    %v2887 = vsel %vm201, %v2874, 0.0
    %2888 = vadd.xlane.f32.xlu0 %v2887
    %v2889 = vpop.xlane.xlu0 %2888
    %v2890 = vsel %vm201, %v2875, 0.0
    %2891 = vadd.xlane.f32.xlu0 %v2890
    %v2892 = vpop.xlane.xlu0 %2891
    %v2893 = vsel %vm214, %v2876, 0.0
    %2894 = vadd.xlane.f32.xlu0 %v2893
    %v2895 = vpop.xlane.xlu0 %2894
    %v2896 = vmul.f32 %v2883, %v218
    %v2897 = vmul.f32 %v2886, %v218
    %v2898 = vmul.f32 %v2889, %v218
    %v2899 = vmul.f32 %v2892, %v218
    %v2900 = vmul.f32 %v2895, %v218
    %v2901 = vsub.f32 %v2872, %v2896
    %v2902 = vsub.f32 %v2873, %v2897
    %v2903 = vsub.f32 %v2874, %v2898
    %v2904 = vsub.f32 %v2875, %v2899
    %v2905 = vsub.f32 %v2876, %v2900
    %v2906 = vmul.f32 %v2901, %v2901
    %v2907 = vmul.f32 %v2902, %v2902
    %v2908 = vmul.f32 %v2903, %v2903
    %v2909 = vmul.f32 %v2904, %v2904
    %v2910 = vmul.f32 %v2905, %v2905
    %v2911 = vsel %vm201, %v2906, 0.0
    %2912 = vadd.xlane.f32.xlu0 %v2911
    %v2913 = vpop.xlane.xlu0 %2912
    %v2914 = vsel %vm201, %v2907, 0.0
    %2915 = vadd.xlane.f32.xlu0 %v2914
    %v2916 = vpop.xlane.xlu0 %2915
    %v2917 = vsel %vm201, %v2908, 0.0
    %2918 = vadd.xlane.f32.xlu0 %v2917
    %v2919 = vpop.xlane.xlu0 %2918
    %v2920 = vsel %vm201, %v2909, 0.0
    %2921 = vadd.xlane.f32.xlu0 %v2920
    %v2922 = vpop.xlane.xlu0 %2921
    %v2923 = vsel %vm214, %v2910, 0.0
    %2924 = vadd.xlane.f32.xlu0 %v2923
    %v2925 = vpop.xlane.xlu0 %2924
    %v2926 = vmul.f32 %v2913, %v218
    %v2927 = vmul.f32 %v2916, %v218
    %v2928 = vmul.f32 %v2919, %v218
    %v2929 = vmul.f32 %v2922, %v218
    %v2930 = vmul.f32 %v2925, %v218
    %v2931 = vadd.f32 %v2926, 1e-05
    %v2932 = vadd.f32 %v2927, 1e-05
    %v2933 = vadd.f32 %v2928, 1e-05
    %v2934 = vadd.f32 %v2929, 1e-05
    %v2935 = vadd.f32 %v2930, 1e-05
    %v2936 = vrsqrt.pop %v2931
    %v2937 = vrsqrt.pop %v2932
    %v2938 = vrsqrt.pop %v2933
    %v2939 = vrsqrt.pop %v2934
    %v2940 = vrsqrt.pop %v2935
    %v2941 = vmul.f32 %v2901, %v2936
    %v2942 = vmul.f32 %v2902, %v2937
    %v2943 = vmul.f32 %v2903, %v2938
    %v2944 = vmul.f32 %v2904, %v2939
    %v2945 = vmul.f32 %v2905, %v2940
    %v2947 = vlaneseq
    %v2948 = vshrl.u32 %v2947, 7
    %v2949 = vsub.s32 0, %v2948
    %v2950 = vrot.slane %v2878, %v2949
    %v2952 = vmul.f32 %v2941, %v2950
    %v2953 = vmul.f32 %v2942, %v2950
    %v2954 = vmul.f32 %v2943, %v2950
    %v2955 = vmul.f32 %v2944, %v2950
    %v2956 = vmul.f32 %v2945, %v2950
    %v2958 = vlaneseq
    %v2959 = vshrl.u32 %v2958, 7
    %v2960 = vsub.s32 0, %v2959
    %v2961 = vrot.slane %v2880, %v2960
    %v2963 = vadd.f32 %v2952, %v2961
    %v2964 = vadd.f32 %v2953, %v2961
    %v2965 = vadd.f32 %v2954, %v2961
    %v2966 = vadd.f32 %v2955, %v2961
    %v2967 = vadd.f32 %v2956, %v2961
    %s2968 = scalar_lea.vmem %s5, 32
    %v2969 = vld [vmem:[%s2968] sm:$0xff]
    %v2970 = vld [vmem:[%s2968 + $0x8] sm:$0xff]
    %v2971 = vld [vmem:[%s2968 + $0x10] sm:$0xff]
    %v2972 = vld [vmem:[%s2968 + $0x18] sm:$0xff]
    %v2974 = vsel %vm201, %v2963, 0
    %v2977 = vsel %vm201, %v2964, 0
    %v2980 = vsel %vm201, %v2965, 0
    %v2983 = vsel %vm201, %v2966, 0
    %v2986 = vsel %vm201, %v2967, 0
    %2988 = vmatprep.subr.mxu0 0.0
    %2989 = vmatpush1.msra.mxu0 0.0
    %2990 = vmatprep.subr.mxu0 0.0
    %2991 = vmatpush1.msra.mxu0 0.0
    %2992 = vmatprep.subr.mxu0 0.0
    %2993 = vmatpush1.msra.mxu0 0.0
    %2994 = vmatprep.subr.mxu0 0.0
    %2995 = vmatpush1.msra.mxu0 0.0
    %2996 = vmatprep.subr.mxu0 0.0
    %2997 = vmatpush1.msra.mxu0 0.0
    %2998 = vmatprep.subr.mxu0 0.0
    %2999 = vmatpush1.msra.mxu0 0.0
    %3000 = vmatprep.subr.mxu0 0.0
    %3001 = vmatpush1.msra.mxu0 0.0
    %3002 = vmatprep.subr.mxu0 0.0
    %3003 = vmatpush1.msra.mxu0 0.0
    %3004 = vmatprep.subr.mxu0 0.0
    %3005 = vmatpush1.msra.mxu0 0.0
    %3006 = vmatprep.subr.mxu0 0.0
    %3007 = vmatpush1.msra.mxu0 0.0
    %3008 = vmatprep.subr.mxu0 0.0
    %3009 = vmatpush1.msra.mxu0 0.0
    %3010 = vmatprep.subr.mxu0 0.0
    %3011 = vmatpush1.msra.mxu0 0.0
    %3012 = vmatprep.subr.mxu0 0.0
    %3013 = vmatpush1.msra.mxu0 %v2972
    %3014 = vmatprep.subr.mxu0 0.0
    %3015 = vmatpush1.msra.mxu0 %v2971
    %3016 = vmatprep.subr.mxu0 0.0
    %3017 = vmatpush1.msra.mxu0 %v2970
    %3018 = vmatprep.subr.mxu0 0.0
    %3019 = vmatpush1.msra.mxu0 %v2969
    %3020 = vmatprep.subr.mxu0 0.0
    %3021 = vmatpush2.msra.mxu0 0.0
    %3022 = vmatprep.subr.mxu0 0.0
    %3023 = vmatpush2.msra.mxu0 0.0
    %3024 = vmatprep.subr.mxu0 0.0
    %3025 = vmatpush2.msra.mxu0 0.0
    %3026 = vmatprep.subr.mxu0 0.0
    %3027 = vmatpush2.msra.mxu0 0.0
    %3028 = vmatprep.subr.mxu0 0.0
    %3029 = vmatpush2.msra.mxu0 0.0
    %3030 = vmatprep.subr.mxu0 0.0
    %3031 = vmatpush2.msra.mxu0 0.0
    %3032 = vmatprep.subr.mxu0 0.0
    %3033 = vmatpush2.msra.mxu0 0.0
    %3034 = vmatprep.subr.mxu0 0.0
    %3035 = vmatpush2.msra.mxu0 0.0
    %3036 = vmatprep.subr.mxu0 0.0
    %3037 = vmatpush2.msra.mxu0 0.0
    %3038 = vmatprep.subr.mxu0 0.0
    %3039 = vmatpush2.msra.mxu0 0.0
    %3040 = vmatprep.subr.mxu0 0.0
    %3041 = vmatpush2.msra.mxu0 0.0
    %3042 = vmatprep.subr.mxu0 0.0
    %3043 = vmatpush2.msra.mxu0 0.0
    %3044 = vmatprep.subr.mxu0 0.0
    %3045 = vmatpush2.msra.mxu0 0.0
    %3046 = vmatprep.subr.mxu0 0.0
    %3047 = vmatpush2.msra.mxu0 0.0
    %3048 = vmatprep.subr.mxu0 0.0
    %3049 = vmatpush2.msra.mxu0 0.0
    %3050 = vmatprep.subr.mxu0 0.0
    %3051 = vmatpush2.msra.mxu0 0.0
    %3052 = vmatprep.mubr.f32.mxu0 0.0
    %3053 = vmatmul.mubr.f32.gmra.mxu0 %v2974
    %v3054 = vpop.f32.mrf.mxu0
    %v3055 = vadd.f32 0.0, %v3054
    %v3056 = vpop.f32.mrf.mxu0
    %3057 = vmatprep.mubr.f32.mxu0 0.0
    %3058 = vmatmul.mubr.f32.gmra.mxu0 %v2977
    %v3059 = vpop.f32.mrf.mxu0
    %v3060 = vadd.f32 0.0, %v3059
    %v3061 = vpop.f32.mrf.mxu0
    %3062 = vmatprep.mubr.f32.mxu0 0.0
    %3063 = vmatmul.mubr.f32.gmra.mxu0 %v2980
    %v3064 = vpop.f32.mrf.mxu0
    %v3065 = vadd.f32 0.0, %v3064
    %v3066 = vpop.f32.mrf.mxu0
    %3067 = vmatprep.mubr.f32.mxu0 0.0
    %3068 = vmatmul.mubr.f32.gmra.mxu0 %v2983
    %v3069 = vpop.f32.mrf.mxu0
    %v3070 = vadd.f32 0.0, %v3069
    %v3071 = vpop.f32.mrf.mxu0
    %3072 = vmatprep.mubr.f32.mxu0 0.0
    %3073 = vmatmul.mubr.f32.gmra.mxu0 %v2986
    %v3074 = vpop.f32.mrf.mxu0
    %v3075 = vadd.f32 0.0, %v3074
    %v3076 = vpop.f32.mrf.mxu0
    %3077 = vdwg.mxu0
    %3081 = vrot.lane.b32.xlu0 %v3055, 96
    %v3082 = vpop.permute.xlu0 %3081
    %3083 = vrot.lane.b32.xlu0 %v3060, 96
    %v3084 = vpop.permute.xlu0 %3083
    %3085 = vrot.lane.b32.xlu0 %v3065, 96
    %v3086 = vpop.permute.xlu0 %3085
    %v3087 = vsel %vm409, %v3055, 0
    %v3089 = vsel %vm409, %v3060, 0
    %v3091 = vsel %vm409, %v3065, 0
    %v3093 = vsel %vm409, %v3082, 0
    %v3095 = vsel %vm409, %v3084, 0
    %v3097 = vsel %vm409, %v3086, 0
    %3099 = vmatprep.subr.mxu0 0.0
    %3100 = vmatpush1.xpose.msra.mxu0 0.0
    %3101 = vmatprep.subr.mxu0 0.0
    %3102 = vmatpush1.xpose.msra.mxu0 0.0
    %3103 = vmatprep.subr.mxu0 0.0
    %3104 = vmatpush1.xpose.msra.mxu0 0.0
    %3105 = vmatprep.subr.mxu0 0.0
    %3106 = vmatpush1.xpose.msra.mxu0 0.0
    %3107 = vmatprep.subr.mxu0 0.0
    %3108 = vmatpush1.xpose.msra.mxu0 0.0
    %3109 = vmatprep.subr.mxu0 0.0
    %3110 = vmatpush1.xpose.msra.mxu0 0.0
    %3111 = vmatprep.subr.mxu0 0.0
    %3112 = vmatpush1.xpose.msra.mxu0 0.0
    %3113 = vmatprep.subr.mxu0 0.0
    %3114 = vmatpush1.xpose.msra.mxu0 0.0
    %3115 = vmatprep.subr.mxu0 0.0
    %3116 = vmatpush1.xpose.msra.mxu0 0.0
    %3117 = vmatprep.subr.mxu0 0.0
    %3118 = vmatpush1.xpose.msra.mxu0 0.0
    %3119 = vmatprep.subr.mxu0 0.0
    %3120 = vmatpush1.xpose.msra.mxu0 0.0
    %3121 = vmatprep.subr.mxu0 0.0
    %3122 = vmatpush1.xpose.msra.mxu0 0.0
    %3123 = vmatprep.subr.mxu0 0.0
    %3124 = vmatpush1.xpose.msra.mxu0 0.0
    %3125 = vmatprep.subr.mxu0 0.0
    %3126 = vmatpush1.xpose.msra.mxu0 %v3097
    %3127 = vmatprep.subr.mxu0 0.0
    %3128 = vmatpush1.xpose.msra.mxu0 %v3095
    %3129 = vmatprep.subr.mxu0 0.0
    %3130 = vmatpush1.xpose.msra.mxu0 %v3093
    %3131 = vmatprep.subr.mxu0 0.0
    %3132 = vmatpush2.xpose.msra.mxu0 0.0
    %3133 = vmatprep.subr.mxu0 0.0
    %3134 = vmatpush2.xpose.msra.mxu0 0.0
    %3135 = vmatprep.subr.mxu0 0.0
    %3136 = vmatpush2.xpose.msra.mxu0 0.0
    %3137 = vmatprep.subr.mxu0 0.0
    %3138 = vmatpush2.xpose.msra.mxu0 0.0
    %3139 = vmatprep.subr.mxu0 0.0
    %3140 = vmatpush2.xpose.msra.mxu0 0.0
    %3141 = vmatprep.subr.mxu0 0.0
    %3142 = vmatpush2.xpose.msra.mxu0 0.0
    %3143 = vmatprep.subr.mxu0 0.0
    %3144 = vmatpush2.xpose.msra.mxu0 0.0
    %3145 = vmatprep.subr.mxu0 0.0
    %3146 = vmatpush2.xpose.msra.mxu0 0.0
    %3147 = vmatprep.subr.mxu0 0.0
    %3148 = vmatpush2.xpose.msra.mxu0 0.0
    %3149 = vmatprep.subr.mxu0 0.0
    %3150 = vmatpush2.xpose.msra.mxu0 0.0
    %3151 = vmatprep.subr.mxu0 0.0
    %3152 = vmatpush2.xpose.msra.mxu0 0.0
    %3153 = vmatprep.subr.mxu0 0.0
    %3154 = vmatpush2.xpose.msra.mxu0 0.0
    %3155 = vmatprep.subr.mxu0 0.0
    %3156 = vmatpush2.xpose.msra.mxu0 0.0
    %3157 = vmatprep.subr.mxu0 0.0
    %3158 = vmatpush2.xpose.msra.mxu0 0.0
    %3159 = vmatprep.subr.mxu0 0.0
    %3160 = vmatpush2.xpose.msra.mxu0 0.0
    %3161 = vmatprep.subr.mxu0 0.0
    %3162 = vmatpush2.xpose.msra.mxu0 0.0
    %3163 = vmatprep.mubr.f32.mxu0 0.0
    %3164 = vmatmul.mubr.f32.gmra.mxu0 %v3087
    %v3165 = vpop.f32.mrf.mxu0
    %v3166 = vadd.f32 0.0, %v3165
    %v3167 = vpop.f32.mrf.mxu0
    %3168 = vmatprep.mubr.f32.mxu0 0.0
    %3169 = vmatmul.mubr.f32.gmra.mxu0 %v3089
    %v3170 = vpop.f32.mrf.mxu0
    %v3171 = vadd.f32 0.0, %v3170
    %v3172 = vpop.f32.mrf.mxu0
    %3173 = vmatprep.mubr.f32.mxu0 0.0
    %3174 = vmatmul.mubr.f32.gmra.mxu0 %v3091
    %v3175 = vpop.f32.mrf.mxu0
    %v3176 = vadd.f32 0.0, %v3175
    %v3177 = vpop.f32.mrf.mxu0
    %3178 = vdwg.mxu0
    %v3179 = vsel %vm502, %v3166, -inf
    %3180 = vmax.xlane.f32.xlu0 %v3179
    %v3181 = vpop.xlane.xlu0 %3180
    %v3182 = vsel %vm502, %v3171, -inf
    %3183 = vmax.xlane.f32.xlu0 %v3182
    %v3184 = vpop.xlane.xlu0 %3183
    %v3185 = vsel %vm509, %v3176, -inf
    %3186 = vmax.xlane.f32.xlu0 %v3185
    %v3187 = vpop.xlane.xlu0 %3186
    %v3188 = vsub.f32 %v3166, %v3181
    %v3189 = vsub.f32 %v3171, %v3184
    %v3190 = vsub.f32 %v3176, %v3187
    %v3191 = vmul.f32 %v3188, 1.442695
    %v3192 = vpow.pop %v3191
    %v3193 = vmul.f32 %v3189, 1.442695
    %v3194 = vpow.pop %v3193
    %v3195 = vmul.f32 %v3190, 1.442695
    %v3196 = vpow.pop %v3195
    %v3197 = vsel %vm502, %v3192, 0.0
    %3198 = vadd.xlane.f32.xlu0 %v3197
    %v3199 = vpop.xlane.xlu0 %3198
    %v3200 = vsel %vm502, %v3194, 0.0
    %3201 = vadd.xlane.f32.xlu0 %v3200
    %v3202 = vpop.xlane.xlu0 %3201
    %v3203 = vsel %vm509, %v3196, 0.0
    %3204 = vadd.xlane.f32.xlu0 %v3203
    %v3205 = vpop.xlane.xlu0 %3204
    %v3206 = vrcp.pop %v3199
    %v3207 = vmul.f32 %v3192, %v3206
    %v3208 = vrcp.pop %v3202
    %v3209 = vmul.f32 %v3194, %v3208
    %v3210 = vrcp.pop %v3205
    %v3211 = vmul.f32 %v3196, %v3210
    %3212 = vrot.lane.b32.xlu0 %v3055, 64
    %v3213 = vpop.permute.xlu0 %3212
    %3214 = vrot.lane.b32.xlu0 %v3060, 64
    %v3215 = vpop.permute.xlu0 %3214
    %3216 = vrot.lane.b32.xlu0 %v3065, 64
    %v3217 = vpop.permute.xlu0 %3216
    %v3221 = vsel %vm502, %v3207, 0
    %v3224 = vsel %vm502, %v3209, 0
    %v3227 = vsel %vm502, %v3211, 0
    %v3229 = vsel %vm177, %v3217, 0
    %3231 = vmatprep.subr.mxu0 0.0
    %3232 = vmatpush1.msra.mxu0 0.0
    %3233 = vmatprep.subr.mxu0 0.0
    %3234 = vmatpush1.msra.mxu0 0.0
    %3235 = vmatprep.subr.mxu0 0.0
    %3236 = vmatpush1.msra.mxu0 0.0
    %3237 = vmatprep.subr.mxu0 0.0
    %3238 = vmatpush1.msra.mxu0 0.0
    %3239 = vmatprep.subr.mxu0 0.0
    %3240 = vmatpush1.msra.mxu0 0.0
    %3241 = vmatprep.subr.mxu0 0.0
    %3242 = vmatpush1.msra.mxu0 0.0
    %3243 = vmatprep.subr.mxu0 0.0
    %3244 = vmatpush1.msra.mxu0 0.0
    %3245 = vmatprep.subr.mxu0 0.0
    %3246 = vmatpush1.msra.mxu0 0.0
    %3247 = vmatprep.subr.mxu0 0.0
    %3248 = vmatpush1.msra.mxu0 0.0
    %3249 = vmatprep.subr.mxu0 0.0
    %3250 = vmatpush1.msra.mxu0 0.0
    %3251 = vmatprep.subr.mxu0 0.0
    %3252 = vmatpush1.msra.mxu0 0.0
    %3253 = vmatprep.subr.mxu0 0.0
    %3254 = vmatpush1.msra.mxu0 0.0
    %3255 = vmatprep.subr.mxu0 0.0
    %3256 = vmatpush1.msra.mxu0 0.0
    %3257 = vmatprep.subr.mxu0 0.0
    %3258 = vmatpush1.msra.mxu0 %v3229
    %3259 = vmatprep.subr.mxu0 0.0
    %3260 = vmatpush1.msra.mxu0 %v3215
    %3261 = vmatprep.subr.mxu0 0.0
    %3262 = vmatpush1.msra.mxu0 %v3213
    %3263 = vmatprep.subr.mxu0 0.0
    %3264 = vmatpush2.msra.mxu0 0.0
    %3265 = vmatprep.subr.mxu0 0.0
    %3266 = vmatpush2.msra.mxu0 0.0
    %3267 = vmatprep.subr.mxu0 0.0
    %3268 = vmatpush2.msra.mxu0 0.0
    %3269 = vmatprep.subr.mxu0 0.0
    %3270 = vmatpush2.msra.mxu0 0.0
    %3271 = vmatprep.subr.mxu0 0.0
    %3272 = vmatpush2.msra.mxu0 0.0
    %3273 = vmatprep.subr.mxu0 0.0
    %3274 = vmatpush2.msra.mxu0 0.0
    %3275 = vmatprep.subr.mxu0 0.0
    %3276 = vmatpush2.msra.mxu0 0.0
    %3277 = vmatprep.subr.mxu0 0.0
    %3278 = vmatpush2.msra.mxu0 0.0
    %3279 = vmatprep.subr.mxu0 0.0
    %3280 = vmatpush2.msra.mxu0 0.0
    %3281 = vmatprep.subr.mxu0 0.0
    %3282 = vmatpush2.msra.mxu0 0.0
    %3283 = vmatprep.subr.mxu0 0.0
    %3284 = vmatpush2.msra.mxu0 0.0
    %3285 = vmatprep.subr.mxu0 0.0
    %3286 = vmatpush2.msra.mxu0 0.0
    %3287 = vmatprep.subr.mxu0 0.0
    %3288 = vmatpush2.msra.mxu0 0.0
    %3289 = vmatprep.subr.mxu0 0.0
    %3290 = vmatpush2.msra.mxu0 0.0
    %3291 = vmatprep.subr.mxu0 0.0
    %3292 = vmatpush2.msra.mxu0 0.0
    %3293 = vmatprep.subr.mxu0 0.0
    %3294 = vmatpush2.msra.mxu0 0.0
    %3295 = vmatprep.mubr.f32.mxu0 0.0
    %3296 = vmatmul.mubr.f32.gmra.mxu0 %v3221
    %v3297 = vpop.f32.mrf.mxu0
    %v3298 = vadd.f32 0.0, %v3297
    %v3299 = vpop.f32.mrf.mxu0
    %3300 = vmatprep.mubr.f32.mxu0 0.0
    %3301 = vmatmul.mubr.f32.gmra.mxu0 %v3224
    %v3302 = vpop.f32.mrf.mxu0
    %v3303 = vadd.f32 0.0, %v3302
    %v3304 = vpop.f32.mrf.mxu0
    %3305 = vmatprep.mubr.f32.mxu0 0.0
    %3306 = vmatmul.mubr.f32.gmra.mxu0 %v3227
    %v3307 = vpop.f32.mrf.mxu0
    %v3308 = vadd.f32 0.0, %v3307
    %v3309 = vpop.f32.mrf.mxu0
    %3310 = vdwg.mxu0
    %3311 = vrot.lane.b32.xlu0 %v3055, 120
    %v3312 = vpop.permute.xlu0 %3311
    %3313 = vrot.lane.b32.xlu0 %v3060, 120
    %v3314 = vpop.permute.xlu0 %3313
    %3315 = vrot.lane.b32.xlu0 %v3065, 120
    %v3316 = vpop.permute.xlu0 %3315
    %3317 = vrot.lane.b32.xlu0 %v3055, 88
    %v3318 = vpop.permute.xlu0 %3317
    %3319 = vrot.lane.b32.xlu0 %v3060, 88
    %v3320 = vpop.permute.xlu0 %3319
    %3321 = vrot.lane.b32.xlu0 %v3065, 88
    %v3322 = vpop.permute.xlu0 %3321
    %v3323 = vsel %vm409, %v3312, 0
    %v3325 = vsel %vm409, %v3314, 0
    %v3327 = vsel %vm409, %v3316, 0
    %v3329 = vsel %vm409, %v3318, 0
    %v3331 = vsel %vm409, %v3320, 0
    %v3333 = vsel %vm409, %v3322, 0
    %3335 = vmatprep.subr.mxu0 0.0
    %3336 = vmatpush1.xpose.msra.mxu0 0.0
    %3337 = vmatprep.subr.mxu0 0.0
    %3338 = vmatpush1.xpose.msra.mxu0 0.0
    %3339 = vmatprep.subr.mxu0 0.0
    %3340 = vmatpush1.xpose.msra.mxu0 0.0
    %3341 = vmatprep.subr.mxu0 0.0
    %3342 = vmatpush1.xpose.msra.mxu0 0.0
    %3343 = vmatprep.subr.mxu0 0.0
    %3344 = vmatpush1.xpose.msra.mxu0 0.0
    %3345 = vmatprep.subr.mxu0 0.0
    %3346 = vmatpush1.xpose.msra.mxu0 0.0
    %3347 = vmatprep.subr.mxu0 0.0
    %3348 = vmatpush1.xpose.msra.mxu0 0.0
    %3349 = vmatprep.subr.mxu0 0.0
    %3350 = vmatpush1.xpose.msra.mxu0 0.0
    %3351 = vmatprep.subr.mxu0 0.0
    %3352 = vmatpush1.xpose.msra.mxu0 0.0
    %3353 = vmatprep.subr.mxu0 0.0
    %3354 = vmatpush1.xpose.msra.mxu0 0.0
    %3355 = vmatprep.subr.mxu0 0.0
    %3356 = vmatpush1.xpose.msra.mxu0 0.0
    %3357 = vmatprep.subr.mxu0 0.0
    %3358 = vmatpush1.xpose.msra.mxu0 0.0
    %3359 = vmatprep.subr.mxu0 0.0
    %3360 = vmatpush1.xpose.msra.mxu0 0.0
    %3361 = vmatprep.subr.mxu0 0.0
    %3362 = vmatpush1.xpose.msra.mxu0 %v3333
    %3363 = vmatprep.subr.mxu0 0.0
    %3364 = vmatpush1.xpose.msra.mxu0 %v3331
    %3365 = vmatprep.subr.mxu0 0.0
    %3366 = vmatpush1.xpose.msra.mxu0 %v3329
    %3367 = vmatprep.subr.mxu0 0.0
    %3368 = vmatpush2.xpose.msra.mxu0 0.0
    %3369 = vmatprep.subr.mxu0 0.0
    %3370 = vmatpush2.xpose.msra.mxu0 0.0
    %3371 = vmatprep.subr.mxu0 0.0
    %3372 = vmatpush2.xpose.msra.mxu0 0.0
    %3373 = vmatprep.subr.mxu0 0.0
    %3374 = vmatpush2.xpose.msra.mxu0 0.0
    %3375 = vmatprep.subr.mxu0 0.0
    %3376 = vmatpush2.xpose.msra.mxu0 0.0
    %3377 = vmatprep.subr.mxu0 0.0
    %3378 = vmatpush2.xpose.msra.mxu0 0.0
    %3379 = vmatprep.subr.mxu0 0.0
    %3380 = vmatpush2.xpose.msra.mxu0 0.0
    %3381 = vmatprep.subr.mxu0 0.0
    %3382 = vmatpush2.xpose.msra.mxu0 0.0
    %3383 = vmatprep.subr.mxu0 0.0
    %3384 = vmatpush2.xpose.msra.mxu0 0.0
    %3385 = vmatprep.subr.mxu0 0.0
    %3386 = vmatpush2.xpose.msra.mxu0 0.0
    %3387 = vmatprep.subr.mxu0 0.0
    %3388 = vmatpush2.xpose.msra.mxu0 0.0
    %3389 = vmatprep.subr.mxu0 0.0
    %3390 = vmatpush2.xpose.msra.mxu0 0.0
    %3391 = vmatprep.subr.mxu0 0.0
    %3392 = vmatpush2.xpose.msra.mxu0 0.0
    %3393 = vmatprep.subr.mxu0 0.0
    %3394 = vmatpush2.xpose.msra.mxu0 0.0
    %3395 = vmatprep.subr.mxu0 0.0
    %3396 = vmatpush2.xpose.msra.mxu0 0.0
    %3397 = vmatprep.subr.mxu0 0.0
    %3398 = vmatpush2.xpose.msra.mxu0 0.0
    %3399 = vmatprep.mubr.f32.mxu0 0.0
    %3400 = vmatmul.mubr.f32.gmra.mxu0 %v3323
    %v3401 = vpop.f32.mrf.mxu0
    %v3402 = vadd.f32 0.0, %v3401
    %v3403 = vpop.f32.mrf.mxu0
    %3404 = vmatprep.mubr.f32.mxu0 0.0
    %3405 = vmatmul.mubr.f32.gmra.mxu0 %v3325
    %v3406 = vpop.f32.mrf.mxu0
    %v3407 = vadd.f32 0.0, %v3406
    %v3408 = vpop.f32.mrf.mxu0
    %3409 = vmatprep.mubr.f32.mxu0 0.0
    %3410 = vmatmul.mubr.f32.gmra.mxu0 %v3327
    %v3411 = vpop.f32.mrf.mxu0
    %v3412 = vadd.f32 0.0, %v3411
    %v3413 = vpop.f32.mrf.mxu0
    %3414 = vdwg.mxu0
    %v3415 = vsel %vm502, %v3402, -inf
    %3416 = vmax.xlane.f32.xlu0 %v3415
    %v3417 = vpop.xlane.xlu0 %3416
    %v3418 = vsel %vm502, %v3407, -inf
    %3419 = vmax.xlane.f32.xlu0 %v3418
    %v3420 = vpop.xlane.xlu0 %3419
    %v3421 = vsel %vm509, %v3412, -inf
    %3422 = vmax.xlane.f32.xlu0 %v3421
    %v3423 = vpop.xlane.xlu0 %3422
    %v3424 = vsub.f32 %v3402, %v3417
    %v3425 = vsub.f32 %v3407, %v3420
    %v3426 = vsub.f32 %v3412, %v3423
    %v3427 = vmul.f32 %v3424, 1.442695
    %v3428 = vpow.pop %v3427
    %v3429 = vmul.f32 %v3425, 1.442695
    %v3430 = vpow.pop %v3429
    %v3431 = vmul.f32 %v3426, 1.442695
    %v3432 = vpow.pop %v3431
    %v3433 = vsel %vm502, %v3428, 0.0
    %3434 = vadd.xlane.f32.xlu0 %v3433
    %v3435 = vpop.xlane.xlu0 %3434
    %v3436 = vsel %vm502, %v3430, 0.0
    %3437 = vadd.xlane.f32.xlu0 %v3436
    %v3438 = vpop.xlane.xlu0 %3437
    %v3439 = vsel %vm509, %v3432, 0.0
    %3440 = vadd.xlane.f32.xlu0 %v3439
    %v3441 = vpop.xlane.xlu0 %3440
    %v3442 = vrcp.pop %v3435
    %v3443 = vmul.f32 %v3428, %v3442
    %v3444 = vrcp.pop %v3438
    %v3445 = vmul.f32 %v3430, %v3444
    %v3446 = vrcp.pop %v3441
    %v3447 = vmul.f32 %v3432, %v3446
    %3448 = vrot.lane.b32.xlu0 %v3055, 56
    %v3449 = vpop.permute.xlu0 %3448
    %3450 = vrot.lane.b32.xlu0 %v3060, 56
    %v3451 = vpop.permute.xlu0 %3450
    %3452 = vrot.lane.b32.xlu0 %v3065, 56
    %v3453 = vpop.permute.xlu0 %3452
    %v3457 = vsel %vm502, %v3443, 0
    %v3460 = vsel %vm502, %v3445, 0
    %v3463 = vsel %vm502, %v3447, 0
    %v3465 = vsel %vm177, %v3453, 0
    %3467 = vmatprep.subr.mxu0 0.0
    %3468 = vmatpush1.msra.mxu0 0.0
    %3469 = vmatprep.subr.mxu0 0.0
    %3470 = vmatpush1.msra.mxu0 0.0
    %3471 = vmatprep.subr.mxu0 0.0
    %3472 = vmatpush1.msra.mxu0 0.0
    %3473 = vmatprep.subr.mxu0 0.0
    %3474 = vmatpush1.msra.mxu0 0.0
    %3475 = vmatprep.subr.mxu0 0.0
    %3476 = vmatpush1.msra.mxu0 0.0
    %3477 = vmatprep.subr.mxu0 0.0
    %3478 = vmatpush1.msra.mxu0 0.0
    %3479 = vmatprep.subr.mxu0 0.0
    %3480 = vmatpush1.msra.mxu0 0.0
    %3481 = vmatprep.subr.mxu0 0.0
    %3482 = vmatpush1.msra.mxu0 0.0
    %3483 = vmatprep.subr.mxu0 0.0
    %3484 = vmatpush1.msra.mxu0 0.0
    %3485 = vmatprep.subr.mxu0 0.0
    %3486 = vmatpush1.msra.mxu0 0.0
    %3487 = vmatprep.subr.mxu0 0.0
    %3488 = vmatpush1.msra.mxu0 0.0
    %3489 = vmatprep.subr.mxu0 0.0
    %3490 = vmatpush1.msra.mxu0 0.0
    %3491 = vmatprep.subr.mxu0 0.0
    %3492 = vmatpush1.msra.mxu0 0.0
    %3493 = vmatprep.subr.mxu0 0.0
    %3494 = vmatpush1.msra.mxu0 %v3465
    %3495 = vmatprep.subr.mxu0 0.0
    %3496 = vmatpush1.msra.mxu0 %v3451
    %3497 = vmatprep.subr.mxu0 0.0
    %3498 = vmatpush1.msra.mxu0 %v3449
    %3499 = vmatprep.subr.mxu0 0.0
    %3500 = vmatpush2.msra.mxu0 0.0
    %3501 = vmatprep.subr.mxu0 0.0
    %3502 = vmatpush2.msra.mxu0 0.0
    %3503 = vmatprep.subr.mxu0 0.0
    %3504 = vmatpush2.msra.mxu0 0.0
    %3505 = vmatprep.subr.mxu0 0.0
    %3506 = vmatpush2.msra.mxu0 0.0
    %3507 = vmatprep.subr.mxu0 0.0
    %3508 = vmatpush2.msra.mxu0 0.0
    %3509 = vmatprep.subr.mxu0 0.0
    %3510 = vmatpush2.msra.mxu0 0.0
    %3511 = vmatprep.subr.mxu0 0.0
    %3512 = vmatpush2.msra.mxu0 0.0
    %3513 = vmatprep.subr.mxu0 0.0
    %3514 = vmatpush2.msra.mxu0 0.0
    %3515 = vmatprep.subr.mxu0 0.0
    %3516 = vmatpush2.msra.mxu0 0.0
    %3517 = vmatprep.subr.mxu0 0.0
    %3518 = vmatpush2.msra.mxu0 0.0
    %3519 = vmatprep.subr.mxu0 0.0
    %3520 = vmatpush2.msra.mxu0 0.0
    %3521 = vmatprep.subr.mxu0 0.0
    %3522 = vmatpush2.msra.mxu0 0.0
    %3523 = vmatprep.subr.mxu0 0.0
    %3524 = vmatpush2.msra.mxu0 0.0
    %3525 = vmatprep.subr.mxu0 0.0
    %3526 = vmatpush2.msra.mxu0 0.0
    %3527 = vmatprep.subr.mxu0 0.0
    %3528 = vmatpush2.msra.mxu0 0.0
    %3529 = vmatprep.subr.mxu0 0.0
    %3530 = vmatpush2.msra.mxu0 0.0
    %3531 = vmatprep.mubr.f32.mxu0 0.0
    %3532 = vmatmul.mubr.f32.gmra.mxu0 %v3457
    %v3533 = vpop.f32.mrf.mxu0
    %v3534 = vadd.f32 0.0, %v3533
    %v3535 = vpop.f32.mrf.mxu0
    %3536 = vmatprep.mubr.f32.mxu0 0.0
    %3537 = vmatmul.mubr.f32.gmra.mxu0 %v3460
    %v3538 = vpop.f32.mrf.mxu0
    %v3539 = vadd.f32 0.0, %v3538
    %v3540 = vpop.f32.mrf.mxu0
    %3541 = vmatprep.mubr.f32.mxu0 0.0
    %3542 = vmatmul.mubr.f32.gmra.mxu0 %v3463
    %v3543 = vpop.f32.mrf.mxu0
    %v3544 = vadd.f32 0.0, %v3543
    %v3545 = vpop.f32.mrf.mxu0
    %3546 = vdwg.mxu0
    %3547 = vrot.lane.b32.xlu0 %v3055, 112
    %v3548 = vpop.permute.xlu0 %3547
    %3549 = vrot.lane.b32.xlu0 %v3060, 112
    %v3550 = vpop.permute.xlu0 %3549
    %3551 = vrot.lane.b32.xlu0 %v3065, 112
    %v3552 = vpop.permute.xlu0 %3551
    %3553 = vrot.lane.b32.xlu0 %v3055, 80
    %v3554 = vpop.permute.xlu0 %3553
    %3555 = vrot.lane.b32.xlu0 %v3060, 80
    %v3556 = vpop.permute.xlu0 %3555
    %3557 = vrot.lane.b32.xlu0 %v3065, 80
    %v3558 = vpop.permute.xlu0 %3557
    %v3559 = vsel %vm409, %v3548, 0
    %v3561 = vsel %vm409, %v3550, 0
    %v3563 = vsel %vm409, %v3552, 0
    %v3565 = vsel %vm409, %v3554, 0
    %v3567 = vsel %vm409, %v3556, 0
    %v3569 = vsel %vm409, %v3558, 0
    %3571 = vmatprep.subr.mxu0 0.0
    %3572 = vmatpush1.xpose.msra.mxu0 0.0
    %3573 = vmatprep.subr.mxu0 0.0
    %3574 = vmatpush1.xpose.msra.mxu0 0.0
    %3575 = vmatprep.subr.mxu0 0.0
    %3576 = vmatpush1.xpose.msra.mxu0 0.0
    %3577 = vmatprep.subr.mxu0 0.0
    %3578 = vmatpush1.xpose.msra.mxu0 0.0
    %3579 = vmatprep.subr.mxu0 0.0
    %3580 = vmatpush1.xpose.msra.mxu0 0.0
    %3581 = vmatprep.subr.mxu0 0.0
    %3582 = vmatpush1.xpose.msra.mxu0 0.0
    %3583 = vmatprep.subr.mxu0 0.0
    %3584 = vmatpush1.xpose.msra.mxu0 0.0
    %3585 = vmatprep.subr.mxu0 0.0
    %3586 = vmatpush1.xpose.msra.mxu0 0.0
    %3587 = vmatprep.subr.mxu0 0.0
    %3588 = vmatpush1.xpose.msra.mxu0 0.0
    %3589 = vmatprep.subr.mxu0 0.0
    %3590 = vmatpush1.xpose.msra.mxu0 0.0
    %3591 = vmatprep.subr.mxu0 0.0
    %3592 = vmatpush1.xpose.msra.mxu0 0.0
    %3593 = vmatprep.subr.mxu0 0.0
    %3594 = vmatpush1.xpose.msra.mxu0 0.0
    %3595 = vmatprep.subr.mxu0 0.0
    %3596 = vmatpush1.xpose.msra.mxu0 0.0
    %3597 = vmatprep.subr.mxu0 0.0
    %3598 = vmatpush1.xpose.msra.mxu0 %v3569
    %3599 = vmatprep.subr.mxu0 0.0
    %3600 = vmatpush1.xpose.msra.mxu0 %v3567
    %3601 = vmatprep.subr.mxu0 0.0
    %3602 = vmatpush1.xpose.msra.mxu0 %v3565
    %3603 = vmatprep.subr.mxu0 0.0
    %3604 = vmatpush2.xpose.msra.mxu0 0.0
    %3605 = vmatprep.subr.mxu0 0.0
    %3606 = vmatpush2.xpose.msra.mxu0 0.0
    %3607 = vmatprep.subr.mxu0 0.0
    %3608 = vmatpush2.xpose.msra.mxu0 0.0
    %3609 = vmatprep.subr.mxu0 0.0
    %3610 = vmatpush2.xpose.msra.mxu0 0.0
    %3611 = vmatprep.subr.mxu0 0.0
    %3612 = vmatpush2.xpose.msra.mxu0 0.0
    %3613 = vmatprep.subr.mxu0 0.0
    %3614 = vmatpush2.xpose.msra.mxu0 0.0
    %3615 = vmatprep.subr.mxu0 0.0
    %3616 = vmatpush2.xpose.msra.mxu0 0.0
    %3617 = vmatprep.subr.mxu0 0.0
    %3618 = vmatpush2.xpose.msra.mxu0 0.0
    %3619 = vmatprep.subr.mxu0 0.0
    %3620 = vmatpush2.xpose.msra.mxu0 0.0
    %3621 = vmatprep.subr.mxu0 0.0
    %3622 = vmatpush2.xpose.msra.mxu0 0.0
    %3623 = vmatprep.subr.mxu0 0.0
    %3624 = vmatpush2.xpose.msra.mxu0 0.0
    %3625 = vmatprep.subr.mxu0 0.0
    %3626 = vmatpush2.xpose.msra.mxu0 0.0
    %3627 = vmatprep.subr.mxu0 0.0
    %3628 = vmatpush2.xpose.msra.mxu0 0.0
    %3629 = vmatprep.subr.mxu0 0.0
    %3630 = vmatpush2.xpose.msra.mxu0 0.0
    %3631 = vmatprep.subr.mxu0 0.0
    %3632 = vmatpush2.xpose.msra.mxu0 0.0
    %3633 = vmatprep.subr.mxu0 0.0
    %3634 = vmatpush2.xpose.msra.mxu0 0.0
    %3635 = vmatprep.mubr.f32.mxu0 0.0
    %3636 = vmatmul.mubr.f32.gmra.mxu0 %v3559
    %v3637 = vpop.f32.mrf.mxu0
    %v3638 = vadd.f32 0.0, %v3637
    %v3639 = vpop.f32.mrf.mxu0
    %3640 = vmatprep.mubr.f32.mxu0 0.0
    %3641 = vmatmul.mubr.f32.gmra.mxu0 %v3561
    %v3642 = vpop.f32.mrf.mxu0
    %v3643 = vadd.f32 0.0, %v3642
    %v3644 = vpop.f32.mrf.mxu0
    %3645 = vmatprep.mubr.f32.mxu0 0.0
    %3646 = vmatmul.mubr.f32.gmra.mxu0 %v3563
    %v3647 = vpop.f32.mrf.mxu0
    %v3648 = vadd.f32 0.0, %v3647
    %v3649 = vpop.f32.mrf.mxu0
    %3650 = vdwg.mxu0
    %v3651 = vsel %vm502, %v3638, -inf
    %3652 = vmax.xlane.f32.xlu0 %v3651
    %v3653 = vpop.xlane.xlu0 %3652
    %v3654 = vsel %vm502, %v3643, -inf
    %3655 = vmax.xlane.f32.xlu0 %v3654
    %v3656 = vpop.xlane.xlu0 %3655
    %v3657 = vsel %vm509, %v3648, -inf
    %3658 = vmax.xlane.f32.xlu0 %v3657
    %v3659 = vpop.xlane.xlu0 %3658
    %v3660 = vsub.f32 %v3638, %v3653
    %v3661 = vsub.f32 %v3643, %v3656
    %v3662 = vsub.f32 %v3648, %v3659
    %v3663 = vmul.f32 %v3660, 1.442695
    %v3664 = vpow.pop %v3663
    %v3665 = vmul.f32 %v3661, 1.442695
    %v3666 = vpow.pop %v3665
    %v3667 = vmul.f32 %v3662, 1.442695
    %v3668 = vpow.pop %v3667
    %v3669 = vsel %vm502, %v3664, 0.0
    %3670 = vadd.xlane.f32.xlu0 %v3669
    %v3671 = vpop.xlane.xlu0 %3670
    %v3672 = vsel %vm502, %v3666, 0.0
    %3673 = vadd.xlane.f32.xlu0 %v3672
    %v3674 = vpop.xlane.xlu0 %3673
    %v3675 = vsel %vm509, %v3668, 0.0
    %3676 = vadd.xlane.f32.xlu0 %v3675
    %v3677 = vpop.xlane.xlu0 %3676
    %v3678 = vrcp.pop %v3671
    %v3679 = vmul.f32 %v3664, %v3678
    %v3680 = vrcp.pop %v3674
    %v3681 = vmul.f32 %v3666, %v3680
    %v3682 = vrcp.pop %v3677
    %v3683 = vmul.f32 %v3668, %v3682
    %3684 = vrot.lane.b32.xlu0 %v3055, 48
    %v3685 = vpop.permute.xlu0 %3684
    %3686 = vrot.lane.b32.xlu0 %v3060, 48
    %v3687 = vpop.permute.xlu0 %3686
    %3688 = vrot.lane.b32.xlu0 %v3065, 48
    %v3689 = vpop.permute.xlu0 %3688
    %v3693 = vsel %vm502, %v3679, 0
    %v3696 = vsel %vm502, %v3681, 0
    %v3699 = vsel %vm502, %v3683, 0
    %v3701 = vsel %vm177, %v3689, 0
    %3703 = vmatprep.subr.mxu0 0.0
    %3704 = vmatpush1.msra.mxu0 0.0
    %3705 = vmatprep.subr.mxu0 0.0
    %3706 = vmatpush1.msra.mxu0 0.0
    %3707 = vmatprep.subr.mxu0 0.0
    %3708 = vmatpush1.msra.mxu0 0.0
    %3709 = vmatprep.subr.mxu0 0.0
    %3710 = vmatpush1.msra.mxu0 0.0
    %3711 = vmatprep.subr.mxu0 0.0
    %3712 = vmatpush1.msra.mxu0 0.0
    %3713 = vmatprep.subr.mxu0 0.0
    %3714 = vmatpush1.msra.mxu0 0.0
    %3715 = vmatprep.subr.mxu0 0.0
    %3716 = vmatpush1.msra.mxu0 0.0
    %3717 = vmatprep.subr.mxu0 0.0
    %3718 = vmatpush1.msra.mxu0 0.0
    %3719 = vmatprep.subr.mxu0 0.0
    %3720 = vmatpush1.msra.mxu0 0.0
    %3721 = vmatprep.subr.mxu0 0.0
    %3722 = vmatpush1.msra.mxu0 0.0
    %3723 = vmatprep.subr.mxu0 0.0
    %3724 = vmatpush1.msra.mxu0 0.0
    %3725 = vmatprep.subr.mxu0 0.0
    %3726 = vmatpush1.msra.mxu0 0.0
    %3727 = vmatprep.subr.mxu0 0.0
    %3728 = vmatpush1.msra.mxu0 0.0
    %3729 = vmatprep.subr.mxu0 0.0
    %3730 = vmatpush1.msra.mxu0 %v3701
    %3731 = vmatprep.subr.mxu0 0.0
    %3732 = vmatpush1.msra.mxu0 %v3687
    %3733 = vmatprep.subr.mxu0 0.0
    %3734 = vmatpush1.msra.mxu0 %v3685
    %3735 = vmatprep.subr.mxu0 0.0
    %3736 = vmatpush2.msra.mxu0 0.0
    %3737 = vmatprep.subr.mxu0 0.0
    %3738 = vmatpush2.msra.mxu0 0.0
    %3739 = vmatprep.subr.mxu0 0.0
    %3740 = vmatpush2.msra.mxu0 0.0
    %3741 = vmatprep.subr.mxu0 0.0
    %3742 = vmatpush2.msra.mxu0 0.0
    %3743 = vmatprep.subr.mxu0 0.0
    %3744 = vmatpush2.msra.mxu0 0.0
    %3745 = vmatprep.subr.mxu0 0.0
    %3746 = vmatpush2.msra.mxu0 0.0
    %3747 = vmatprep.subr.mxu0 0.0
    %3748 = vmatpush2.msra.mxu0 0.0
    %3749 = vmatprep.subr.mxu0 0.0
    %3750 = vmatpush2.msra.mxu0 0.0
    %3751 = vmatprep.subr.mxu0 0.0
    %3752 = vmatpush2.msra.mxu0 0.0
    %3753 = vmatprep.subr.mxu0 0.0
    %3754 = vmatpush2.msra.mxu0 0.0
    %3755 = vmatprep.subr.mxu0 0.0
    %3756 = vmatpush2.msra.mxu0 0.0
    %3757 = vmatprep.subr.mxu0 0.0
    %3758 = vmatpush2.msra.mxu0 0.0
    %3759 = vmatprep.subr.mxu0 0.0
    %3760 = vmatpush2.msra.mxu0 0.0
    %3761 = vmatprep.subr.mxu0 0.0
    %3762 = vmatpush2.msra.mxu0 0.0
    %3763 = vmatprep.subr.mxu0 0.0
    %3764 = vmatpush2.msra.mxu0 0.0
    %3765 = vmatprep.subr.mxu0 0.0
    %3766 = vmatpush2.msra.mxu0 0.0
    %3767 = vmatprep.mubr.f32.mxu0 0.0
    %3768 = vmatmul.mubr.f32.gmra.mxu0 %v3693
    %v3769 = vpop.f32.mrf.mxu0
    %v3770 = vadd.f32 0.0, %v3769
    %v3771 = vpop.f32.mrf.mxu0
    %3772 = vmatprep.mubr.f32.mxu0 0.0
    %3773 = vmatmul.mubr.f32.gmra.mxu0 %v3696
    %v3774 = vpop.f32.mrf.mxu0
    %v3775 = vadd.f32 0.0, %v3774
    %v3776 = vpop.f32.mrf.mxu0
    %3777 = vmatprep.mubr.f32.mxu0 0.0
    %3778 = vmatmul.mubr.f32.gmra.mxu0 %v3699
    %v3779 = vpop.f32.mrf.mxu0
    %v3780 = vadd.f32 0.0, %v3779
    %v3781 = vpop.f32.mrf.mxu0
    %3782 = vdwg.mxu0
    %3783 = vrot.lane.b32.xlu0 %v3055, 104
    %v3784 = vpop.permute.xlu0 %3783
    %3785 = vrot.lane.b32.xlu0 %v3060, 104
    %v3786 = vpop.permute.xlu0 %3785
    %3787 = vrot.lane.b32.xlu0 %v3065, 104
    %v3788 = vpop.permute.xlu0 %3787
    %3789 = vrot.lane.b32.xlu0 %v3055, 72
    %v3790 = vpop.permute.xlu0 %3789
    %3791 = vrot.lane.b32.xlu0 %v3060, 72
    %v3792 = vpop.permute.xlu0 %3791
    %3793 = vrot.lane.b32.xlu0 %v3065, 72
    %v3794 = vpop.permute.xlu0 %3793
    %v3795 = vsel %vm409, %v3784, 0
    %v3797 = vsel %vm409, %v3786, 0
    %v3799 = vsel %vm409, %v3788, 0
    %v3801 = vsel %vm409, %v3790, 0
    %v3803 = vsel %vm409, %v3792, 0
    %v3805 = vsel %vm409, %v3794, 0
    %3807 = vmatprep.subr.mxu0 0.0
    %3808 = vmatpush1.xpose.msra.mxu0 0.0
    %3809 = vmatprep.subr.mxu0 0.0
    %3810 = vmatpush1.xpose.msra.mxu0 0.0
    %3811 = vmatprep.subr.mxu0 0.0
    %3812 = vmatpush1.xpose.msra.mxu0 0.0
    %3813 = vmatprep.subr.mxu0 0.0
    %3814 = vmatpush1.xpose.msra.mxu0 0.0
    %3815 = vmatprep.subr.mxu0 0.0
    %3816 = vmatpush1.xpose.msra.mxu0 0.0
    %3817 = vmatprep.subr.mxu0 0.0
    %3818 = vmatpush1.xpose.msra.mxu0 0.0
    %3819 = vmatprep.subr.mxu0 0.0
    %3820 = vmatpush1.xpose.msra.mxu0 0.0
    %3821 = vmatprep.subr.mxu0 0.0
    %3822 = vmatpush1.xpose.msra.mxu0 0.0
    %3823 = vmatprep.subr.mxu0 0.0
    %3824 = vmatpush1.xpose.msra.mxu0 0.0
    %3825 = vmatprep.subr.mxu0 0.0
    %3826 = vmatpush1.xpose.msra.mxu0 0.0
    %3827 = vmatprep.subr.mxu0 0.0
    %3828 = vmatpush1.xpose.msra.mxu0 0.0
    %3829 = vmatprep.subr.mxu0 0.0
    %3830 = vmatpush1.xpose.msra.mxu0 0.0
    %3831 = vmatprep.subr.mxu0 0.0
    %3832 = vmatpush1.xpose.msra.mxu0 0.0
    %3833 = vmatprep.subr.mxu0 0.0
    %3834 = vmatpush1.xpose.msra.mxu0 %v3805
    %3835 = vmatprep.subr.mxu0 0.0
    %3836 = vmatpush1.xpose.msra.mxu0 %v3803
    %3837 = vmatprep.subr.mxu0 0.0
    %3838 = vmatpush1.xpose.msra.mxu0 %v3801
    %3839 = vmatprep.subr.mxu0 0.0
    %3840 = vmatpush2.xpose.msra.mxu0 0.0
    %3841 = vmatprep.subr.mxu0 0.0
    %3842 = vmatpush2.xpose.msra.mxu0 0.0
    %3843 = vmatprep.subr.mxu0 0.0
    %3844 = vmatpush2.xpose.msra.mxu0 0.0
    %3845 = vmatprep.subr.mxu0 0.0
    %3846 = vmatpush2.xpose.msra.mxu0 0.0
    %3847 = vmatprep.subr.mxu0 0.0
    %3848 = vmatpush2.xpose.msra.mxu0 0.0
    %3849 = vmatprep.subr.mxu0 0.0
    %3850 = vmatpush2.xpose.msra.mxu0 0.0
    %3851 = vmatprep.subr.mxu0 0.0
    %3852 = vmatpush2.xpose.msra.mxu0 0.0
    %3853 = vmatprep.subr.mxu0 0.0
    %3854 = vmatpush2.xpose.msra.mxu0 0.0
    %3855 = vmatprep.subr.mxu0 0.0
    %3856 = vmatpush2.xpose.msra.mxu0 0.0
    %3857 = vmatprep.subr.mxu0 0.0
    %3858 = vmatpush2.xpose.msra.mxu0 0.0
    %3859 = vmatprep.subr.mxu0 0.0
    %3860 = vmatpush2.xpose.msra.mxu0 0.0
    %3861 = vmatprep.subr.mxu0 0.0
    %3862 = vmatpush2.xpose.msra.mxu0 0.0
    %3863 = vmatprep.subr.mxu0 0.0
    %3864 = vmatpush2.xpose.msra.mxu0 0.0
    %3865 = vmatprep.subr.mxu0 0.0
    %3866 = vmatpush2.xpose.msra.mxu0 0.0
    %3867 = vmatprep.subr.mxu0 0.0
    %3868 = vmatpush2.xpose.msra.mxu0 0.0
    %3869 = vmatprep.subr.mxu0 0.0
    %3870 = vmatpush2.xpose.msra.mxu0 0.0
    %3871 = vmatprep.mubr.f32.mxu0 0.0
    %3872 = vmatmul.mubr.f32.gmra.mxu0 %v3795
    %v3873 = vpop.f32.mrf.mxu0
    %v3874 = vadd.f32 0.0, %v3873
    %v3875 = vpop.f32.mrf.mxu0
    %3876 = vmatprep.mubr.f32.mxu0 0.0
    %3877 = vmatmul.mubr.f32.gmra.mxu0 %v3797
    %v3878 = vpop.f32.mrf.mxu0
    %v3879 = vadd.f32 0.0, %v3878
    %v3880 = vpop.f32.mrf.mxu0
    %3881 = vmatprep.mubr.f32.mxu0 0.0
    %3882 = vmatmul.mubr.f32.gmra.mxu0 %v3799
    %v3883 = vpop.f32.mrf.mxu0
    %v3884 = vadd.f32 0.0, %v3883
    %v3885 = vpop.f32.mrf.mxu0
    %3886 = vdwg.mxu0
    %v3887 = vsel %vm502, %v3874, -inf
    %3888 = vmax.xlane.f32.xlu0 %v3887
    %v3889 = vpop.xlane.xlu0 %3888
    %v3890 = vsel %vm502, %v3879, -inf
    %3891 = vmax.xlane.f32.xlu0 %v3890
    %v3892 = vpop.xlane.xlu0 %3891
    %v3893 = vsel %vm509, %v3884, -inf
    %3894 = vmax.xlane.f32.xlu0 %v3893
    %v3895 = vpop.xlane.xlu0 %3894
    %v3896 = vsub.f32 %v3874, %v3889
    %v3897 = vsub.f32 %v3879, %v3892
    %v3898 = vsub.f32 %v3884, %v3895
    %v3899 = vmul.f32 %v3896, 1.442695
    %v3900 = vpow.pop %v3899
    %v3901 = vmul.f32 %v3897, 1.442695
    %v3902 = vpow.pop %v3901
    %v3903 = vmul.f32 %v3898, 1.442695
    %v3904 = vpow.pop %v3903
    %v3905 = vsel %vm502, %v3900, 0.0
    %3906 = vadd.xlane.f32.xlu0 %v3905
    %v3907 = vpop.xlane.xlu0 %3906
    %v3908 = vsel %vm502, %v3902, 0.0
    %3909 = vadd.xlane.f32.xlu0 %v3908
    %v3910 = vpop.xlane.xlu0 %3909
    %v3911 = vsel %vm509, %v3904, 0.0
    %3912 = vadd.xlane.f32.xlu0 %v3911
    %v3913 = vpop.xlane.xlu0 %3912
    %v3914 = vrcp.pop %v3907
    %v3915 = vmul.f32 %v3900, %v3914
    %v3916 = vrcp.pop %v3910
    %v3917 = vmul.f32 %v3902, %v3916
    %v3918 = vrcp.pop %v3913
    %v3919 = vmul.f32 %v3904, %v3918
    %3920 = vrot.lane.b32.xlu0 %v3055, 40
    %v3921 = vpop.permute.xlu0 %3920
    %3922 = vrot.lane.b32.xlu0 %v3060, 40
    %v3923 = vpop.permute.xlu0 %3922
    %3924 = vrot.lane.b32.xlu0 %v3065, 40
    %v3925 = vpop.permute.xlu0 %3924
    %v3929 = vsel %vm502, %v3915, 0
    %v3932 = vsel %vm502, %v3917, 0
    %v3935 = vsel %vm502, %v3919, 0
    %v3937 = vsel %vm177, %v3925, 0
    %3939 = vmatprep.subr.mxu0 0.0
    %3940 = vmatpush1.msra.mxu0 0.0
    %3941 = vmatprep.subr.mxu0 0.0
    %3942 = vmatpush1.msra.mxu0 0.0
    %3943 = vmatprep.subr.mxu0 0.0
    %3944 = vmatpush1.msra.mxu0 0.0
    %3945 = vmatprep.subr.mxu0 0.0
    %3946 = vmatpush1.msra.mxu0 0.0
    %3947 = vmatprep.subr.mxu0 0.0
    %3948 = vmatpush1.msra.mxu0 0.0
    %3949 = vmatprep.subr.mxu0 0.0
    %3950 = vmatpush1.msra.mxu0 0.0
    %3951 = vmatprep.subr.mxu0 0.0
    %3952 = vmatpush1.msra.mxu0 0.0
    %3953 = vmatprep.subr.mxu0 0.0
    %3954 = vmatpush1.msra.mxu0 0.0
    %3955 = vmatprep.subr.mxu0 0.0
    %3956 = vmatpush1.msra.mxu0 0.0
    %3957 = vmatprep.subr.mxu0 0.0
    %3958 = vmatpush1.msra.mxu0 0.0
    %3959 = vmatprep.subr.mxu0 0.0
    %3960 = vmatpush1.msra.mxu0 0.0
    %3961 = vmatprep.subr.mxu0 0.0
    %3962 = vmatpush1.msra.mxu0 0.0
    %3963 = vmatprep.subr.mxu0 0.0
    %3964 = vmatpush1.msra.mxu0 0.0
    %3965 = vmatprep.subr.mxu0 0.0
    %3966 = vmatpush1.msra.mxu0 %v3937
    %3967 = vmatprep.subr.mxu0 0.0
    %3968 = vmatpush1.msra.mxu0 %v3923
    %3969 = vmatprep.subr.mxu0 0.0
    %3970 = vmatpush1.msra.mxu0 %v3921
    %3971 = vmatprep.subr.mxu0 0.0
    %3972 = vmatpush2.msra.mxu0 0.0
    %3973 = vmatprep.subr.mxu0 0.0
    %3974 = vmatpush2.msra.mxu0 0.0
    %3975 = vmatprep.subr.mxu0 0.0
    %3976 = vmatpush2.msra.mxu0 0.0
    %3977 = vmatprep.subr.mxu0 0.0
    %3978 = vmatpush2.msra.mxu0 0.0
    %3979 = vmatprep.subr.mxu0 0.0
    %3980 = vmatpush2.msra.mxu0 0.0
    %3981 = vmatprep.subr.mxu0 0.0
    %3982 = vmatpush2.msra.mxu0 0.0
    %3983 = vmatprep.subr.mxu0 0.0
    %3984 = vmatpush2.msra.mxu0 0.0
    %3985 = vmatprep.subr.mxu0 0.0
    %3986 = vmatpush2.msra.mxu0 0.0
    %3987 = vmatprep.subr.mxu0 0.0
    %3988 = vmatpush2.msra.mxu0 0.0
    %3989 = vmatprep.subr.mxu0 0.0
    %3990 = vmatpush2.msra.mxu0 0.0
    %3991 = vmatprep.subr.mxu0 0.0
    %3992 = vmatpush2.msra.mxu0 0.0
    %3993 = vmatprep.subr.mxu0 0.0
    %3994 = vmatpush2.msra.mxu0 0.0
    %3995 = vmatprep.subr.mxu0 0.0
    %3996 = vmatpush2.msra.mxu0 0.0
    %3997 = vmatprep.subr.mxu0 0.0
    %3998 = vmatpush2.msra.mxu0 0.0
    %3999 = vmatprep.subr.mxu0 0.0
    %4000 = vmatpush2.msra.mxu0 0.0
    %4001 = vmatprep.subr.mxu0 0.0
    %4002 = vmatpush2.msra.mxu0 0.0
    %4003 = vmatprep.mubr.f32.mxu0 0.0
    %4004 = vmatmul.mubr.f32.gmra.mxu0 %v3929
    %v4005 = vpop.f32.mrf.mxu0
    %v4006 = vadd.f32 0.0, %v4005
    %v4007 = vpop.f32.mrf.mxu0
    %4008 = vmatprep.mubr.f32.mxu0 0.0
    %4009 = vmatmul.mubr.f32.gmra.mxu0 %v3932
    %v4010 = vpop.f32.mrf.mxu0
    %v4011 = vadd.f32 0.0, %v4010
    %v4012 = vpop.f32.mrf.mxu0
    %4013 = vmatprep.mubr.f32.mxu0 0.0
    %4014 = vmatmul.mubr.f32.gmra.mxu0 %v3935
    %v4015 = vpop.f32.mrf.mxu0
    %v4016 = vadd.f32 0.0, %v4015
    %v4017 = vpop.f32.mrf.mxu0
    %4018 = vdwg.mxu0
    %4022 = vrot.lane.b32.xlu0 %v3534, 8
    %v4023 = vpop.permute.xlu0 %4022
    %4024 = vrot.lane.b32.xlu0 %v3539, 8
    %v4025 = vpop.permute.xlu0 %4024
    %4026 = vrot.lane.b32.xlu0 %v3544, 8
    %v4027 = vpop.permute.xlu0 %4026
    %4034 = vrot.lane.b32.xlu0 %v3770, 16
    %v4035 = vpop.permute.xlu0 %4034
    %4036 = vrot.lane.b32.xlu0 %v3775, 16
    %v4037 = vpop.permute.xlu0 %4036
    %4038 = vrot.lane.b32.xlu0 %v3780, 16
    %v4039 = vpop.permute.xlu0 %4038
    %4046 = vrot.lane.b32.xlu0 %v4006, 24
    %v4047 = vpop.permute.xlu0 %4046
    %4048 = vrot.lane.b32.xlu0 %v4011, 24
    %v4049 = vpop.permute.xlu0 %4048
    %4050 = vrot.lane.b32.xlu0 %v4016, 24
    %v4051 = vpop.permute.xlu0 %4050
    %v4055 = vsel %vm409, %v3298, %v4023
    %v4056 = vsel %vm409, %v3303, %v4025
    %v4057 = vsel %vm409, %v3308, %v4027
    %v4058 = vsel %vm1383, %v4055, %v4035
    %v4059 = vsel %vm1383, %v4056, %v4037
    %v4060 = vsel %vm1383, %v4057, %v4039
    %v4061 = vsel %vm1387, %v4058, %v4047
    %v4062 = vsel %vm1387, %v4059, %v4049
    %v4063 = vsel %vm1387, %v4060, %v4051
    %v4066 = vrot.slane %v3065, 1
    %v4067 = vrot.slane %v3070, 1
    %v4068 = vsel %vm1393, %v4066, %v4067
    %v4069 = vrot.slane %v3075, 1
    %v4070 = vsel %vm1393, %v4067, %v4069
    %4071 = vrot.lane.b32.xlu0 %v4068, 96
    %v4072 = vpop.permute.xlu0 %4071
    %4073 = vrot.lane.b32.xlu0 %v4070, 96
    %v4074 = vpop.permute.xlu0 %4073
    %4075 = vrot.lane.b32.xlu0 %v4069, 96
    %v4076 = vpop.permute.xlu0 %4075
    %v4077 = vsel %vm409, %v4068, 0
    %v4079 = vsel %vm409, %v4070, 0
    %v4081 = vsel %vm409, %v4069, 0
    %v4083 = vsel %vm409, %v4072, 0
    %v4085 = vsel %vm409, %v4074, 0
    %v4087 = vsel %vm409, %v4076, 0
    %4089 = vmatprep.subr.mxu0 0.0
    %4090 = vmatpush1.xpose.msra.mxu0 0.0
    %4091 = vmatprep.subr.mxu0 0.0
    %4092 = vmatpush1.xpose.msra.mxu0 0.0
    %4093 = vmatprep.subr.mxu0 0.0
    %4094 = vmatpush1.xpose.msra.mxu0 0.0
    %4095 = vmatprep.subr.mxu0 0.0
    %4096 = vmatpush1.xpose.msra.mxu0 0.0
    %4097 = vmatprep.subr.mxu0 0.0
    %4098 = vmatpush1.xpose.msra.mxu0 0.0
    %4099 = vmatprep.subr.mxu0 0.0
    %4100 = vmatpush1.xpose.msra.mxu0 0.0
    %4101 = vmatprep.subr.mxu0 0.0
    %4102 = vmatpush1.xpose.msra.mxu0 0.0
    %4103 = vmatprep.subr.mxu0 0.0
    %4104 = vmatpush1.xpose.msra.mxu0 0.0
    %4105 = vmatprep.subr.mxu0 0.0
    %4106 = vmatpush1.xpose.msra.mxu0 0.0
    %4107 = vmatprep.subr.mxu0 0.0
    %4108 = vmatpush1.xpose.msra.mxu0 0.0
    %4109 = vmatprep.subr.mxu0 0.0
    %4110 = vmatpush1.xpose.msra.mxu0 0.0
    %4111 = vmatprep.subr.mxu0 0.0
    %4112 = vmatpush1.xpose.msra.mxu0 0.0
    %4113 = vmatprep.subr.mxu0 0.0
    %4114 = vmatpush1.xpose.msra.mxu0 0.0
    %4115 = vmatprep.subr.mxu0 0.0
    %4116 = vmatpush1.xpose.msra.mxu0 %v4087
    %4117 = vmatprep.subr.mxu0 0.0
    %4118 = vmatpush1.xpose.msra.mxu0 %v4085
    %4119 = vmatprep.subr.mxu0 0.0
    %4120 = vmatpush1.xpose.msra.mxu0 %v4083
    %4121 = vmatprep.subr.mxu0 0.0
    %4122 = vmatpush2.xpose.msra.mxu0 0.0
    %4123 = vmatprep.subr.mxu0 0.0
    %4124 = vmatpush2.xpose.msra.mxu0 0.0
    %4125 = vmatprep.subr.mxu0 0.0
    %4126 = vmatpush2.xpose.msra.mxu0 0.0
    %4127 = vmatprep.subr.mxu0 0.0
    %4128 = vmatpush2.xpose.msra.mxu0 0.0
    %4129 = vmatprep.subr.mxu0 0.0
    %4130 = vmatpush2.xpose.msra.mxu0 0.0
    %4131 = vmatprep.subr.mxu0 0.0
    %4132 = vmatpush2.xpose.msra.mxu0 0.0
    %4133 = vmatprep.subr.mxu0 0.0
    %4134 = vmatpush2.xpose.msra.mxu0 0.0
    %4135 = vmatprep.subr.mxu0 0.0
    %4136 = vmatpush2.xpose.msra.mxu0 0.0
    %4137 = vmatprep.subr.mxu0 0.0
    %4138 = vmatpush2.xpose.msra.mxu0 0.0
    %4139 = vmatprep.subr.mxu0 0.0
    %4140 = vmatpush2.xpose.msra.mxu0 0.0
    %4141 = vmatprep.subr.mxu0 0.0
    %4142 = vmatpush2.xpose.msra.mxu0 0.0
    %4143 = vmatprep.subr.mxu0 0.0
    %4144 = vmatpush2.xpose.msra.mxu0 0.0
    %4145 = vmatprep.subr.mxu0 0.0
    %4146 = vmatpush2.xpose.msra.mxu0 0.0
    %4147 = vmatprep.subr.mxu0 0.0
    %4148 = vmatpush2.xpose.msra.mxu0 0.0
    %4149 = vmatprep.subr.mxu0 0.0
    %4150 = vmatpush2.xpose.msra.mxu0 0.0
    %4151 = vmatprep.subr.mxu0 0.0
    %4152 = vmatpush2.xpose.msra.mxu0 0.0
    %4153 = vmatprep.mubr.f32.mxu0 0.0
    %4154 = vmatmul.mubr.f32.gmra.mxu0 %v4077
    %v4155 = vpop.f32.mrf.mxu0
    %v4156 = vadd.f32 0.0, %v4155
    %v4157 = vpop.f32.mrf.mxu0
    %4158 = vmatprep.mubr.f32.mxu0 0.0
    %4159 = vmatmul.mubr.f32.gmra.mxu0 %v4079
    %v4160 = vpop.f32.mrf.mxu0
    %v4161 = vadd.f32 0.0, %v4160
    %v4162 = vpop.f32.mrf.mxu0
    %4163 = vmatprep.mubr.f32.mxu0 0.0
    %4164 = vmatmul.mubr.f32.gmra.mxu0 %v4081
    %v4165 = vpop.f32.mrf.mxu0
    %v4166 = vadd.f32 0.0, %v4165
    %v4167 = vpop.f32.mrf.mxu0
    %4168 = vdwg.mxu0
    %v4169 = vsel %vm502, %v4156, -inf
    %4170 = vmax.xlane.f32.xlu0 %v4169
    %v4171 = vpop.xlane.xlu0 %4170
    %v4172 = vsel %vm502, %v4161, -inf
    %4173 = vmax.xlane.f32.xlu0 %v4172
    %v4174 = vpop.xlane.xlu0 %4173
    %v4175 = vsel %vm509, %v4166, -inf
    %4176 = vmax.xlane.f32.xlu0 %v4175
    %v4177 = vpop.xlane.xlu0 %4176
    %v4178 = vsub.f32 %v4156, %v4171
    %v4179 = vsub.f32 %v4161, %v4174
    %v4180 = vsub.f32 %v4166, %v4177
    %v4181 = vmul.f32 %v4178, 1.442695
    %v4182 = vpow.pop %v4181
    %v4183 = vmul.f32 %v4179, 1.442695
    %v4184 = vpow.pop %v4183
    %v4185 = vmul.f32 %v4180, 1.442695
    %v4186 = vpow.pop %v4185
    %v4187 = vsel %vm502, %v4182, 0.0
    %4188 = vadd.xlane.f32.xlu0 %v4187
    %v4189 = vpop.xlane.xlu0 %4188
    %v4190 = vsel %vm502, %v4184, 0.0
    %4191 = vadd.xlane.f32.xlu0 %v4190
    %v4192 = vpop.xlane.xlu0 %4191
    %v4193 = vsel %vm509, %v4186, 0.0
    %4194 = vadd.xlane.f32.xlu0 %v4193
    %v4195 = vpop.xlane.xlu0 %4194
    %v4196 = vrcp.pop %v4189
    %v4197 = vmul.f32 %v4182, %v4196
    %v4198 = vrcp.pop %v4192
    %v4199 = vmul.f32 %v4184, %v4198
    %v4200 = vrcp.pop %v4195
    %v4201 = vmul.f32 %v4186, %v4200
    %4202 = vrot.lane.b32.xlu0 %v4068, 64
    %v4203 = vpop.permute.xlu0 %4202
    %4204 = vrot.lane.b32.xlu0 %v4070, 64
    %v4205 = vpop.permute.xlu0 %4204
    %4206 = vrot.lane.b32.xlu0 %v4069, 64
    %v4207 = vpop.permute.xlu0 %4206
    %v4211 = vsel %vm502, %v4197, 0
    %v4214 = vsel %vm502, %v4199, 0
    %v4217 = vsel %vm502, %v4201, 0
    %v4219 = vsel %vm177, %v4207, 0
    %4221 = vmatprep.subr.mxu0 0.0
    %4222 = vmatpush1.msra.mxu0 0.0
    %4223 = vmatprep.subr.mxu0 0.0
    %4224 = vmatpush1.msra.mxu0 0.0
    %4225 = vmatprep.subr.mxu0 0.0
    %4226 = vmatpush1.msra.mxu0 0.0
    %4227 = vmatprep.subr.mxu0 0.0
    %4228 = vmatpush1.msra.mxu0 0.0
    %4229 = vmatprep.subr.mxu0 0.0
    %4230 = vmatpush1.msra.mxu0 0.0
    %4231 = vmatprep.subr.mxu0 0.0
    %4232 = vmatpush1.msra.mxu0 0.0
    %4233 = vmatprep.subr.mxu0 0.0
    %4234 = vmatpush1.msra.mxu0 0.0
    %4235 = vmatprep.subr.mxu0 0.0
    %4236 = vmatpush1.msra.mxu0 0.0
    %4237 = vmatprep.subr.mxu0 0.0
    %4238 = vmatpush1.msra.mxu0 0.0
    %4239 = vmatprep.subr.mxu0 0.0
    %4240 = vmatpush1.msra.mxu0 0.0
    %4241 = vmatprep.subr.mxu0 0.0
    %4242 = vmatpush1.msra.mxu0 0.0
    %4243 = vmatprep.subr.mxu0 0.0
    %4244 = vmatpush1.msra.mxu0 0.0
    %4245 = vmatprep.subr.mxu0 0.0
    %4246 = vmatpush1.msra.mxu0 0.0
    %4247 = vmatprep.subr.mxu0 0.0
    %4248 = vmatpush1.msra.mxu0 %v4219
    %4249 = vmatprep.subr.mxu0 0.0
    %4250 = vmatpush1.msra.mxu0 %v4205
    %4251 = vmatprep.subr.mxu0 0.0
    %4252 = vmatpush1.msra.mxu0 %v4203
    %4253 = vmatprep.subr.mxu0 0.0
    %4254 = vmatpush2.msra.mxu0 0.0
    %4255 = vmatprep.subr.mxu0 0.0
    %4256 = vmatpush2.msra.mxu0 0.0
    %4257 = vmatprep.subr.mxu0 0.0
    %4258 = vmatpush2.msra.mxu0 0.0
    %4259 = vmatprep.subr.mxu0 0.0
    %4260 = vmatpush2.msra.mxu0 0.0
    %4261 = vmatprep.subr.mxu0 0.0
    %4262 = vmatpush2.msra.mxu0 0.0
    %4263 = vmatprep.subr.mxu0 0.0
    %4264 = vmatpush2.msra.mxu0 0.0
    %4265 = vmatprep.subr.mxu0 0.0
    %4266 = vmatpush2.msra.mxu0 0.0
    %4267 = vmatprep.subr.mxu0 0.0
    %4268 = vmatpush2.msra.mxu0 0.0
    %4269 = vmatprep.subr.mxu0 0.0
    %4270 = vmatpush2.msra.mxu0 0.0
    %4271 = vmatprep.subr.mxu0 0.0
    %4272 = vmatpush2.msra.mxu0 0.0
    %4273 = vmatprep.subr.mxu0 0.0
    %4274 = vmatpush2.msra.mxu0 0.0
    %4275 = vmatprep.subr.mxu0 0.0
    %4276 = vmatpush2.msra.mxu0 0.0
    %4277 = vmatprep.subr.mxu0 0.0
    %4278 = vmatpush2.msra.mxu0 0.0
    %4279 = vmatprep.subr.mxu0 0.0
    %4280 = vmatpush2.msra.mxu0 0.0
    %4281 = vmatprep.subr.mxu0 0.0
    %4282 = vmatpush2.msra.mxu0 0.0
    %4283 = vmatprep.subr.mxu0 0.0
    %4284 = vmatpush2.msra.mxu0 0.0
    %4285 = vmatprep.mubr.f32.mxu0 0.0
    %4286 = vmatmul.mubr.f32.gmra.mxu0 %v4211
    %v4287 = vpop.f32.mrf.mxu0
    %v4288 = vadd.f32 0.0, %v4287
    %v4289 = vpop.f32.mrf.mxu0
    %4290 = vmatprep.mubr.f32.mxu0 0.0
    %4291 = vmatmul.mubr.f32.gmra.mxu0 %v4214
    %v4292 = vpop.f32.mrf.mxu0
    %v4293 = vadd.f32 0.0, %v4292
    %v4294 = vpop.f32.mrf.mxu0
    %4295 = vmatprep.mubr.f32.mxu0 0.0
    %4296 = vmatmul.mubr.f32.gmra.mxu0 %v4217
    %v4297 = vpop.f32.mrf.mxu0
    %v4298 = vadd.f32 0.0, %v4297
    %v4299 = vpop.f32.mrf.mxu0
    %4300 = vdwg.mxu0
    %4301 = vrot.lane.b32.xlu0 %v4068, 120
    %v4302 = vpop.permute.xlu0 %4301
    %4303 = vrot.lane.b32.xlu0 %v4070, 120
    %v4304 = vpop.permute.xlu0 %4303
    %4305 = vrot.lane.b32.xlu0 %v4069, 120
    %v4306 = vpop.permute.xlu0 %4305
    %4307 = vrot.lane.b32.xlu0 %v4068, 88
    %v4308 = vpop.permute.xlu0 %4307
    %4309 = vrot.lane.b32.xlu0 %v4070, 88
    %v4310 = vpop.permute.xlu0 %4309
    %4311 = vrot.lane.b32.xlu0 %v4069, 88
    %v4312 = vpop.permute.xlu0 %4311
    %v4313 = vsel %vm409, %v4302, 0
    %v4315 = vsel %vm409, %v4304, 0
    %v4317 = vsel %vm409, %v4306, 0
    %v4319 = vsel %vm409, %v4308, 0
    %v4321 = vsel %vm409, %v4310, 0
    %v4323 = vsel %vm409, %v4312, 0
    %4325 = vmatprep.subr.mxu0 0.0
    %4326 = vmatpush1.xpose.msra.mxu0 0.0
    %4327 = vmatprep.subr.mxu0 0.0
    %4328 = vmatpush1.xpose.msra.mxu0 0.0
    %4329 = vmatprep.subr.mxu0 0.0
    %4330 = vmatpush1.xpose.msra.mxu0 0.0
    %4331 = vmatprep.subr.mxu0 0.0
    %4332 = vmatpush1.xpose.msra.mxu0 0.0
    %4333 = vmatprep.subr.mxu0 0.0
    %4334 = vmatpush1.xpose.msra.mxu0 0.0
    %4335 = vmatprep.subr.mxu0 0.0
    %4336 = vmatpush1.xpose.msra.mxu0 0.0
    %4337 = vmatprep.subr.mxu0 0.0
    %4338 = vmatpush1.xpose.msra.mxu0 0.0
    %4339 = vmatprep.subr.mxu0 0.0
    %4340 = vmatpush1.xpose.msra.mxu0 0.0
    %4341 = vmatprep.subr.mxu0 0.0
    %4342 = vmatpush1.xpose.msra.mxu0 0.0
    %4343 = vmatprep.subr.mxu0 0.0
    %4344 = vmatpush1.xpose.msra.mxu0 0.0
    %4345 = vmatprep.subr.mxu0 0.0
    %4346 = vmatpush1.xpose.msra.mxu0 0.0
    %4347 = vmatprep.subr.mxu0 0.0
    %4348 = vmatpush1.xpose.msra.mxu0 0.0
    %4349 = vmatprep.subr.mxu0 0.0
    %4350 = vmatpush1.xpose.msra.mxu0 0.0
    %4351 = vmatprep.subr.mxu0 0.0
    %4352 = vmatpush1.xpose.msra.mxu0 %v4323
    %4353 = vmatprep.subr.mxu0 0.0
    %4354 = vmatpush1.xpose.msra.mxu0 %v4321
    %4355 = vmatprep.subr.mxu0 0.0
    %4356 = vmatpush1.xpose.msra.mxu0 %v4319
    %4357 = vmatprep.subr.mxu0 0.0
    %4358 = vmatpush2.xpose.msra.mxu0 0.0
    %4359 = vmatprep.subr.mxu0 0.0
    %4360 = vmatpush2.xpose.msra.mxu0 0.0
    %4361 = vmatprep.subr.mxu0 0.0
    %4362 = vmatpush2.xpose.msra.mxu0 0.0
    %4363 = vmatprep.subr.mxu0 0.0
    %4364 = vmatpush2.xpose.msra.mxu0 0.0
    %4365 = vmatprep.subr.mxu0 0.0
    %4366 = vmatpush2.xpose.msra.mxu0 0.0
    %4367 = vmatprep.subr.mxu0 0.0
    %4368 = vmatpush2.xpose.msra.mxu0 0.0
    %4369 = vmatprep.subr.mxu0 0.0
    %4370 = vmatpush2.xpose.msra.mxu0 0.0
    %4371 = vmatprep.subr.mxu0 0.0
    %4372 = vmatpush2.xpose.msra.mxu0 0.0
    %4373 = vmatprep.subr.mxu0 0.0
    %4374 = vmatpush2.xpose.msra.mxu0 0.0
    %4375 = vmatprep.subr.mxu0 0.0
    %4376 = vmatpush2.xpose.msra.mxu0 0.0
    %4377 = vmatprep.subr.mxu0 0.0
    %4378 = vmatpush2.xpose.msra.mxu0 0.0
    %4379 = vmatprep.subr.mxu0 0.0
    %4380 = vmatpush2.xpose.msra.mxu0 0.0
    %4381 = vmatprep.subr.mxu0 0.0
    %4382 = vmatpush2.xpose.msra.mxu0 0.0
    %4383 = vmatprep.subr.mxu0 0.0
    %4384 = vmatpush2.xpose.msra.mxu0 0.0
    %4385 = vmatprep.subr.mxu0 0.0
    %4386 = vmatpush2.xpose.msra.mxu0 0.0
    %4387 = vmatprep.subr.mxu0 0.0
    %4388 = vmatpush2.xpose.msra.mxu0 0.0
    %4389 = vmatprep.mubr.f32.mxu0 0.0
    %4390 = vmatmul.mubr.f32.gmra.mxu0 %v4313
    %v4391 = vpop.f32.mrf.mxu0
    %v4392 = vadd.f32 0.0, %v4391
    %v4393 = vpop.f32.mrf.mxu0
    %4394 = vmatprep.mubr.f32.mxu0 0.0
    %4395 = vmatmul.mubr.f32.gmra.mxu0 %v4315
    %v4396 = vpop.f32.mrf.mxu0
    %v4397 = vadd.f32 0.0, %v4396
    %v4398 = vpop.f32.mrf.mxu0
    %4399 = vmatprep.mubr.f32.mxu0 0.0
    %4400 = vmatmul.mubr.f32.gmra.mxu0 %v4317
    %v4401 = vpop.f32.mrf.mxu0
    %v4402 = vadd.f32 0.0, %v4401
    %v4403 = vpop.f32.mrf.mxu0
    %4404 = vdwg.mxu0
    %v4405 = vsel %vm502, %v4392, -inf
    %4406 = vmax.xlane.f32.xlu0 %v4405
    %v4407 = vpop.xlane.xlu0 %4406
    %v4408 = vsel %vm502, %v4397, -inf
    %4409 = vmax.xlane.f32.xlu0 %v4408
    %v4410 = vpop.xlane.xlu0 %4409
    %v4411 = vsel %vm509, %v4402, -inf
    %4412 = vmax.xlane.f32.xlu0 %v4411
    %v4413 = vpop.xlane.xlu0 %4412
    %v4414 = vsub.f32 %v4392, %v4407
    %v4415 = vsub.f32 %v4397, %v4410
    %v4416 = vsub.f32 %v4402, %v4413
    %v4417 = vmul.f32 %v4414, 1.442695
    %v4418 = vpow.pop %v4417
    %v4419 = vmul.f32 %v4415, 1.442695
    %v4420 = vpow.pop %v4419
    %v4421 = vmul.f32 %v4416, 1.442695
    %v4422 = vpow.pop %v4421
    %v4423 = vsel %vm502, %v4418, 0.0
    %4424 = vadd.xlane.f32.xlu0 %v4423
    %v4425 = vpop.xlane.xlu0 %4424
    %v4426 = vsel %vm502, %v4420, 0.0
    %4427 = vadd.xlane.f32.xlu0 %v4426
    %v4428 = vpop.xlane.xlu0 %4427
    %v4429 = vsel %vm509, %v4422, 0.0
    %4430 = vadd.xlane.f32.xlu0 %v4429
    %v4431 = vpop.xlane.xlu0 %4430
    %v4432 = vrcp.pop %v4425
    %v4433 = vmul.f32 %v4418, %v4432
    %v4434 = vrcp.pop %v4428
    %v4435 = vmul.f32 %v4420, %v4434
    %v4436 = vrcp.pop %v4431
    %v4437 = vmul.f32 %v4422, %v4436
    %4438 = vrot.lane.b32.xlu0 %v4068, 56
    %v4439 = vpop.permute.xlu0 %4438
    %4440 = vrot.lane.b32.xlu0 %v4070, 56
    %v4441 = vpop.permute.xlu0 %4440
    %4442 = vrot.lane.b32.xlu0 %v4069, 56
    %v4443 = vpop.permute.xlu0 %4442
    %v4447 = vsel %vm502, %v4433, 0
    %v4450 = vsel %vm502, %v4435, 0
    %v4453 = vsel %vm502, %v4437, 0
    %v4455 = vsel %vm177, %v4443, 0
    %4457 = vmatprep.subr.mxu0 0.0
    %4458 = vmatpush1.msra.mxu0 0.0
    %4459 = vmatprep.subr.mxu0 0.0
    %4460 = vmatpush1.msra.mxu0 0.0
    %4461 = vmatprep.subr.mxu0 0.0
    %4462 = vmatpush1.msra.mxu0 0.0
    %4463 = vmatprep.subr.mxu0 0.0
    %4464 = vmatpush1.msra.mxu0 0.0
    %4465 = vmatprep.subr.mxu0 0.0
    %4466 = vmatpush1.msra.mxu0 0.0
    %4467 = vmatprep.subr.mxu0 0.0
    %4468 = vmatpush1.msra.mxu0 0.0
    %4469 = vmatprep.subr.mxu0 0.0
    %4470 = vmatpush1.msra.mxu0 0.0
    %4471 = vmatprep.subr.mxu0 0.0
    %4472 = vmatpush1.msra.mxu0 0.0
    %4473 = vmatprep.subr.mxu0 0.0
    %4474 = vmatpush1.msra.mxu0 0.0
    %4475 = vmatprep.subr.mxu0 0.0
    %4476 = vmatpush1.msra.mxu0 0.0
    %4477 = vmatprep.subr.mxu0 0.0
    %4478 = vmatpush1.msra.mxu0 0.0
    %4479 = vmatprep.subr.mxu0 0.0
    %4480 = vmatpush1.msra.mxu0 0.0
    %4481 = vmatprep.subr.mxu0 0.0
    %4482 = vmatpush1.msra.mxu0 0.0
    %4483 = vmatprep.subr.mxu0 0.0
    %4484 = vmatpush1.msra.mxu0 %v4455
    %4485 = vmatprep.subr.mxu0 0.0
    %4486 = vmatpush1.msra.mxu0 %v4441
    %4487 = vmatprep.subr.mxu0 0.0
    %4488 = vmatpush1.msra.mxu0 %v4439
    %4489 = vmatprep.subr.mxu0 0.0
    %4490 = vmatpush2.msra.mxu0 0.0
    %4491 = vmatprep.subr.mxu0 0.0
    %4492 = vmatpush2.msra.mxu0 0.0
    %4493 = vmatprep.subr.mxu0 0.0
    %4494 = vmatpush2.msra.mxu0 0.0
    %4495 = vmatprep.subr.mxu0 0.0
    %4496 = vmatpush2.msra.mxu0 0.0
    %4497 = vmatprep.subr.mxu0 0.0
    %4498 = vmatpush2.msra.mxu0 0.0
    %4499 = vmatprep.subr.mxu0 0.0
    %4500 = vmatpush2.msra.mxu0 0.0
    %4501 = vmatprep.subr.mxu0 0.0
    %4502 = vmatpush2.msra.mxu0 0.0
    %4503 = vmatprep.subr.mxu0 0.0
    %4504 = vmatpush2.msra.mxu0 0.0
    %4505 = vmatprep.subr.mxu0 0.0
    %4506 = vmatpush2.msra.mxu0 0.0
    %4507 = vmatprep.subr.mxu0 0.0
    %4508 = vmatpush2.msra.mxu0 0.0
    %4509 = vmatprep.subr.mxu0 0.0
    %4510 = vmatpush2.msra.mxu0 0.0
    %4511 = vmatprep.subr.mxu0 0.0
    %4512 = vmatpush2.msra.mxu0 0.0
    %4513 = vmatprep.subr.mxu0 0.0
    %4514 = vmatpush2.msra.mxu0 0.0
    %4515 = vmatprep.subr.mxu0 0.0
    %4516 = vmatpush2.msra.mxu0 0.0
    %4517 = vmatprep.subr.mxu0 0.0
    %4518 = vmatpush2.msra.mxu0 0.0
    %4519 = vmatprep.subr.mxu0 0.0
    %4520 = vmatpush2.msra.mxu0 0.0
    %4521 = vmatprep.mubr.f32.mxu0 0.0
    %4522 = vmatmul.mubr.f32.gmra.mxu0 %v4447
    %v4523 = vpop.f32.mrf.mxu0
    %v4524 = vadd.f32 0.0, %v4523
    %v4525 = vpop.f32.mrf.mxu0
    %4526 = vmatprep.mubr.f32.mxu0 0.0
    %4527 = vmatmul.mubr.f32.gmra.mxu0 %v4450
    %v4528 = vpop.f32.mrf.mxu0
    %v4529 = vadd.f32 0.0, %v4528
    %v4530 = vpop.f32.mrf.mxu0
    %4531 = vmatprep.mubr.f32.mxu0 0.0
    %4532 = vmatmul.mubr.f32.gmra.mxu0 %v4453
    %v4533 = vpop.f32.mrf.mxu0
    %v4534 = vadd.f32 0.0, %v4533
    %v4535 = vpop.f32.mrf.mxu0
    %4536 = vdwg.mxu0
    %4537 = vrot.lane.b32.xlu0 %v4068, 112
    %v4538 = vpop.permute.xlu0 %4537
    %4539 = vrot.lane.b32.xlu0 %v4070, 112
    %v4540 = vpop.permute.xlu0 %4539
    %4541 = vrot.lane.b32.xlu0 %v4069, 112
    %v4542 = vpop.permute.xlu0 %4541
    %4543 = vrot.lane.b32.xlu0 %v4068, 80
    %v4544 = vpop.permute.xlu0 %4543
    %4545 = vrot.lane.b32.xlu0 %v4070, 80
    %v4546 = vpop.permute.xlu0 %4545
    %4547 = vrot.lane.b32.xlu0 %v4069, 80
    %v4548 = vpop.permute.xlu0 %4547
    %v4549 = vsel %vm409, %v4538, 0
    %v4551 = vsel %vm409, %v4540, 0
    %v4553 = vsel %vm409, %v4542, 0
    %v4555 = vsel %vm409, %v4544, 0
    %v4557 = vsel %vm409, %v4546, 0
    %v4559 = vsel %vm409, %v4548, 0
    %4561 = vmatprep.subr.mxu0 0.0
    %4562 = vmatpush1.xpose.msra.mxu0 0.0
    %4563 = vmatprep.subr.mxu0 0.0
    %4564 = vmatpush1.xpose.msra.mxu0 0.0
    %4565 = vmatprep.subr.mxu0 0.0
    %4566 = vmatpush1.xpose.msra.mxu0 0.0
    %4567 = vmatprep.subr.mxu0 0.0
    %4568 = vmatpush1.xpose.msra.mxu0 0.0
    %4569 = vmatprep.subr.mxu0 0.0
    %4570 = vmatpush1.xpose.msra.mxu0 0.0
    %4571 = vmatprep.subr.mxu0 0.0
    %4572 = vmatpush1.xpose.msra.mxu0 0.0
    %4573 = vmatprep.subr.mxu0 0.0
    %4574 = vmatpush1.xpose.msra.mxu0 0.0
    %4575 = vmatprep.subr.mxu0 0.0
    %4576 = vmatpush1.xpose.msra.mxu0 0.0
    %4577 = vmatprep.subr.mxu0 0.0
    %4578 = vmatpush1.xpose.msra.mxu0 0.0
    %4579 = vmatprep.subr.mxu0 0.0
    %4580 = vmatpush1.xpose.msra.mxu0 0.0
    %4581 = vmatprep.subr.mxu0 0.0
    %4582 = vmatpush1.xpose.msra.mxu0 0.0
    %4583 = vmatprep.subr.mxu0 0.0
    %4584 = vmatpush1.xpose.msra.mxu0 0.0
    %4585 = vmatprep.subr.mxu0 0.0
    %4586 = vmatpush1.xpose.msra.mxu0 0.0
    %4587 = vmatprep.subr.mxu0 0.0
    %4588 = vmatpush1.xpose.msra.mxu0 %v4559
    %4589 = vmatprep.subr.mxu0 0.0
    %4590 = vmatpush1.xpose.msra.mxu0 %v4557
    %4591 = vmatprep.subr.mxu0 0.0
    %4592 = vmatpush1.xpose.msra.mxu0 %v4555
    %4593 = vmatprep.subr.mxu0 0.0
    %4594 = vmatpush2.xpose.msra.mxu0 0.0
    %4595 = vmatprep.subr.mxu0 0.0
    %4596 = vmatpush2.xpose.msra.mxu0 0.0
    %4597 = vmatprep.subr.mxu0 0.0
    %4598 = vmatpush2.xpose.msra.mxu0 0.0
    %4599 = vmatprep.subr.mxu0 0.0
    %4600 = vmatpush2.xpose.msra.mxu0 0.0
    %4601 = vmatprep.subr.mxu0 0.0
    %4602 = vmatpush2.xpose.msra.mxu0 0.0
    %4603 = vmatprep.subr.mxu0 0.0
    %4604 = vmatpush2.xpose.msra.mxu0 0.0
    %4605 = vmatprep.subr.mxu0 0.0
    %4606 = vmatpush2.xpose.msra.mxu0 0.0
    %4607 = vmatprep.subr.mxu0 0.0
    %4608 = vmatpush2.xpose.msra.mxu0 0.0
    %4609 = vmatprep.subr.mxu0 0.0
    %4610 = vmatpush2.xpose.msra.mxu0 0.0
    %4611 = vmatprep.subr.mxu0 0.0
    %4612 = vmatpush2.xpose.msra.mxu0 0.0
    %4613 = vmatprep.subr.mxu0 0.0
    %4614 = vmatpush2.xpose.msra.mxu0 0.0
    %4615 = vmatprep.subr.mxu0 0.0
    %4616 = vmatpush2.xpose.msra.mxu0 0.0
    %4617 = vmatprep.subr.mxu0 0.0
    %4618 = vmatpush2.xpose.msra.mxu0 0.0
    %4619 = vmatprep.subr.mxu0 0.0
    %4620 = vmatpush2.xpose.msra.mxu0 0.0
    %4621 = vmatprep.subr.mxu0 0.0
    %4622 = vmatpush2.xpose.msra.mxu0 0.0
    %4623 = vmatprep.subr.mxu0 0.0
    %4624 = vmatpush2.xpose.msra.mxu0 0.0
    %4625 = vmatprep.mubr.f32.mxu0 0.0
    %4626 = vmatmul.mubr.f32.gmra.mxu0 %v4549
    %v4627 = vpop.f32.mrf.mxu0
    %v4628 = vadd.f32 0.0, %v4627
    %v4629 = vpop.f32.mrf.mxu0
    %4630 = vmatprep.mubr.f32.mxu0 0.0
    %4631 = vmatmul.mubr.f32.gmra.mxu0 %v4551
    %v4632 = vpop.f32.mrf.mxu0
    %v4633 = vadd.f32 0.0, %v4632
    %v4634 = vpop.f32.mrf.mxu0
    %4635 = vmatprep.mubr.f32.mxu0 0.0
    %4636 = vmatmul.mubr.f32.gmra.mxu0 %v4553
    %v4637 = vpop.f32.mrf.mxu0
    %v4638 = vadd.f32 0.0, %v4637
    %v4639 = vpop.f32.mrf.mxu0
    %4640 = vdwg.mxu0
    %v4641 = vsel %vm502, %v4628, -inf
    %4642 = vmax.xlane.f32.xlu0 %v4641
    %v4643 = vpop.xlane.xlu0 %4642
    %v4644 = vsel %vm502, %v4633, -inf
    %4645 = vmax.xlane.f32.xlu0 %v4644
    %v4646 = vpop.xlane.xlu0 %4645
    %v4647 = vsel %vm509, %v4638, -inf
    %4648 = vmax.xlane.f32.xlu0 %v4647
    %v4649 = vpop.xlane.xlu0 %4648
    %v4650 = vsub.f32 %v4628, %v4643
    %v4651 = vsub.f32 %v4633, %v4646
    %v4652 = vsub.f32 %v4638, %v4649
    %v4653 = vmul.f32 %v4650, 1.442695
    %v4654 = vpow.pop %v4653
    %v4655 = vmul.f32 %v4651, 1.442695
    %v4656 = vpow.pop %v4655
    %v4657 = vmul.f32 %v4652, 1.442695
    %v4658 = vpow.pop %v4657
    %v4659 = vsel %vm502, %v4654, 0.0
    %4660 = vadd.xlane.f32.xlu0 %v4659
    %v4661 = vpop.xlane.xlu0 %4660
    %v4662 = vsel %vm502, %v4656, 0.0
    %4663 = vadd.xlane.f32.xlu0 %v4662
    %v4664 = vpop.xlane.xlu0 %4663
    %v4665 = vsel %vm509, %v4658, 0.0
    %4666 = vadd.xlane.f32.xlu0 %v4665
    %v4667 = vpop.xlane.xlu0 %4666
    %v4668 = vrcp.pop %v4661
    %v4669 = vmul.f32 %v4654, %v4668
    %v4670 = vrcp.pop %v4664
    %v4671 = vmul.f32 %v4656, %v4670
    %v4672 = vrcp.pop %v4667
    %v4673 = vmul.f32 %v4658, %v4672
    %4674 = vrot.lane.b32.xlu0 %v4068, 48
    %v4675 = vpop.permute.xlu0 %4674
    %4676 = vrot.lane.b32.xlu0 %v4070, 48
    %v4677 = vpop.permute.xlu0 %4676
    %4678 = vrot.lane.b32.xlu0 %v4069, 48
    %v4679 = vpop.permute.xlu0 %4678
    %v4683 = vsel %vm502, %v4669, 0
    %v4686 = vsel %vm502, %v4671, 0
    %v4689 = vsel %vm502, %v4673, 0
    %v4691 = vsel %vm177, %v4679, 0
    %4693 = vmatprep.subr.mxu0 0.0
    %4694 = vmatpush1.msra.mxu0 0.0
    %4695 = vmatprep.subr.mxu0 0.0
    %4696 = vmatpush1.msra.mxu0 0.0
    %4697 = vmatprep.subr.mxu0 0.0
    %4698 = vmatpush1.msra.mxu0 0.0
    %4699 = vmatprep.subr.mxu0 0.0
    %4700 = vmatpush1.msra.mxu0 0.0
    %4701 = vmatprep.subr.mxu0 0.0
    %4702 = vmatpush1.msra.mxu0 0.0
    %4703 = vmatprep.subr.mxu0 0.0
    %4704 = vmatpush1.msra.mxu0 0.0
    %4705 = vmatprep.subr.mxu0 0.0
    %4706 = vmatpush1.msra.mxu0 0.0
    %4707 = vmatprep.subr.mxu0 0.0
    %4708 = vmatpush1.msra.mxu0 0.0
    %4709 = vmatprep.subr.mxu0 0.0
    %4710 = vmatpush1.msra.mxu0 0.0
    %4711 = vmatprep.subr.mxu0 0.0
    %4712 = vmatpush1.msra.mxu0 0.0
    %4713 = vmatprep.subr.mxu0 0.0
    %4714 = vmatpush1.msra.mxu0 0.0
    %4715 = vmatprep.subr.mxu0 0.0
    %4716 = vmatpush1.msra.mxu0 0.0
    %4717 = vmatprep.subr.mxu0 0.0
    %4718 = vmatpush1.msra.mxu0 0.0
    %4719 = vmatprep.subr.mxu0 0.0
    %4720 = vmatpush1.msra.mxu0 %v4691
    %4721 = vmatprep.subr.mxu0 0.0
    %4722 = vmatpush1.msra.mxu0 %v4677
    %4723 = vmatprep.subr.mxu0 0.0
    %4724 = vmatpush1.msra.mxu0 %v4675
    %4725 = vmatprep.subr.mxu0 0.0
    %4726 = vmatpush2.msra.mxu0 0.0
    %4727 = vmatprep.subr.mxu0 0.0
    %4728 = vmatpush2.msra.mxu0 0.0
    %4729 = vmatprep.subr.mxu0 0.0
    %4730 = vmatpush2.msra.mxu0 0.0
    %4731 = vmatprep.subr.mxu0 0.0
    %4732 = vmatpush2.msra.mxu0 0.0
    %4733 = vmatprep.subr.mxu0 0.0
    %4734 = vmatpush2.msra.mxu0 0.0
    %4735 = vmatprep.subr.mxu0 0.0
    %4736 = vmatpush2.msra.mxu0 0.0
    %4737 = vmatprep.subr.mxu0 0.0
    %4738 = vmatpush2.msra.mxu0 0.0
    %4739 = vmatprep.subr.mxu0 0.0
    %4740 = vmatpush2.msra.mxu0 0.0
    %4741 = vmatprep.subr.mxu0 0.0
    %4742 = vmatpush2.msra.mxu0 0.0
    %4743 = vmatprep.subr.mxu0 0.0
    %4744 = vmatpush2.msra.mxu0 0.0
    %4745 = vmatprep.subr.mxu0 0.0
    %4746 = vmatpush2.msra.mxu0 0.0
    %4747 = vmatprep.subr.mxu0 0.0
    %4748 = vmatpush2.msra.mxu0 0.0
    %4749 = vmatprep.subr.mxu0 0.0
    %4750 = vmatpush2.msra.mxu0 0.0
    %4751 = vmatprep.subr.mxu0 0.0
    %4752 = vmatpush2.msra.mxu0 0.0
    %4753 = vmatprep.subr.mxu0 0.0
    %4754 = vmatpush2.msra.mxu0 0.0
    %4755 = vmatprep.subr.mxu0 0.0
    %4756 = vmatpush2.msra.mxu0 0.0
    %4757 = vmatprep.mubr.f32.mxu0 0.0
    %4758 = vmatmul.mubr.f32.gmra.mxu0 %v4683
    %v4759 = vpop.f32.mrf.mxu0
    %v4760 = vadd.f32 0.0, %v4759
    %v4761 = vpop.f32.mrf.mxu0
    %4762 = vmatprep.mubr.f32.mxu0 0.0
    %4763 = vmatmul.mubr.f32.gmra.mxu0 %v4686
    %v4764 = vpop.f32.mrf.mxu0
    %v4765 = vadd.f32 0.0, %v4764
    %v4766 = vpop.f32.mrf.mxu0
    %4767 = vmatprep.mubr.f32.mxu0 0.0
    %4768 = vmatmul.mubr.f32.gmra.mxu0 %v4689
    %v4769 = vpop.f32.mrf.mxu0
    %v4770 = vadd.f32 0.0, %v4769
    %v4771 = vpop.f32.mrf.mxu0
    %4772 = vdwg.mxu0
    %4773 = vrot.lane.b32.xlu0 %v4068, 104
    %v4774 = vpop.permute.xlu0 %4773
    %4775 = vrot.lane.b32.xlu0 %v4070, 104
    %v4776 = vpop.permute.xlu0 %4775
    %4777 = vrot.lane.b32.xlu0 %v4069, 104
    %v4778 = vpop.permute.xlu0 %4777
    %4779 = vrot.lane.b32.xlu0 %v4068, 72
    %v4780 = vpop.permute.xlu0 %4779
    %4781 = vrot.lane.b32.xlu0 %v4070, 72
    %v4782 = vpop.permute.xlu0 %4781
    %4783 = vrot.lane.b32.xlu0 %v4069, 72
    %v4784 = vpop.permute.xlu0 %4783
    %v4785 = vsel %vm409, %v4774, 0
    %v4787 = vsel %vm409, %v4776, 0
    %v4789 = vsel %vm409, %v4778, 0
    %v4791 = vsel %vm409, %v4780, 0
    %v4793 = vsel %vm409, %v4782, 0
    %v4795 = vsel %vm409, %v4784, 0
    %4797 = vmatprep.subr.mxu0 0.0
    %4798 = vmatpush1.xpose.msra.mxu0 0.0
    %4799 = vmatprep.subr.mxu0 0.0
    %4800 = vmatpush1.xpose.msra.mxu0 0.0
    %4801 = vmatprep.subr.mxu0 0.0
    %4802 = vmatpush1.xpose.msra.mxu0 0.0
    %4803 = vmatprep.subr.mxu0 0.0
    %4804 = vmatpush1.xpose.msra.mxu0 0.0
    %4805 = vmatprep.subr.mxu0 0.0
    %4806 = vmatpush1.xpose.msra.mxu0 0.0
    %4807 = vmatprep.subr.mxu0 0.0
    %4808 = vmatpush1.xpose.msra.mxu0 0.0
    %4809 = vmatprep.subr.mxu0 0.0
    %4810 = vmatpush1.xpose.msra.mxu0 0.0
    %4811 = vmatprep.subr.mxu0 0.0
    %4812 = vmatpush1.xpose.msra.mxu0 0.0
    %4813 = vmatprep.subr.mxu0 0.0
    %4814 = vmatpush1.xpose.msra.mxu0 0.0
    %4815 = vmatprep.subr.mxu0 0.0
    %4816 = vmatpush1.xpose.msra.mxu0 0.0
    %4817 = vmatprep.subr.mxu0 0.0
    %4818 = vmatpush1.xpose.msra.mxu0 0.0
    %4819 = vmatprep.subr.mxu0 0.0
    %4820 = vmatpush1.xpose.msra.mxu0 0.0
    %4821 = vmatprep.subr.mxu0 0.0
    %4822 = vmatpush1.xpose.msra.mxu0 0.0
    %4823 = vmatprep.subr.mxu0 0.0
    %4824 = vmatpush1.xpose.msra.mxu0 %v4795
    %4825 = vmatprep.subr.mxu0 0.0
    %4826 = vmatpush1.xpose.msra.mxu0 %v4793
    %4827 = vmatprep.subr.mxu0 0.0
    %4828 = vmatpush1.xpose.msra.mxu0 %v4791
    %4829 = vmatprep.subr.mxu0 0.0
    %4830 = vmatpush2.xpose.msra.mxu0 0.0
    %4831 = vmatprep.subr.mxu0 0.0
    %4832 = vmatpush2.xpose.msra.mxu0 0.0
    %4833 = vmatprep.subr.mxu0 0.0
    %4834 = vmatpush2.xpose.msra.mxu0 0.0
    %4835 = vmatprep.subr.mxu0 0.0
    %4836 = vmatpush2.xpose.msra.mxu0 0.0
    %4837 = vmatprep.subr.mxu0 0.0
    %4838 = vmatpush2.xpose.msra.mxu0 0.0
    %4839 = vmatprep.subr.mxu0 0.0
    %4840 = vmatpush2.xpose.msra.mxu0 0.0
    %4841 = vmatprep.subr.mxu0 0.0
    %4842 = vmatpush2.xpose.msra.mxu0 0.0
    %4843 = vmatprep.subr.mxu0 0.0
    %4844 = vmatpush2.xpose.msra.mxu0 0.0
    %4845 = vmatprep.subr.mxu0 0.0
    %4846 = vmatpush2.xpose.msra.mxu0 0.0
    %4847 = vmatprep.subr.mxu0 0.0
    %4848 = vmatpush2.xpose.msra.mxu0 0.0
    %4849 = vmatprep.subr.mxu0 0.0
    %4850 = vmatpush2.xpose.msra.mxu0 0.0
    %4851 = vmatprep.subr.mxu0 0.0
    %4852 = vmatpush2.xpose.msra.mxu0 0.0
    %4853 = vmatprep.subr.mxu0 0.0
    %4854 = vmatpush2.xpose.msra.mxu0 0.0
    %4855 = vmatprep.subr.mxu0 0.0
    %4856 = vmatpush2.xpose.msra.mxu0 0.0
    %4857 = vmatprep.subr.mxu0 0.0
    %4858 = vmatpush2.xpose.msra.mxu0 0.0
    %4859 = vmatprep.subr.mxu0 0.0
    %4860 = vmatpush2.xpose.msra.mxu0 0.0
    %4861 = vmatprep.mubr.f32.mxu0 0.0
    %4862 = vmatmul.mubr.f32.gmra.mxu0 %v4785
    %v4863 = vpop.f32.mrf.mxu0
    %v4864 = vadd.f32 0.0, %v4863
    %v4865 = vpop.f32.mrf.mxu0
    %4866 = vmatprep.mubr.f32.mxu0 0.0
    %4867 = vmatmul.mubr.f32.gmra.mxu0 %v4787
    %v4868 = vpop.f32.mrf.mxu0
    %v4869 = vadd.f32 0.0, %v4868
    %v4870 = vpop.f32.mrf.mxu0
    %4871 = vmatprep.mubr.f32.mxu0 0.0
    %4872 = vmatmul.mubr.f32.gmra.mxu0 %v4789
    %v4873 = vpop.f32.mrf.mxu0
    %v4874 = vadd.f32 0.0, %v4873
    %v4875 = vpop.f32.mrf.mxu0
    %4876 = vdwg.mxu0
    %v4877 = vsel %vm502, %v4864, -inf
    %4878 = vmax.xlane.f32.xlu0 %v4877
    %v4879 = vpop.xlane.xlu0 %4878
    %v4880 = vsel %vm502, %v4869, -inf
    %4881 = vmax.xlane.f32.xlu0 %v4880
    %v4882 = vpop.xlane.xlu0 %4881
    %v4883 = vsel %vm509, %v4874, -inf
    %4884 = vmax.xlane.f32.xlu0 %v4883
    %v4885 = vpop.xlane.xlu0 %4884
    %v4886 = vsub.f32 %v4864, %v4879
    %v4887 = vsub.f32 %v4869, %v4882
    %v4888 = vsub.f32 %v4874, %v4885
    %v4889 = vmul.f32 %v4886, 1.442695
    %v4890 = vpow.pop %v4889
    %v4891 = vmul.f32 %v4887, 1.442695
    %v4892 = vpow.pop %v4891
    %v4893 = vmul.f32 %v4888, 1.442695
    %v4894 = vpow.pop %v4893
    %v4895 = vsel %vm502, %v4890, 0.0
    %4896 = vadd.xlane.f32.xlu0 %v4895
    %v4897 = vpop.xlane.xlu0 %4896
    %v4898 = vsel %vm502, %v4892, 0.0
    %4899 = vadd.xlane.f32.xlu0 %v4898
    %v4900 = vpop.xlane.xlu0 %4899
    %v4901 = vsel %vm509, %v4894, 0.0
    %4902 = vadd.xlane.f32.xlu0 %v4901
    %v4903 = vpop.xlane.xlu0 %4902
    %v4904 = vrcp.pop %v4897
    %v4905 = vmul.f32 %v4890, %v4904
    %v4906 = vrcp.pop %v4900
    %v4907 = vmul.f32 %v4892, %v4906
    %v4908 = vrcp.pop %v4903
    %v4909 = vmul.f32 %v4894, %v4908
    %4910 = vrot.lane.b32.xlu0 %v4068, 40
    %v4911 = vpop.permute.xlu0 %4910
    %4912 = vrot.lane.b32.xlu0 %v4070, 40
    %v4913 = vpop.permute.xlu0 %4912
    %4914 = vrot.lane.b32.xlu0 %v4069, 40
    %v4915 = vpop.permute.xlu0 %4914
    %v4919 = vsel %vm502, %v4905, 0
    %v4922 = vsel %vm502, %v4907, 0
    %v4925 = vsel %vm502, %v4909, 0
    %v4927 = vsel %vm177, %v4915, 0
    %4929 = vmatprep.subr.mxu0 0.0
    %4930 = vmatpush1.msra.mxu0 0.0
    %4931 = vmatprep.subr.mxu0 0.0
    %4932 = vmatpush1.msra.mxu0 0.0
    %4933 = vmatprep.subr.mxu0 0.0
    %4934 = vmatpush1.msra.mxu0 0.0
    %4935 = vmatprep.subr.mxu0 0.0
    %4936 = vmatpush1.msra.mxu0 0.0
    %4937 = vmatprep.subr.mxu0 0.0
    %4938 = vmatpush1.msra.mxu0 0.0
    %4939 = vmatprep.subr.mxu0 0.0
    %4940 = vmatpush1.msra.mxu0 0.0
    %4941 = vmatprep.subr.mxu0 0.0
    %4942 = vmatpush1.msra.mxu0 0.0
    %4943 = vmatprep.subr.mxu0 0.0
    %4944 = vmatpush1.msra.mxu0 0.0
    %4945 = vmatprep.subr.mxu0 0.0
    %4946 = vmatpush1.msra.mxu0 0.0
    %4947 = vmatprep.subr.mxu0 0.0
    %4948 = vmatpush1.msra.mxu0 0.0
    %4949 = vmatprep.subr.mxu0 0.0
    %4950 = vmatpush1.msra.mxu0 0.0
    %4951 = vmatprep.subr.mxu0 0.0
    %4952 = vmatpush1.msra.mxu0 0.0
    %4953 = vmatprep.subr.mxu0 0.0
    %4954 = vmatpush1.msra.mxu0 0.0
    %4955 = vmatprep.subr.mxu0 0.0
    %4956 = vmatpush1.msra.mxu0 %v4927
    %4957 = vmatprep.subr.mxu0 0.0
    %4958 = vmatpush1.msra.mxu0 %v4913
    %4959 = vmatprep.subr.mxu0 0.0
    %4960 = vmatpush1.msra.mxu0 %v4911
    %4961 = vmatprep.subr.mxu0 0.0
    %4962 = vmatpush2.msra.mxu0 0.0
    %4963 = vmatprep.subr.mxu0 0.0
    %4964 = vmatpush2.msra.mxu0 0.0
    %4965 = vmatprep.subr.mxu0 0.0
    %4966 = vmatpush2.msra.mxu0 0.0
    %4967 = vmatprep.subr.mxu0 0.0
    %4968 = vmatpush2.msra.mxu0 0.0
    %4969 = vmatprep.subr.mxu0 0.0
    %4970 = vmatpush2.msra.mxu0 0.0
    %4971 = vmatprep.subr.mxu0 0.0
    %4972 = vmatpush2.msra.mxu0 0.0
    %4973 = vmatprep.subr.mxu0 0.0
    %4974 = vmatpush2.msra.mxu0 0.0
    %4975 = vmatprep.subr.mxu0 0.0
    %4976 = vmatpush2.msra.mxu0 0.0
    %4977 = vmatprep.subr.mxu0 0.0
    %4978 = vmatpush2.msra.mxu0 0.0
    %4979 = vmatprep.subr.mxu0 0.0
    %4980 = vmatpush2.msra.mxu0 0.0
    %4981 = vmatprep.subr.mxu0 0.0
    %4982 = vmatpush2.msra.mxu0 0.0
    %4983 = vmatprep.subr.mxu0 0.0
    %4984 = vmatpush2.msra.mxu0 0.0
    %4985 = vmatprep.subr.mxu0 0.0
    %4986 = vmatpush2.msra.mxu0 0.0
    %4987 = vmatprep.subr.mxu0 0.0
    %4988 = vmatpush2.msra.mxu0 0.0
    %4989 = vmatprep.subr.mxu0 0.0
    %4990 = vmatpush2.msra.mxu0 0.0
    %4991 = vmatprep.subr.mxu0 0.0
    %4992 = vmatpush2.msra.mxu0 0.0
    %4993 = vmatprep.mubr.f32.mxu0 0.0
    %4994 = vmatmul.mubr.f32.gmra.mxu0 %v4919
    %v4995 = vpop.f32.mrf.mxu0
    %v4996 = vadd.f32 0.0, %v4995
    %v4997 = vpop.f32.mrf.mxu0
    %4998 = vmatprep.mubr.f32.mxu0 0.0
    %4999 = vmatmul.mubr.f32.gmra.mxu0 %v4922
    %v5000 = vpop.f32.mrf.mxu0
    %v5001 = vadd.f32 0.0, %v5000
    %v5002 = vpop.f32.mrf.mxu0
    %5003 = vmatprep.mubr.f32.mxu0 0.0
    %5004 = vmatmul.mubr.f32.gmra.mxu0 %v4925
    %v5005 = vpop.f32.mrf.mxu0
    %v5006 = vadd.f32 0.0, %v5005
    %v5007 = vpop.f32.mrf.mxu0
    %5008 = vdwg.mxu0
    %5012 = vrot.lane.b32.xlu0 %v4524, 8
    %v5013 = vpop.permute.xlu0 %5012
    %5014 = vrot.lane.b32.xlu0 %v4529, 8
    %v5015 = vpop.permute.xlu0 %5014
    %5016 = vrot.lane.b32.xlu0 %v4534, 8
    %v5017 = vpop.permute.xlu0 %5016
    %5024 = vrot.lane.b32.xlu0 %v4760, 16
    %v5025 = vpop.permute.xlu0 %5024
    %5026 = vrot.lane.b32.xlu0 %v4765, 16
    %v5027 = vpop.permute.xlu0 %5026
    %5028 = vrot.lane.b32.xlu0 %v4770, 16
    %v5029 = vpop.permute.xlu0 %5028
    %5036 = vrot.lane.b32.xlu0 %v4996, 24
    %v5037 = vpop.permute.xlu0 %5036
    %5038 = vrot.lane.b32.xlu0 %v5001, 24
    %v5039 = vpop.permute.xlu0 %5038
    %5040 = vrot.lane.b32.xlu0 %v5006, 24
    %v5041 = vpop.permute.xlu0 %5040
    %v5045 = vsel %vm409, %v4288, %v5013
    %v5046 = vsel %vm409, %v4293, %v5015
    %v5047 = vsel %vm409, %v4298, %v5017
    %v5048 = vsel %vm1383, %v5045, %v5025
    %v5049 = vsel %vm1383, %v5046, %v5027
    %v5050 = vsel %vm1383, %v5047, %v5029
    %v5051 = vsel %vm1387, %v5048, %v5037
    %v5052 = vsel %vm1387, %v5049, %v5039
    %v5053 = vsel %vm1387, %v5050, %v5041
    %v5057 = vrot.slane %v5051, 7
    %v5058 = vrot.slane %v5052, 7
    %v5059 = vsel %vm177, %v5057, %v5058
    %v5060 = vrot.slane %v5053, 7
    %v5061 = vsel %vm177, %v5058, %v5060
    %v5063 = vsel %vm177, %v4063, %v5057
    %s5064 = scalar_lea.vmem %s6, 32
    %v5065 = vld [vmem:[%s5064] sm:$0xff]
    %v5066 = vld [vmem:[%s5064 + $0x8] sm:$0xff]
    %v5067 = vld [vmem:[%s5064 + $0x10] sm:$0xff]
    %v5068 = vld [vmem:[%s5064 + $0x18] sm:$0xff]
    %v5070 = vsel %vm201, %v4061, 0
    %v5073 = vsel %vm201, %v4062, 0
    %v5076 = vsel %vm201, %v5063, 0
    %v5078 = vsel %vm201, %v5059, 0
    %v5080 = vsel %vm201, %v5061, 0
    %5082 = vmatprep.subr.mxu0 0.0
    %5083 = vmatpush1.msra.mxu0 0.0
    %5084 = vmatprep.subr.mxu0 0.0
    %5085 = vmatpush1.msra.mxu0 0.0
    %5086 = vmatprep.subr.mxu0 0.0
    %5087 = vmatpush1.msra.mxu0 0.0
    %5088 = vmatprep.subr.mxu0 0.0
    %5089 = vmatpush1.msra.mxu0 0.0
    %5090 = vmatprep.subr.mxu0 0.0
    %5091 = vmatpush1.msra.mxu0 0.0
    %5092 = vmatprep.subr.mxu0 0.0
    %5093 = vmatpush1.msra.mxu0 0.0
    %5094 = vmatprep.subr.mxu0 0.0
    %5095 = vmatpush1.msra.mxu0 0.0
    %5096 = vmatprep.subr.mxu0 0.0
    %5097 = vmatpush1.msra.mxu0 0.0
    %5098 = vmatprep.subr.mxu0 0.0
    %5099 = vmatpush1.msra.mxu0 0.0
    %5100 = vmatprep.subr.mxu0 0.0
    %5101 = vmatpush1.msra.mxu0 0.0
    %5102 = vmatprep.subr.mxu0 0.0
    %5103 = vmatpush1.msra.mxu0 0.0
    %5104 = vmatprep.subr.mxu0 0.0
    %5105 = vmatpush1.msra.mxu0 0.0
    %5106 = vmatprep.subr.mxu0 0.0
    %5107 = vmatpush1.msra.mxu0 %v5068
    %5108 = vmatprep.subr.mxu0 0.0
    %5109 = vmatpush1.msra.mxu0 %v5067
    %5110 = vmatprep.subr.mxu0 0.0
    %5111 = vmatpush1.msra.mxu0 %v5066
    %5112 = vmatprep.subr.mxu0 0.0
    %5113 = vmatpush1.msra.mxu0 %v5065
    %5114 = vmatprep.subr.mxu0 0.0
    %5115 = vmatpush2.msra.mxu0 0.0
    %5116 = vmatprep.subr.mxu0 0.0
    %5117 = vmatpush2.msra.mxu0 0.0
    %5118 = vmatprep.subr.mxu0 0.0
    %5119 = vmatpush2.msra.mxu0 0.0
    %5120 = vmatprep.subr.mxu0 0.0
    %5121 = vmatpush2.msra.mxu0 0.0
    %5122 = vmatprep.subr.mxu0 0.0
    %5123 = vmatpush2.msra.mxu0 0.0
    %5124 = vmatprep.subr.mxu0 0.0
    %5125 = vmatpush2.msra.mxu0 0.0
    %5126 = vmatprep.subr.mxu0 0.0
    %5127 = vmatpush2.msra.mxu0 0.0
    %5128 = vmatprep.subr.mxu0 0.0
    %5129 = vmatpush2.msra.mxu0 0.0
    %5130 = vmatprep.subr.mxu0 0.0
    %5131 = vmatpush2.msra.mxu0 0.0
    %5132 = vmatprep.subr.mxu0 0.0
    %5133 = vmatpush2.msra.mxu0 0.0
    %5134 = vmatprep.subr.mxu0 0.0
    %5135 = vmatpush2.msra.mxu0 0.0
    %5136 = vmatprep.subr.mxu0 0.0
    %5137 = vmatpush2.msra.mxu0 0.0
    %5138 = vmatprep.subr.mxu0 0.0
    %5139 = vmatpush2.msra.mxu0 0.0
    %5140 = vmatprep.subr.mxu0 0.0
    %5141 = vmatpush2.msra.mxu0 0.0
    %5142 = vmatprep.subr.mxu0 0.0
    %5143 = vmatpush2.msra.mxu0 0.0
    %5144 = vmatprep.subr.mxu0 0.0
    %5145 = vmatpush2.msra.mxu0 0.0
    %5146 = vmatprep.mubr.f32.mxu0 0.0
    %5147 = vmatmul.mubr.f32.gmra.mxu0 %v5070
    %v5148 = vpop.f32.mrf.mxu0
    %v5149 = vadd.f32 0.0, %v5148
    %v5150 = vpop.f32.mrf.mxu0
    %5151 = vmatprep.mubr.f32.mxu0 0.0
    %5152 = vmatmul.mubr.f32.gmra.mxu0 %v5073
    %v5153 = vpop.f32.mrf.mxu0
    %v5154 = vadd.f32 0.0, %v5153
    %v5155 = vpop.f32.mrf.mxu0
    %5156 = vmatprep.mubr.f32.mxu0 0.0
    %5157 = vmatmul.mubr.f32.gmra.mxu0 %v5076
    %v5158 = vpop.f32.mrf.mxu0
    %v5159 = vadd.f32 0.0, %v5158
    %v5160 = vpop.f32.mrf.mxu0
    %5161 = vmatprep.mubr.f32.mxu0 0.0
    %5162 = vmatmul.mubr.f32.gmra.mxu0 %v5078
    %v5163 = vpop.f32.mrf.mxu0
    %v5164 = vadd.f32 0.0, %v5163
    %v5165 = vpop.f32.mrf.mxu0
    %5166 = vmatprep.mubr.f32.mxu0 0.0
    %5167 = vmatmul.mubr.f32.gmra.mxu0 %v5080
    %v5168 = vpop.f32.mrf.mxu0
    %v5169 = vadd.f32 0.0, %v5168
    %v5170 = vpop.f32.mrf.mxu0
    %5171 = vdwg.mxu0
    %v5172 = vadd.f32 %v2872, %v5149
    %v5173 = vadd.f32 %v2873, %v5154
    %v5174 = vadd.f32 %v2874, %v5159
    %v5175 = vadd.f32 %v2875, %v5164
    %v5176 = vadd.f32 %v2876, %v5169
    %s5177 = scalar_lea.vmem %s7, 1
    %v5178 = vld [vmem:[%s5177] sm:$0x1]
    %v5180 = vlaneseq
    %v5181 = vshrl.u32 %v5180, 7
    %v5182 = vsub.s32 0, %v5181
    %v5183 = vrot.slane %v5178, %v5182
    %v5185 = vadd.f32 %v5172, %v5183
    %v5186 = vadd.f32 %v5173, %v5183
    %v5187 = vadd.f32 %v5174, %v5183
    %v5188 = vadd.f32 %v5175, %v5183
    %v5189 = vadd.f32 %v5176, %v5183
    %s5190 = scalar_lea.vmem %s8, 1
    %v5191 = vld [vmem:[%s5190] sm:$0x1]
    %s5192 = scalar_lea.vmem %s9, 1
    %v5193 = vld [vmem:[%s5192] sm:$0x1]
    %v5194 = vsel %vm201, %v5185, 0.0
    %5195 = vadd.xlane.f32.xlu0 %v5194
    %v5196 = vpop.xlane.xlu0 %5195
    %v5197 = vsel %vm201, %v5186, 0.0
    %5198 = vadd.xlane.f32.xlu0 %v5197
    %v5199 = vpop.xlane.xlu0 %5198
    %v5200 = vsel %vm201, %v5187, 0.0
    %5201 = vadd.xlane.f32.xlu0 %v5200
    %v5202 = vpop.xlane.xlu0 %5201
    %v5203 = vsel %vm201, %v5188, 0.0
    %5204 = vadd.xlane.f32.xlu0 %v5203
    %v5205 = vpop.xlane.xlu0 %5204
    %v5206 = vsel %vm214, %v5189, 0.0
    %5207 = vadd.xlane.f32.xlu0 %v5206
    %v5208 = vpop.xlane.xlu0 %5207
    %v5209 = vmul.f32 %v5196, %v218
    %v5210 = vmul.f32 %v5199, %v218
    %v5211 = vmul.f32 %v5202, %v218
    %v5212 = vmul.f32 %v5205, %v218
    %v5213 = vmul.f32 %v5208, %v218
    %v5214 = vsub.f32 %v5185, %v5209
    %v5215 = vsub.f32 %v5186, %v5210
    %v5216 = vsub.f32 %v5187, %v5211
    %v5217 = vsub.f32 %v5188, %v5212
    %v5218 = vsub.f32 %v5189, %v5213
    %v5219 = vmul.f32 %v5214, %v5214
    %v5220 = vmul.f32 %v5215, %v5215
    %v5221 = vmul.f32 %v5216, %v5216
    %v5222 = vmul.f32 %v5217, %v5217
    %v5223 = vmul.f32 %v5218, %v5218
    %v5224 = vsel %vm201, %v5219, 0.0
    %5225 = vadd.xlane.f32.xlu0 %v5224
    %v5226 = vpop.xlane.xlu0 %5225
    %v5227 = vsel %vm201, %v5220, 0.0
    %5228 = vadd.xlane.f32.xlu0 %v5227
    %v5229 = vpop.xlane.xlu0 %5228
    %v5230 = vsel %vm201, %v5221, 0.0
    %5231 = vadd.xlane.f32.xlu0 %v5230
    %v5232 = vpop.xlane.xlu0 %5231
    %v5233 = vsel %vm201, %v5222, 0.0
    %5234 = vadd.xlane.f32.xlu0 %v5233
    %v5235 = vpop.xlane.xlu0 %5234
    %v5236 = vsel %vm214, %v5223, 0.0
    %5237 = vadd.xlane.f32.xlu0 %v5236
    %v5238 = vpop.xlane.xlu0 %5237
    %v5239 = vmul.f32 %v5226, %v218
    %v5240 = vmul.f32 %v5229, %v218
    %v5241 = vmul.f32 %v5232, %v218
    %v5242 = vmul.f32 %v5235, %v218
    %v5243 = vmul.f32 %v5238, %v218
    %v5244 = vadd.f32 %v5239, 1e-05
    %v5245 = vadd.f32 %v5240, 1e-05
    %v5246 = vadd.f32 %v5241, 1e-05
    %v5247 = vadd.f32 %v5242, 1e-05
    %v5248 = vadd.f32 %v5243, 1e-05
    %v5249 = vrsqrt.pop %v5244
    %v5250 = vrsqrt.pop %v5245
    %v5251 = vrsqrt.pop %v5246
    %v5252 = vrsqrt.pop %v5247
    %v5253 = vrsqrt.pop %v5248
    %v5254 = vmul.f32 %v5214, %v5249
    %v5255 = vmul.f32 %v5215, %v5250
    %v5256 = vmul.f32 %v5216, %v5251
    %v5257 = vmul.f32 %v5217, %v5252
    %v5258 = vmul.f32 %v5218, %v5253
    %v5260 = vlaneseq
    %v5261 = vshrl.u32 %v5260, 7
    %v5262 = vsub.s32 0, %v5261
    %v5263 = vrot.slane %v5191, %v5262
    %v5265 = vmul.f32 %v5254, %v5263
    %v5266 = vmul.f32 %v5255, %v5263
    %v5267 = vmul.f32 %v5256, %v5263
    %v5268 = vmul.f32 %v5257, %v5263
    %v5269 = vmul.f32 %v5258, %v5263
    %v5271 = vlaneseq
    %v5272 = vshrl.u32 %v5271, 7
    %v5273 = vsub.s32 0, %v5272
    %v5274 = vrot.slane %v5193, %v5273
    %v5276 = vadd.f32 %v5265, %v5274
    %v5277 = vadd.f32 %v5266, %v5274
    %v5278 = vadd.f32 %v5267, %v5274
    %v5279 = vadd.f32 %v5268, %v5274
    %v5280 = vadd.f32 %v5269, %v5274
    %s5281 = scalar_lea.vmem %s10, 32
    %v5282 = vld [vmem:[%s5281] sm:$0xff]
    %v5283 = vld [vmem:[%s5281 + $0x8] sm:$0xff]
    %v5284 = vld [vmem:[%s5281 + $0x10] sm:$0xff]
    %v5285 = vld [vmem:[%s5281 + $0x18] sm:$0xff]
    %s5286 = scalar_lea.vmem %s11, 1
    %v5287 = vld [vmem:[%s5286] sm:$0x1]
    %v5289 = vlaneseq
    %v5290 = vshrl.u32 %v5289, 7
    %v5291 = vsub.s32 0, %v5290
    %v5292 = vrot.slane %v5287, %v5291
    %v5295 = vsel %vm201, %v5276, 0
    %v5298 = vsel %vm201, %v5277, 0
    %v5301 = vsel %vm201, %v5278, 0
    %v5304 = vsel %vm201, %v5279, 0
    %v5307 = vsel %vm201, %v5280, 0
    %5309 = vmatprep.subr.mxu0 0.0
    %5310 = vmatpush1.msra.mxu0 0.0
    %5311 = vmatprep.subr.mxu0 0.0
    %5312 = vmatpush1.msra.mxu0 0.0
    %5313 = vmatprep.subr.mxu0 0.0
    %5314 = vmatpush1.msra.mxu0 0.0
    %5315 = vmatprep.subr.mxu0 0.0
    %5316 = vmatpush1.msra.mxu0 0.0
    %5317 = vmatprep.subr.mxu0 0.0
    %5318 = vmatpush1.msra.mxu0 0.0
    %5319 = vmatprep.subr.mxu0 0.0
    %5320 = vmatpush1.msra.mxu0 0.0
    %5321 = vmatprep.subr.mxu0 0.0
    %5322 = vmatpush1.msra.mxu0 0.0
    %5323 = vmatprep.subr.mxu0 0.0
    %5324 = vmatpush1.msra.mxu0 0.0
    %5325 = vmatprep.subr.mxu0 0.0
    %5326 = vmatpush1.msra.mxu0 0.0
    %5327 = vmatprep.subr.mxu0 0.0
    %5328 = vmatpush1.msra.mxu0 0.0
    %5329 = vmatprep.subr.mxu0 0.0
    %5330 = vmatpush1.msra.mxu0 0.0
    %5331 = vmatprep.subr.mxu0 0.0
    %5332 = vmatpush1.msra.mxu0 0.0
    %5333 = vmatprep.subr.mxu0 0.0
    %5334 = vmatpush1.msra.mxu0 %v5285
    %5335 = vmatprep.subr.mxu0 0.0
    %5336 = vmatpush1.msra.mxu0 %v5284
    %5337 = vmatprep.subr.mxu0 0.0
    %5338 = vmatpush1.msra.mxu0 %v5283
    %5339 = vmatprep.subr.mxu0 0.0
    %5340 = vmatpush1.msra.mxu0 %v5282
    %5341 = vmatprep.subr.mxu0 0.0
    %5342 = vmatpush2.msra.mxu0 0.0
    %5343 = vmatprep.subr.mxu0 0.0
    %5344 = vmatpush2.msra.mxu0 0.0
    %5345 = vmatprep.subr.mxu0 0.0
    %5346 = vmatpush2.msra.mxu0 0.0
    %5347 = vmatprep.subr.mxu0 0.0
    %5348 = vmatpush2.msra.mxu0 0.0
    %5349 = vmatprep.subr.mxu0 0.0
    %5350 = vmatpush2.msra.mxu0 0.0
    %5351 = vmatprep.subr.mxu0 0.0
    %5352 = vmatpush2.msra.mxu0 0.0
    %5353 = vmatprep.subr.mxu0 0.0
    %5354 = vmatpush2.msra.mxu0 0.0
    %5355 = vmatprep.subr.mxu0 0.0
    %5356 = vmatpush2.msra.mxu0 0.0
    %5357 = vmatprep.subr.mxu0 0.0
    %5358 = vmatpush2.msra.mxu0 0.0
    %5359 = vmatprep.subr.mxu0 0.0
    %5360 = vmatpush2.msra.mxu0 0.0
    %5361 = vmatprep.subr.mxu0 0.0
    %5362 = vmatpush2.msra.mxu0 0.0
    %5363 = vmatprep.subr.mxu0 0.0
    %5364 = vmatpush2.msra.mxu0 0.0
    %5365 = vmatprep.subr.mxu0 0.0
    %5366 = vmatpush2.msra.mxu0 0.0
    %5367 = vmatprep.subr.mxu0 0.0
    %5368 = vmatpush2.msra.mxu0 0.0
    %5369 = vmatprep.subr.mxu0 0.0
    %5370 = vmatpush2.msra.mxu0 0.0
    %5371 = vmatprep.subr.mxu0 0.0
    %5372 = vmatpush2.msra.mxu0 0.0
    %5373 = vmatprep.mubr.f32.mxu0 0.0
    %5374 = vmatmul.mubr.f32.gmra.mxu0 %v5295
    %v5375 = vpop.f32.mrf.mxu0
    %v5376 = vadd.f32 %v5292, %v5375
    %v5377 = vpop.f32.mrf.mxu0
    %5378 = vmatprep.mubr.f32.mxu0 0.0
    %5379 = vmatmul.mubr.f32.gmra.mxu0 %v5298
    %v5380 = vpop.f32.mrf.mxu0
    %v5381 = vadd.f32 %v5292, %v5380
    %v5382 = vpop.f32.mrf.mxu0
    %5383 = vmatprep.mubr.f32.mxu0 0.0
    %5384 = vmatmul.mubr.f32.gmra.mxu0 %v5301
    %v5385 = vpop.f32.mrf.mxu0
    %v5386 = vadd.f32 %v5292, %v5385
    %v5387 = vpop.f32.mrf.mxu0
    %5388 = vmatprep.mubr.f32.mxu0 0.0
    %5389 = vmatmul.mubr.f32.gmra.mxu0 %v5304
    %v5390 = vpop.f32.mrf.mxu0
    %v5391 = vadd.f32 %v5292, %v5390
    %v5392 = vpop.f32.mrf.mxu0
    %5393 = vmatprep.mubr.f32.mxu0 0.0
    %5394 = vmatmul.mubr.f32.gmra.mxu0 %v5307
    %v5395 = vpop.f32.mrf.mxu0
    %v5396 = vadd.f32 %v5292, %v5395
    %v5397 = vpop.f32.mrf.mxu0
    %5398 = vdwg.mxu0
    %v5399 = vmul.f32 %v5376, 0.5
    %v5400 = vmul.f32 %v5381, 0.5
    %v5401 = vmul.f32 %v5386, 0.5
    %v5402 = vmul.f32 %v5391, 0.5
    %v5403 = vmul.f32 %v5396, 0.5
    %v5404 = vmul.f32 %v5376, 0.70710677
    %v5405 = vmul.f32 %v5381, 0.70710677
    %v5406 = vmul.f32 %v5386, 0.70710677
    %v5407 = vmul.f32 %v5391, 0.70710677
    %v5408 = vmul.f32 %v5396, 0.70710677
    %v5409 = verf.f32.pop %v5404
    %v5410 = verf.f32.pop %v5405
    %v5411 = verf.f32.pop %v5406
    %v5412 = verf.f32.pop %v5407
    %v5413 = verf.f32.pop %v5408
    %v5414 = vadd.f32 %v5409, 1.0
    %v5415 = vadd.f32 %v5410, 1.0
    %v5416 = vadd.f32 %v5411, 1.0
    %v5417 = vadd.f32 %v5412, 1.0
    %v5418 = vadd.f32 %v5413, 1.0
    %v5419 = vmul.f32 %v5399, %v5414
    %v5420 = vmul.f32 %v5400, %v5415
    %v5421 = vmul.f32 %v5401, %v5416
    %v5422 = vmul.f32 %v5402, %v5417
    %v5423 = vmul.f32 %v5403, %v5418
    %s5424 = scalar_lea.vmem %s12, 64
    %v5425 = vld [vmem:[%s5424] sm:$0xff]
    %v5426 = vld [vmem:[%s5424 + $0x8] sm:$0xff]
    %v5427 = vld [vmem:[%s5424 + $0x10] sm:$0xff]
    %v5428 = vld [vmem:[%s5424 + $0x18] sm:$0xff]
    %v5429 = vld [vmem:[%s5424 + $0x20] sm:$0xff]
    %v5430 = vld [vmem:[%s5424 + $0x28] sm:$0xff]
    %v5431 = vld [vmem:[%s5424 + $0x30] sm:$0xff]
    %v5432 = vld [vmem:[%s5424 + $0x38] sm:$0xff]
    %v5434 = vsel %vm2754, %v5419, 0
    %v5437 = vsel %vm2754, %v5420, 0
    %v5440 = vsel %vm2754, %v5421, 0
    %v5443 = vsel %vm2754, %v5422, 0
    %v5446 = vsel %vm2754, %v5423, 0
    %5448 = vmatprep.subr.mxu0 0.0
    %5449 = vmatpush1.msra.mxu0 0.0
    %5450 = vmatprep.subr.mxu0 0.0
    %5451 = vmatpush1.msra.mxu0 0.0
    %5452 = vmatprep.subr.mxu0 0.0
    %5453 = vmatpush1.msra.mxu0 0.0
    %5454 = vmatprep.subr.mxu0 0.0
    %5455 = vmatpush1.msra.mxu0 0.0
    %5456 = vmatprep.subr.mxu0 0.0
    %5457 = vmatpush1.msra.mxu0 0.0
    %5458 = vmatprep.subr.mxu0 0.0
    %5459 = vmatpush1.msra.mxu0 0.0
    %5460 = vmatprep.subr.mxu0 0.0
    %5461 = vmatpush1.msra.mxu0 0.0
    %5462 = vmatprep.subr.mxu0 0.0
    %5463 = vmatpush1.msra.mxu0 0.0
    %5464 = vmatprep.subr.mxu0 0.0
    %5465 = vmatpush1.msra.mxu0 %v5432
    %5466 = vmatprep.subr.mxu0 0.0
    %5467 = vmatpush1.msra.mxu0 %v5431
    %5468 = vmatprep.subr.mxu0 0.0
    %5469 = vmatpush1.msra.mxu0 %v5430
    %5470 = vmatprep.subr.mxu0 0.0
    %5471 = vmatpush1.msra.mxu0 %v5429
    %5472 = vmatprep.subr.mxu0 0.0
    %5473 = vmatpush1.msra.mxu0 %v5428
    %5474 = vmatprep.subr.mxu0 0.0
    %5475 = vmatpush1.msra.mxu0 %v5427
    %5476 = vmatprep.subr.mxu0 0.0
    %5477 = vmatpush1.msra.mxu0 %v5426
    %5478 = vmatprep.subr.mxu0 0.0
    %5479 = vmatpush1.msra.mxu0 %v5425
    %5480 = vmatprep.subr.mxu0 0.0
    %5481 = vmatpush2.msra.mxu0 0.0
    %5482 = vmatprep.subr.mxu0 0.0
    %5483 = vmatpush2.msra.mxu0 0.0
    %5484 = vmatprep.subr.mxu0 0.0
    %5485 = vmatpush2.msra.mxu0 0.0
    %5486 = vmatprep.subr.mxu0 0.0
    %5487 = vmatpush2.msra.mxu0 0.0
    %5488 = vmatprep.subr.mxu0 0.0
    %5489 = vmatpush2.msra.mxu0 0.0
    %5490 = vmatprep.subr.mxu0 0.0
    %5491 = vmatpush2.msra.mxu0 0.0
    %5492 = vmatprep.subr.mxu0 0.0
    %5493 = vmatpush2.msra.mxu0 0.0
    %5494 = vmatprep.subr.mxu0 0.0
    %5495 = vmatpush2.msra.mxu0 0.0
    %5496 = vmatprep.subr.mxu0 0.0
    %5497 = vmatpush2.msra.mxu0 0.0
    %5498 = vmatprep.subr.mxu0 0.0
    %5499 = vmatpush2.msra.mxu0 0.0
    %5500 = vmatprep.subr.mxu0 0.0
    %5501 = vmatpush2.msra.mxu0 0.0
    %5502 = vmatprep.subr.mxu0 0.0
    %5503 = vmatpush2.msra.mxu0 0.0
    %5504 = vmatprep.subr.mxu0 0.0
    %5505 = vmatpush2.msra.mxu0 0.0
    %5506 = vmatprep.subr.mxu0 0.0
    %5507 = vmatpush2.msra.mxu0 0.0
    %5508 = vmatprep.subr.mxu0 0.0
    %5509 = vmatpush2.msra.mxu0 0.0
    %5510 = vmatprep.subr.mxu0 0.0
    %5511 = vmatpush2.msra.mxu0 0.0
    %5512 = vmatprep.mubr.f32.mxu0 0.0
    %5513 = vmatmul.mubr.f32.gmra.mxu0 %v5434
    %v5514 = vpop.f32.mrf.mxu0
    %v5515 = vadd.f32 0.0, %v5514
    %v5516 = vpop.f32.mrf.mxu0
    %5517 = vmatprep.mubr.f32.mxu0 0.0
    %5518 = vmatmul.mubr.f32.gmra.mxu0 %v5437
    %v5519 = vpop.f32.mrf.mxu0
    %v5520 = vpop.f32.mrf.mxu0
    %5521 = vmatprep.mubr.f32.mxu0 0.0
    %5522 = vmatmul.mubr.f32.gmra.mxu0 %v5440
    %v5523 = vpop.f32.mrf.mxu0
    %v5524 = vadd.f32 0.0, %v5523
    %v5525 = vpop.f32.mrf.mxu0
    %5526 = vmatprep.mubr.f32.mxu0 0.0
    %5527 = vmatmul.mubr.f32.gmra.mxu0 %v5443
    %v5528 = vpop.f32.mrf.mxu0
    %v5529 = vpop.f32.mrf.mxu0
    %5530 = vmatprep.mubr.f32.mxu0 0.0
    %5531 = vmatmul.mubr.f32.gmra.mxu0 %v5446
    %v5532 = vpop.f32.mrf.mxu0
    %v5533 = vpop.f32.mrf.mxu0
    %5534 = vdwg.mxu0
    %v5535 = vadd.f32 %v5185, %v5515
    %v5536 = vadd.f32 %v5187, %v5524
    %s5537 = scalar_lea.vmem %s13, 1
    %v5538 = vld [vmem:[%s5537] sm:$0x1]
    %v5540 = vlaneseq
    %v5541 = vshrl.u32 %v5540, 7
    %v5542 = vsub.s32 0, %v5541
    %v5543 = vrot.slane %v5538, %v5542
    %v5545 = vadd.f32 %v5535, %v5543
    %v5546 = vadd.f32 %v5536, %v5543
    %v5547 = vsel %vm177, %v5545, %v5546
    %v5548 = vld [vmem:[%s14] sm:$0x1]
    %v5549 = vld [vmem:[%s15] sm:$0x1]
    %v5550 = vsel %vm214, %v5547, 0.0
    %5551 = vadd.xlane.f32.xlu0 %v5550
    %v5552 = vpop.xlane.xlu0 %5551
    %v5553 = vmul.f32 %v5552, %v218
    %v5554 = vsub.f32 %v5547, %v5553
    %v5555 = vmul.f32 %v5554, %v5554
    %v5556 = vsel %vm214, %v5555, 0.0
    %5557 = vadd.xlane.f32.xlu0 %v5556
    %v5558 = vpop.xlane.xlu0 %5557
    %v5559 = vmul.f32 %v5558, %v218
    %v5560 = vadd.f32 %v5559, 1e-05
    %v5561 = vrsqrt.pop %v5560
    %v5562 = vmul.f32 %v5554, %v5561
    %v5564 = vlaneseq
    %v5565 = vshrl.u32 %v5564, 7
    %v5566 = vsub.s32 0, %v5565
    %v5567 = vrot.slane %v5548, %v5566
    %v5569 = vmul.f32 %v5562, %v5567
    %v5571 = vlaneseq
    %v5572 = vshrl.u32 %v5571, 7
    %v5573 = vsub.s32 0, %v5572
    %v5574 = vrot.slane %v5549, %v5573
    %v5576 = vadd.f32 %v5569, %v5574
    %v5577 = vld [vmem:[%s16] sm:$0xff]
    %v5578 = vld [vmem:[%s16 + $0x8] sm:$0xff]
    %v5579 = vld [vmem:[%s16 + $0x10] sm:$0xff]
    %v5580 = vld [vmem:[%s16 + $0x18] sm:$0xff]
    %v5581 = vld [vmem:[%s17] sm:$0x1]
    %v5583 = vlaneseq
    %v5584 = vshrl.u32 %v5583, 7
    %v5585 = vsub.s32 0, %v5584
    %v5586 = vrot.slane %v5581, %v5585
    %v5589 = vsel %vm201, %v5576, 0
    %5591 = vmatprep.subr.mxu0 0.0
    %5592 = vmatpush1.msra.mxu0 0.0
    %5593 = vmatprep.subr.mxu0 0.0
    %5594 = vmatpush1.msra.mxu0 0.0
    %5595 = vmatprep.subr.mxu0 0.0
    %5596 = vmatpush1.msra.mxu0 0.0
    %5597 = vmatprep.subr.mxu0 0.0
    %5598 = vmatpush1.msra.mxu0 0.0
    %5599 = vmatprep.subr.mxu0 0.0
    %5600 = vmatpush1.msra.mxu0 0.0
    %5601 = vmatprep.subr.mxu0 0.0
    %5602 = vmatpush1.msra.mxu0 0.0
    %5603 = vmatprep.subr.mxu0 0.0
    %5604 = vmatpush1.msra.mxu0 0.0
    %5605 = vmatprep.subr.mxu0 0.0
    %5606 = vmatpush1.msra.mxu0 0.0
    %5607 = vmatprep.subr.mxu0 0.0
    %5608 = vmatpush1.msra.mxu0 0.0
    %5609 = vmatprep.subr.mxu0 0.0
    %5610 = vmatpush1.msra.mxu0 0.0
    %5611 = vmatprep.subr.mxu0 0.0
    %5612 = vmatpush1.msra.mxu0 0.0
    %5613 = vmatprep.subr.mxu0 0.0
    %5614 = vmatpush1.msra.mxu0 0.0
    %5615 = vmatprep.subr.mxu0 0.0
    %5616 = vmatpush1.msra.mxu0 %v5580
    %5617 = vmatprep.subr.mxu0 0.0
    %5618 = vmatpush1.msra.mxu0 %v5579
    %5619 = vmatprep.subr.mxu0 0.0
    %5620 = vmatpush1.msra.mxu0 %v5578
    %5621 = vmatprep.subr.mxu0 0.0
    %5622 = vmatpush1.msra.mxu0 %v5577
    %5623 = vmatprep.subr.mxu0 0.0
    %5624 = vmatpush2.msra.mxu0 0.0
    %5625 = vmatprep.subr.mxu0 0.0
    %5626 = vmatpush2.msra.mxu0 0.0
    %5627 = vmatprep.subr.mxu0 0.0
    %5628 = vmatpush2.msra.mxu0 0.0
    %5629 = vmatprep.subr.mxu0 0.0
    %5630 = vmatpush2.msra.mxu0 0.0
    %5631 = vmatprep.subr.mxu0 0.0
    %5632 = vmatpush2.msra.mxu0 0.0
    %5633 = vmatprep.subr.mxu0 0.0
    %5634 = vmatpush2.msra.mxu0 0.0
    %5635 = vmatprep.subr.mxu0 0.0
    %5636 = vmatpush2.msra.mxu0 0.0
    %5637 = vmatprep.subr.mxu0 0.0
    %5638 = vmatpush2.msra.mxu0 0.0
    %5639 = vmatprep.subr.mxu0 0.0
    %5640 = vmatpush2.msra.mxu0 0.0
    %5641 = vmatprep.subr.mxu0 0.0
    %5642 = vmatpush2.msra.mxu0 0.0
    %5643 = vmatprep.subr.mxu0 0.0
    %5644 = vmatpush2.msra.mxu0 0.0
    %5645 = vmatprep.subr.mxu0 0.0
    %5646 = vmatpush2.msra.mxu0 0.0
    %5647 = vmatprep.subr.mxu0 0.0
    %5648 = vmatpush2.msra.mxu0 0.0
    %5649 = vmatprep.subr.mxu0 0.0
    %5650 = vmatpush2.msra.mxu0 0.0
    %5651 = vmatprep.subr.mxu0 0.0
    %5652 = vmatpush2.msra.mxu0 0.0
    %5653 = vmatprep.subr.mxu0 0.0
    %5654 = vmatpush2.msra.mxu0 0.0
    %5655 = vmatprep.mubr.f32.mxu0 0.0
    %5656 = vmatmul.mubr.f32.gmra.mxu0 %v5589
    %v5657 = vpop.f32.mrf.mxu0
    %v5658 = vadd.f32 %v5586, %v5657
    %v5659 = vpop.f32.mrf.mxu0
    %5660 = vdwg.mxu0
    %vm5661 = vcmask 74752
    %5662 = vst.msk [vmem:[#allocation2] sm:$0x3] %vm5661, %v5658
    // Predicated region
    $region74: #{vit_forward.1} parent=1 // pred_check
      _
    $region75: #{vit_forward.1} parent=1 // pred_check_branch
      %5664 = sbr.rel (0) target = $region77
    $region76: #{vit_forward.1} parent=1 // pred_region
      %s5666 = ssub.s32 32, 32
      %5667 = vsyncadd [#allocation3], %s5666
      %s5669 = sshll.u32 [#allocation2], 4
      %s5670 = int_to_ptr.vmem [resolvable:$true] %s5669
      %5672 = dma.vmem_to_hbm [thread:$0]  %s5670, 32, %s18, [#allocation3]
    $region77: #{vit_forward.1} parent=1 // pred_fallthru
      _
    // Predicated region
    $region78: #{vit_forward.1} parent=1 // pred_check
      _
    $region79: #{vit_forward.1} parent=1 // pred_check_branch
      %5674 = sbr.rel (0) target = $region81
    $region80: #{vit_forward.1} parent=1 // pred_region
      %5675 = dma.done [#allocation3], 32
    $region81: #{vit_forward.1} parent=1 // pred_fallthru
      _
    %5676 = vsyncpa [#allocation3], 1

</llo_original>
